<compile_context>
chip_gen: v7x
topology: tpu7x:2x2x1
jax: 0.10.0
libtpu: 0.0.40
codegen_flags: <defaults>
</compile_context>

<pallas_src>
import functools
import math

import jax
import jax.numpy as jnp
from jax.experimental import pallas as pl
from jax.experimental.pallas import tpu as pltpu


# Row-tile cap: keeps (2 inputs x 2 pipeline buffers x tile) well under the
# 32 MiB scoped-VMEM default (v7x has only 64 MiB physical VMEM).
_TM_MAX = 512


# ------------------------------------------------------------------
# Batched / tiled linear kernel:  y[p] = x[p] @ w_t[p] + b[p]
# ------------------------------------------------------------------
def _batched_linear_kernel(x_ref, w_ref, b_ref, o_ref):
    # x: (1, TM, Ein), w_t: (1, Ein, Eout), b: (1, 1, Eout) -> o: (1, TM, Eout)
    o_ref[0] = (
        jnp.dot(x_ref[0], w_ref[0], preferred_element_type=jnp.float32)
        + b_ref[0]
    )


def batched_linear(x, w_t, b):
    """x: (P, M, Ein), w_t: (P, Ein, Eout), b: (P, Eout) -> (P, M, Eout)."""
    P, M, Ein = x.shape
    Eout = w_t.shape[-1]
    tm = M if M <= _TM_MAX else _TM_MAX        # full-M block or 8-aligned tile
    grid = (P, pl.cdiv(M, tm))
    return pl.pallas_call(
        _batched_linear_kernel,
        out_shape=jax.ShapeDtypeStruct((P, M, Eout), jnp.float32),
        grid=grid,
        in_specs=[
            pl.BlockSpec((1, tm, Ein), lambda p, i: (p, i, 0)),
            pl.BlockSpec((1, Ein, Eout), lambda p, i: (p, 0, 0)),
            pl.BlockSpec((1, 1, Eout), lambda p, i: (p, 0, 0)),
        ],
        out_specs=pl.BlockSpec((1, tm, Eout), lambda p, i: (p, i, 0)),
        compiler_params=pltpu.CompilerParams(
            dimension_semantics=("parallel", "parallel")),
    )(x, w_t, b.reshape(P, 1, Eout))


# ------------------------------------------------------------------
# Attention kernels: one batch element, ALL heads per grid step
# ------------------------------------------------------------------
def _attention_kernel(q_ref, k_ref, v_ref, o_ref, w_ref, *, compute_dtype):
    # q: (L, 1, H, hd), k/v: (S, 1, H, hd) for one batch element.
    L, _, H, hd = q_ref.shape
    S = k_ref.shape[0]
    q = q_ref[...].reshape(L, H, hd)
    k = k_ref[...].reshape(S, H, hd)
    v = v_ref[...].reshape(S, H, hd)
    # scores (H, L, S): contract head_dim, batch over heads (no k.T copy).
    s = jnp.einsum("lhd,shd->hls",
                   q.astype(compute_dtype), k.astype(compute_dtype),
                   preferred_element_type=jnp.float32)
    m = jnp.max(s, axis=-1, keepdims=True)
    e = jnp.exp(s - m)
    denom = jnp.sum(e, axis=-1, keepdims=True)
    # reciprocal + multiply instead of a per-element divide.
    # (approx=True would ride the idle EUP slot but costs ~2^-12 rel. error;
    #  keep exact to preserve 1e-4 parity with the f32 reference.)
    p = e * pl.reciprocal(denom, approx=False)                  # (H, L, S)
    ctx = jnp.einsum("hls,shd->lhd",
                     p.astype(compute_dtype), v.astype(compute_dtype),
                     preferred_element_type=jnp.float32)        # (L, H, hd)
    o_ref[...] = ctx.reshape(o_ref.shape)
    # head-averaged attention weights folded into the kernel -> (N, L, S) out.
    w_ref[...] = (jnp.sum(p, axis=0) * (1.0 / H)).reshape(w_ref.shape)


def _attention_kernel_no_weights(q_ref, k_ref, v_ref, o_ref, *, compute_dtype):
    L, _, H, hd = q_ref.shape
    S = k_ref.shape[0]
    q = q_ref[...].reshape(L, H, hd)
    k = k_ref[...].reshape(S, H, hd)
    v = v_ref[...].reshape(S, H, hd)
    s = jnp.einsum("lhd,shd->hls",
                   q.astype(compute_dtype), k.astype(compute_dtype),
                   preferred_element_type=jnp.float32)
    m = jnp.max(s, axis=-1, keepdims=True)
    e = jnp.exp(s - m)
    denom = jnp.sum(e, axis=-1, keepdims=True)                  # (H, L, 1)
    # deferred normalization: scale the (L,H,hd) context, not (H,L,S) probs.
    ctx = jnp.einsum("hls,shd->lhd",
                     e.astype(compute_dtype), v.astype(compute_dtype),
                     preferred_element_type=jnp.float32)        # (L, H, hd)
    inv = jnp.transpose(pl.reciprocal(denom, approx=False), (1, 0, 2))
    o_ref[...] = (ctx * inv).reshape(o_ref.shape)


def pallas_attention(q_arr, k_arr, v_arr, qi, ki, vi, *,
                     L, S, N, H, hd, need_weights,
                     compute_dtype=jnp.float32):
    """q_arr: (*, N, H, hd) holding L rows of q at block-row index `qi`;
       k_arr/v_arr: (*, N, H, hd) holding S rows at block-row indices ki/vi.
       (The three may be the same stacked array.)"""
    q_spec = pl.BlockSpec((L, 1, H, hd), lambda n: (qi, n, 0, 0))
    k_spec = pl.BlockSpec((S, 1, H, hd), lambda n: (ki, n, 0, 0))
    v_spec = pl.BlockSpec((S, 1, H, hd), lambda n: (vi, n, 0, 0))
    o_spec = pl.BlockSpec((L, 1, H, hd), lambda n: (0, n, 0, 0))
    o_shape = jax.ShapeDtypeStruct((L, N, H, hd), jnp.float32)
    cparams = pltpu.CompilerParams(dimension_semantics=("parallel",))

    if need_weights:
        kern = functools.partial(_attention_kernel, compute_dtype=compute_dtype)
        out, w = pl.pallas_call(
            kern,
            out_shape=(o_shape, jax.ShapeDtypeStruct((N, L, S), jnp.float32)),
            grid=(N,),
            in_specs=[q_spec, k_spec, v_spec],
            out_specs=(o_spec, pl.BlockSpec((1, L, S), lambda n: (n, 0, 0))),
            compiler_params=cparams,
        )(q_arr, k_arr, v_arr)
        return out, w

    kern = functools.partial(_attention_kernel_no_weights,
                             compute_dtype=compute_dtype)
    out = pl.pallas_call(
        kern,
        out_shape=o_shape,
        grid=(N,),
        in_specs=[q_spec, k_spec, v_spec],
        out_specs=o_spec,
        compiler_params=cparams,
    )(q_arr, k_arr, v_arr)
    return out, None


# ------------------------------------------------------------------
# MultiheadAttention forward (JAX wrapper around the Pallas kernels)
# ------------------------------------------------------------------
@functools.partial(jax.jit, static_argnames=("num_heads", "need_weights"))
def multihead_attention_forward(query, key, value, params, num_heads,
                                need_weights=True):
    L, N, E = query.shape
    S = key.shape[0]
    hd = E // num_heads
    assert hd * num_heads == E, "embed_dim must be divisible by num_heads"
    scaling = float(hd) ** -0.5

    W = params["in_proj_weight"]          # (3E, E), torch layout
    b = params["in_proj_bias"]            # (3E,)
    Wo = params["out_proj_weight"]        # (E, E), torch layout
    bo = params["out_proj_bias"]          # (E,)

    # transposed weight slices; scaling folded into the q projection (free).
    wq_t = W[:E].T * scaling
    wk_t = W[E:2 * E].T
    wv_t = W[2 * E:].T
    bq = b[:E] * scaling
    bk = b[E:2 * E]
    bv = b[2 * E:]

    q2d = query.reshape(L * N, E)
    k2d = key.reshape(S * N, E)
    v2d = value.reshape(S * N, E)

    if L == S:
        # Fused q/k/v in-projection: ONE pallas_call, grid=(3, M-tiles).
        qkv = batched_linear(jnp.stack([q2d, k2d, v2d]),
                             jnp.stack([wq_t, wk_t, wv_t]),
                             jnp.stack([bq, bk, bv]))           # (3, L*N, E)
        qkv4 = qkv.reshape(3 * L, N, num_heads, hd)             # free reshape
        q_arr = k_arr = v_arr = qkv4
        qi, ki, vi = 0, 1, 2
    else:
        # Cross-attention (L != S): q alone, k/v fused into one launch.
        qp = batched_linear(q2d[None], wq_t[None], bq[None])    # (1, L*N, E)
        kv = batched_linear(jnp.stack([k2d, v2d]),
                            jnp.stack([wk_t, wv_t]),
                            jnp.stack([bk, bv]))                # (2, S*N, E)
        q_arr = qp.reshape(L, N, num_heads, hd)                 # free reshape
        k_arr = v_arr = kv.reshape(2 * S, N, num_heads, hd)     # free reshape
        qi, ki, vi = 0, 0, 1

    attn4, weights = pallas_attention(
        q_arr, k_arr, v_arr, qi, ki, vi,
        L=L, S=S, N=N, H=num_heads, hd=hd, need_weights=need_weights)

    # (L, N, H, hd) -> (1, L*N, E) is a free reshape (no transpose).
    out = batched_linear(attn4.reshape(1, L * N, E), Wo.T[None], bo[None])
    out = out.reshape(L, N, E)

    if need_weights:
        return out, weights            # (N, L, S), head-averaged in-kernel
    return out, None


# ------------------------------------------------------------------
# Deterministic parameter init (matches module shapes, xavier-style)
# ------------------------------------------------------------------
def init_params(key, embed_dim):
    k1, k2 = jax.random.split(key)
    bound_in = math.sqrt(6.0 / (3 * embed_dim + embed_dim))
    in_proj_weight = jax.random.uniform(
        k1, (3 * embed_dim, embed_dim), jnp.float32, -bound_in, bound_in)
    in_proj_bias = jnp.zeros((3 * embed_dim,), jnp.float32)
    bound_out = math.sqrt(6.0 / (embed_dim + embed_dim))
    out_proj_weight = jax.random.uniform(
        k2, (embed_dim, embed_dim), jnp.float32, -bound_out, bound_out)
    out_proj_bias = jnp.zeros((embed_dim,), jnp.float32)
    return {
        "in_proj_weight": in_proj_weight,
        "in_proj_bias": in_proj_bias,
        "out_proj_weight": out_proj_weight,
        "out_proj_bias": out_proj_bias,
    }


# Pure-JAX reference (same math as torch multi_head_attention_forward)
def _reference(query, key, value, params, num_heads):
    L, N, E = query.shape
    S = key.shape[0]
    hd = E // num_heads
    W, b = params["in_proj_weight"], params["in_proj_bias"]
    q = query @ W[:E].T + b[:E]
    k = key @ W[E:2 * E].T + b[E:2 * E]
    v = value @ W[2 * E:].T + b[2 * E:]
    q = q * (hd ** -0.5)
    q = q.reshape(L, N * num_heads, hd).transpose(1, 0, 2)
    k = k.reshape(S, N * num_heads, hd).transpose(1, 0, 2)
    v = v.reshape(S, N * num_heads, hd).transpose(1, 0, 2)
    s = jnp.einsum("bld,bsd->bls", q, k)
    p = jax.nn.softmax(s, axis=-1)
    o = jnp.einsum("bls,bsd->bld", p, v)
    o = o.transpose(1, 0, 2).reshape(L, N, E)
    o = o @ params["out_proj_weight"].T + params["out_proj_bias"]
    w = p.reshape(N, num_heads, L, S).sum(axis=1) / num_heads
    return o, w


if __name__ == "__main__":
    # Small shapes: L=8, S=8, N=2, E=32, heads=4 (head_dim=8)
    L, S, N, E, H = 8, 8, 2, 32, 4
    root = jax.random.PRNGKey(0)
    kq, kk, kv, kp = jax.random.split(root, 4)
    query = jax.random.normal(kq, (L, N, E), jnp.float32)
    key_ = jax.random.normal(kk, (S, N, E), jnp.float32)
    value = jax.random.normal(kv, (S, N, E), jnp.float32)
    params = init_params(kp, E)

    # 1) L == S path: single fused q/k/v projection launch, weights returned.
    out, w = multihead_attention_forward(query, key_, value, params,
                                         num_heads=H, need_weights=True)
    out = jax.block_until_ready(out)
    w = jax.block_until_ready(w)
    ref_out, ref_w = _reference(query, key_, value, params, H)
    assert out.shape == (L, N, E)
    assert w.shape == (N, L, S)
    assert jnp.allclose(out, ref_out, atol=1e-4, rtol=1e-4)
    assert jnp.allclose(w, ref_w, atol=1e-4, rtol=1e-4)

    # 2) need_weights=False: kernel variant with no weights writeback.
    out_nw, w_nw = multihead_attention_forward(query, key_, value, params,
                                               num_heads=H, need_weights=False)
    out_nw = jax.block_until_ready(out_nw)
    assert w_nw is None
    assert jnp.allclose(out_nw, ref_out, atol=1e-4, rtol=1e-4)

    # 3) cross-attention path (L != S): separate q / fused k,v projections.
    S2 = 16
    key2 = jax.random.normal(jax.random.PRNGKey(1), (S2, N, E), jnp.float32)
    value2 = jax.random.normal(jax.random.PRNGKey(2), (S2, N, E), jnp.float32)
    out2, w2 = multihead_attention_forward(query, key2, value2, params,
                                           num_heads=H, need_weights=True)
    out2 = jax.block_until_ready(out2)
    w2 = jax.block_until_ready(w2)
    ref_out2, ref_w2 = _reference(query, key2, value2, params, H)
    assert jnp.allclose(out2, ref_out2, atol=1e-4, rtol=1e-4)
    assert jnp.allclose(w2, ref_w2, atol=1e-4, rtol=1e-4)

    print("KERNEL_OK")
</pallas_src>

<mosaic_0001>
module attributes {stable_mosaic.version = 11 : i64} {
  func.func @_batched_linear_kernel(%arg0: i32, %arg1: i32, %arg2: memref<1x16x32xf32, #tpu.memory_space<vmem>>, %arg3: memref<1x32x32xf32, #tpu.memory_space<vmem>>, %arg4: memref<1x1x32xf32, #tpu.memory_space<vmem>>, %arg5: memref<1x16x32xf32, #tpu.memory_space<vmem>>) attributes {dimension_semantics = [#tpu.dimension_semantics<parallel>, #tpu.dimension_semantics<parallel>], iteration_bounds = array<i64: 3, 1>, scalar_prefetch = 0 : i64, scratch_operands = 0 : i64, tpu.core_type = #tpu.core_type<tc>, window_params = [{transform_indices = @transform_0, window_bounds = array<i64: 1, 16, 32>}, {transform_indices = @transform_1, window_bounds = array<i64: 1, 32, 32>}, {transform_indices = @transform_2, window_bounds = array<i64: 1, 1, 32>}, {transform_indices = @transform_3, window_bounds = array<i64: 1, 16, 32>}]} {
    %c0 = arith.constant 0 : index
    %c0_0 = arith.constant 0 : index
    %c0_1 = arith.constant 0 : index
    %0 = vector.load %arg2[%c0, %c0_0, %c0_1] : memref<1x16x32xf32, #tpu.memory_space<vmem>>, vector<1x16x32xf32>
    %1 = vector.shape_cast %0 : vector<1x16x32xf32> to vector<16x32xf32>
    %c0_2 = arith.constant 0 : index
    %c0_3 = arith.constant 0 : index
    %c0_4 = arith.constant 0 : index
    %2 = vector.load %arg3[%c0_2, %c0_3, %c0_4] : memref<1x32x32xf32, #tpu.memory_space<vmem>>, vector<1x32x32xf32>
    %3 = vector.shape_cast %2 : vector<1x32x32xf32> to vector<32x32xf32>
    %cst = arith.constant dense<0.000000e+00> : vector<16x32xf32>
    %4 = tpu.matmul %1, %3, %cst {dimension_numbers = #tpu.dot_dimension_numbers<[1], [0], [0], [1], [0, 0, 1, 1], [], []>} : vector<16x32xf32>, vector<32x32xf32>, vector<16x32xf32> -> vector<16x32xf32>
    %c0_5 = arith.constant 0 : index
    %c0_6 = arith.constant 0 : index
    %c0_7 = arith.constant 0 : index
    %5 = vector.load %arg4[%c0_5, %c0_6, %c0_7] : memref<1x1x32xf32, #tpu.memory_space<vmem>>, vector<1x1x32xf32>
    %6 = vector.shape_cast %5 : vector<1x1x32xf32> to vector<1x32xf32>
    %7 = vector.broadcast %6 : vector<1x32xf32> to vector<16x32xf32>
    %8 = arith.addf %4, %7 : vector<16x32xf32>
    %c0_8 = arith.constant 0 : index
    %c0_9 = arith.constant 0 : index
    %c0_10 = arith.constant 0 : index
    %9 = vector.load %arg5[%c0_8, %c0_9, %c0_10] : memref<1x16x32xf32, #tpu.memory_space<vmem>>, vector<1x16x32xf32>
    %10 = vector.shape_cast %9 : vector<1x16x32xf32> to vector<16x32xf32>
    %11 = vector.shape_cast %8 : vector<16x32xf32> to vector<1x16x32xf32>
    tpu.vector_store %arg5[%c0_8, %c0_9, %c0_10], %11 {strides = array<i32>} : memref<1x16x32xf32, #tpu.memory_space<vmem>>, vector<1x16x32xf32>,
    return
  }
  func.func @transform_0(%arg0: i32, %arg1: i32) -> (i32, i32, i32) {
    %c0_i32 = arith.constant 0 : i32
    %c0_i32_0 = arith.constant 0 : i32
    return %arg0, %arg1, %c0_i32 : i32, i32, i32
  }
  func.func @transform_1(%arg0: i32, %arg1: i32) -> (i32, i32, i32) {
    %c0_i32 = arith.constant 0 : i32
    %c0_i32_0 = arith.constant 0 : i32
    %c0_i32_1 = arith.constant 0 : i32
    return %arg0, %c0_i32, %c0_i32_0 : i32, i32, i32
  }
  func.func @transform_2(%arg0: i32, %arg1: i32) -> (i32, i32, i32) {
    %c0_i32 = arith.constant 0 : i32
    %c0_i32_0 = arith.constant 0 : i32
    %c0_i32_1 = arith.constant 0 : i32
    return %arg0, %c0_i32, %c0_i32_0 : i32, i32, i32
  }
  func.func @transform_3(%arg0: i32, %arg1: i32) -> (i32, i32, i32) {
    %c0_i32 = arith.constant 0 : i32
    %c0_i32_0 = arith.constant 0 : i32
    return %arg0, %arg1, %c0_i32 : i32, i32, i32
  }
}

module attributes {stable_mosaic.version = 11 : i64} {
  func.func @_batched_linear_kernel(%arg0: i32, %arg1: i32, %arg2: memref<1x16x32xf32, #tpu.memory_space<vmem>>, %arg3: memref<1x32x32xf32, #tpu.memory_space<vmem>>, %arg4: memref<1x1x32xf32, #tpu.memory_space<vmem>>, %arg5: memref<1x16x32xf32, #tpu.memory_space<vmem>>) attributes {dimension_semantics = [#tpu.dimension_semantics<parallel>, #tpu.dimension_semantics<parallel>], iteration_bounds = array<i64: 1, 1>, scalar_prefetch = 0 : i64, scratch_operands = 0 : i64, tpu.core_type = #tpu.core_type<tc>, window_params = [{transform_indices = @transform_0, window_bounds = array<i64: 1, 16, 32>}, {transform_indices = @transform_1, window_bounds = array<i64: 1, 32, 32>}, {transform_indices = @transform_2, window_bounds = array<i64: 1, 1, 32>}, {transform_indices = @transform_3, window_bounds = array<i64: 1, 16, 32>}]} {
    %c0 = arith.constant 0 : index
    %c0_0 = arith.constant 0 : index
    %c0_1 = arith.constant 0 : index
    %0 = vector.load %arg2[%c0, %c0_0, %c0_1] : memref<1x16x32xf32, #tpu.memory_space<vmem>>, vector<1x16x32xf32>
    %1 = vector.shape_cast %0 : vector<1x16x32xf32> to vector<16x32xf32>
    %c0_2 = arith.constant 0 : index
    %c0_3 = arith.constant 0 : index
    %c0_4 = arith.constant 0 : index
    %2 = vector.load %arg3[%c0_2, %c0_3, %c0_4] : memref<1x32x32xf32, #tpu.memory_space<vmem>>, vector<1x32x32xf32>
    %3 = vector.shape_cast %2 : vector<1x32x32xf32> to vector<32x32xf32>
    %cst = arith.constant dense<0.000000e+00> : vector<16x32xf32>
    %4 = tpu.matmul %1, %3, %cst {dimension_numbers = #tpu.dot_dimension_numbers<[1], [0], [0], [1], [0, 0, 1, 1], [], []>} : vector<16x32xf32>, vector<32x32xf32>, vector<16x32xf32> -> vector<16x32xf32>
    %c0_5 = arith.constant 0 : index
    %c0_6 = arith.constant 0 : index
    %c0_7 = arith.constant 0 : index
    %5 = vector.load %arg4[%c0_5, %c0_6, %c0_7] : memref<1x1x32xf32, #tpu.memory_space<vmem>>, vector<1x1x32xf32>
    %6 = vector.shape_cast %5 : vector<1x1x32xf32> to vector<1x32xf32>
    %7 = vector.broadcast %6 : vector<1x32xf32> to vector<16x32xf32>
    %8 = arith.addf %4, %7 : vector<16x32xf32>
    %c0_8 = arith.constant 0 : index
    %c0_9 = arith.constant 0 : index
    %c0_10 = arith.constant 0 : index
    %9 = vector.load %arg5[%c0_8, %c0_9, %c0_10] : memref<1x16x32xf32, #tpu.memory_space<vmem>>, vector<1x16x32xf32>
    %10 = vector.shape_cast %9 : vector<1x16x32xf32> to vector<16x32xf32>
    %11 = vector.shape_cast %8 : vector<16x32xf32> to vector<1x16x32xf32>
    tpu.vector_store %arg5[%c0_8, %c0_9, %c0_10], %11 {strides = array<i32>} : memref<1x16x32xf32, #tpu.memory_space<vmem>>, vector<1x16x32xf32>,
    return
  }
  func.func @transform_0(%arg0: i32, %arg1: i32) -> (i32, i32, i32) {
    %c0_i32 = arith.constant 0 : i32
    %c0_i32_0 = arith.constant 0 : i32
    return %arg0, %arg1, %c0_i32 : i32, i32, i32
  }
  func.func @transform_1(%arg0: i32, %arg1: i32) -> (i32, i32, i32) {
    %c0_i32 = arith.constant 0 : i32
    %c0_i32_0 = arith.constant 0 : i32
    %c0_i32_1 = arith.constant 0 : i32
    return %arg0, %c0_i32, %c0_i32_0 : i32, i32, i32
  }
  func.func @transform_2(%arg0: i32, %arg1: i32) -> (i32, i32, i32) {
    %c0_i32 = arith.constant 0 : i32
    %c0_i32_0 = arith.constant 0 : i32
    %c0_i32_1 = arith.constant 0 : i32
    return %arg0, %c0_i32, %c0_i32_0 : i32, i32, i32
  }
  func.func @transform_3(%arg0: i32, %arg1: i32) -> (i32, i32, i32) {
    %c0_i32 = arith.constant 0 : i32
    %c0_i32_0 = arith.constant 0 : i32
    return %arg0, %arg1, %c0_i32 : i32, i32, i32
  }
}

module attributes {stable_mosaic.version = 11 : i64} {
  func.func @_attention_kernel(%arg0: i32, %arg1: memref<8x1x4x8xf32, #tpu.memory_space<vmem>>, %arg2: memref<8x1x4x8xf32, #tpu.memory_space<vmem>>, %arg3: memref<8x1x4x8xf32, #tpu.memory_space<vmem>>, %arg4: memref<8x1x4x8xf32, #tpu.memory_space<vmem>>, %arg5: memref<1x8x8xf32, #tpu.memory_space<vmem>>) attributes {dimension_semantics = [#tpu.dimension_semantics<parallel>], iteration_bounds = array<i64: 2>, scalar_prefetch = 0 : i64, scratch_operands = 0 : i64, tpu.core_type = #tpu.core_type<tc>, window_params = [{transform_indices = @transform_0, window_bounds = array<i64: 8, 1, 4, 8>}, {transform_indices = @transform_1, window_bounds = array<i64: 8, 1, 4, 8>}, {transform_indices = @transform_2, window_bounds = array<i64: 8, 1, 4, 8>}, {transform_indices = @transform_3, window_bounds = array<i64: 8, 1, 4, 8>}, {transform_indices = @transform_4, window_bounds = array<i64: 1, 8, 8>}]} {
    %c0 = arith.constant 0 : index
    %c0_0 = arith.constant 0 : index
    %c0_1 = arith.constant 0 : index
    %c0_2 = arith.constant 0 : index
    %0 = vector.load %arg1[%c0, %c0_0, %c0_1, %c0_2] : memref<8x1x4x8xf32, #tpu.memory_space<vmem>>, vector<8x1x4x8xf32>
    %1 = vector.shape_cast %0 : vector<8x1x4x8xf32> to vector<8x4x8xf32>
    %c0_3 = arith.constant 0 : index
    %c0_4 = arith.constant 0 : index
    %c0_5 = arith.constant 0 : index
    %c0_6 = arith.constant 0 : index
    %2 = vector.load %arg2[%c0_3, %c0_4, %c0_5, %c0_6] : memref<8x1x4x8xf32, #tpu.memory_space<vmem>>, vector<8x1x4x8xf32>
    %3 = vector.shape_cast %2 : vector<8x1x4x8xf32> to vector<8x4x8xf32>
    %c0_7 = arith.constant 0 : index
    %c0_8 = arith.constant 0 : index
    %c0_9 = arith.constant 0 : index
    %c0_10 = arith.constant 0 : index
    %4 = vector.load %arg3[%c0_7, %c0_8, %c0_9, %c0_10] : memref<8x1x4x8xf32, #tpu.memory_space<vmem>>, vector<8x1x4x8xf32>
    %5 = vector.shape_cast %4 : vector<8x1x4x8xf32> to vector<8x4x8xf32>
    "tpu.trace_start"() <{level = 10 : i32, message = "lhd,shd->hls"}> : () -> ()
    %cst = arith.constant dense<0.000000e+00> : vector<4x8x8xf32>
    %6 = tpu.matmul %1, %3, %cst {dimension_numbers = #tpu.dot_dimension_numbers<[2], [2], [0], [0], [0, 1, 0, 0, 1, 0], [1], [1]>} : vector<8x4x8xf32>, vector<8x4x8xf32>, vector<4x8x8xf32> -> vector<4x8x8xf32>
    "tpu.trace_stop"() : () -> ()
    %cst_11 = arith.constant dense<0xFF800000> : vector<4x8xf32>
    %7 = vector.multi_reduction <maximumf>, %6, %cst_11 [2] : vector<4x8x8xf32> to vector<4x8xf32>
    %8 = vector.shape_cast %7 : vector<4x8xf32> to vector<4x8x1xf32>
    %9 = vector.broadcast %8 : vector<4x8x1xf32> to vector<4x8x8xf32>
    %10 = arith.subf %6, %9 : vector<4x8x8xf32>
    %11 = math.exp %10 : vector<4x8x8xf32>
    %cst_12 = arith.constant dense<0.000000e+00> : vector<4x8xf32>
    %12 = vector.multi_reduction <add>, %11, %cst_12 [2] : vector<4x8x8xf32> to vector<4x8xf32>
    %13 = vector.shape_cast %12 : vector<4x8xf32> to vector<4x8x1xf32>
    %14 = tpu.reciprocal %13 : vector<4x8x1xf32> -> vector<4x8x1xf32>
    %15 = vector.broadcast %14 : vector<4x8x1xf32> to vector<4x8x8xf32>
    %16 = arith.mulf %11, %15 : vector<4x8x8xf32>
    "tpu.trace_start"() <{level = 10 : i32, message = "hls,shd->lhd"}> : () -> ()
    %cst_13 = arith.constant dense<0.000000e+00> : vector<4x8x8xf32>
    %17 = tpu.matmul %5, %16, %cst_13 {dimension_numbers = #tpu.dot_dimension_numbers<[0], [2], [2], [1], [0, 1, 0, 2, 1, 1], [1], [0]>} : vector<8x4x8xf32>, vector<4x8x8xf32>, vector<4x8x8xf32> -> vector<4x8x8xf32>
    %18 = tpu.transpose %17, [2, 0, 1] : vector<4x8x8xf32> -> vector<8x4x8xf32>
    "tpu.trace_stop"() : () -> ()
    %19 = vector.shape_cast %18 : vector<8x4x8xf32> to vector<8x1x4x8xf32>
    %c0_14 = arith.constant 0 : index
    %c0_15 = arith.constant 0 : index
    %c0_16 = arith.constant 0 : index
    %c0_17 = arith.constant 0 : index
    %20 = vector.load %arg4[%c0_14, %c0_15, %c0_16, %c0_17] : memref<8x1x4x8xf32, #tpu.memory_space<vmem>>, vector<8x1x4x8xf32>
    tpu.vector_store %arg4[%c0_14, %c0_15, %c0_16, %c0_17], %19 {strides = array<i32>} : memref<8x1x4x8xf32, #tpu.memory_space<vmem>>, vector<8x1x4x8xf32>,
    %cst_18 = arith.constant dense<0.000000e+00> : vector<8x8xf32>
    %21 = vector.multi_reduction <add>, %16, %cst_18 [0] : vector<4x8x8xf32> to vector<8x8xf32>
    %cst_19 = arith.constant 2.500000e-01 : f32
    %22 = vector.broadcast %cst_19 : f32 to vector<8x8xf32>
    %23 = arith.mulf %21, %22 : vector<8x8xf32>
    %24 = vector.shape_cast %23 : vector<8x8xf32> to vector<1x8x8xf32>
    %c0_20 = arith.constant 0 : index
    %c0_21 = arith.constant 0 : index
    %c0_22 = arith.constant 0 : index
    %25 = vector.load %arg5[%c0_20, %c0_21, %c0_22] : memref<1x8x8xf32, #tpu.memory_space<vmem>>, vector<1x8x8xf32>
    tpu.vector_store %arg5[%c0_20, %c0_21, %c0_22], %24 {strides = array<i32>} : memref<1x8x8xf32, #tpu.memory_space<vmem>>, vector<1x8x8xf32>,
    return
  }
  func.func @transform_0(%arg0: i32) -> (i32, i32, i32, i32) {
    %c0_i32 = arith.constant 0 : i32
    %c0_i32_0 = arith.constant 0 : i32
    %c0_i32_1 = arith.constant 0 : i32
    %c0_i32_2 = arith.constant 0 : i32
    return %c0_i32, %arg0, %c0_i32_0, %c0_i32_1 : i32, i32, i32, i32
  }
  func.func @transform_1(%arg0: i32) -> (i32, i32, i32, i32) {
    %c1_i32 = arith.constant 1 : i32
    %c0_i32 = arith.constant 0 : i32
    %c0_i32_0 = arith.constant 0 : i32
    %c0_i32_1 = arith.constant 0 : i32
    return %c1_i32, %arg0, %c0_i32, %c0_i32_0 : i32, i32, i32, i32
  }
  func.func @transform_2(%arg0: i32) -> (i32, i32, i32, i32) {
    %c2_i32 = arith.constant 2 : i32
    %c0_i32 = arith.constant 0 : i32
    %c0_i32_0 = arith.constant 0 : i32
    %c0_i32_1 = arith.constant 0 : i32
    return %c2_i32, %arg0, %c0_i32, %c0_i32_0 : i32, i32, i32, i32
  }
  func.func @transform_3(%arg0: i32) -> (i32, i32, i32, i32) {
    %c0_i32 = arith.constant 0 : i32
    %c0_i32_0 = arith.constant 0 : i32
    %c0_i32_1 = arith.constant 0 : i32
    %c0_i32_2 = arith.constant 0 : i32
    return %c0_i32, %arg0, %c0_i32_0, %c0_i32_1 : i32, i32, i32, i32
  }
  func.func @transform_4(%arg0: i32) -> (i32, i32, i32) {
    %c0_i32 = arith.constant 0 : i32
    %c0_i32_0 = arith.constant 0 : i32
    %c0_i32_1 = arith.constant 0 : i32
    return %arg0, %c0_i32, %c0_i32_0 : i32, i32, i32
  }
}

</mosaic_0001>

<llo_original>
// kernel: multihead_attention_forward.5
$region0: #{multihead_attention_forward.5}
  #allocation0 [shape = 'u32[]', space=smem, size = 0x4, offset = 0x4, fixed_abs, tag = 'smem constant byte address 0x4 - core index']
  #allocation1 [shape = 'u32[144,128]{1,0:T(1,128)}', space=vmem, size = 0x12000, scoped, tag = 'internal scratch']
  %s0 = inlined_call_operand.vmem [shape: f32[1,16,32], index: 0, kind: input, shape index: {}]
  %s1 = inlined_call_operand.vmem [shape: f32[1,32,32], index: 1, kind: input, shape index: {}]
  %s2 = inlined_call_operand.vmem [shape: f32[1,1,32], index: 2, kind: input, shape index: {}]
  %s3 = inlined_call_operand.hbm [shape: f32[1,16,32], index: 3, kind: output, shape index: {}]
  %s4 = sld [smem:[#allocation0]]
  $region22: #{multihead_attention_forward.5} parent=0
    _
  %s6 = ssub.s32 1, %s4
  %s7 = scalar_select 0, %s6, %s4
  $region1: #{multihead_attention_forward.5} parent=0
    #allocation2 [shape = 'u8[8192]{0}', space=vmem, size = 0x2000, scoped, tag = 'output window, operand 0, single buffered']
    #allocation3 [shape = 's32[1]{0}', space=sflag, size = 0x4, scoped, tag = 'scoped memory for multihead_attention_forward.5']
    %8 = vsyncpa [#allocation3], 0
    // Predicated region
    $region2: #{multihead_attention_forward.5} parent=1 // pred_check
      _
    $region3: #{multihead_attention_forward.5} parent=1 // pred_check_branch
      %10 = sbr.rel (0) target = $region5
    $region4: #{multihead_attention_forward.5} parent=1 // pred_region
      _
    $region5: #{multihead_attention_forward.5} parent=1 // pred_fallthru
      _
    // Predicated region
    $region6: #{multihead_attention_forward.5} parent=1 // pred_check
      _
    $region7: #{multihead_attention_forward.5} parent=1 // pred_check_branch
      %12 = sbr.rel (0) target = $region9
    $region8: #{multihead_attention_forward.5} parent=1 // pred_region
      _
    $region9: #{multihead_attention_forward.5} parent=1 // pred_fallthru
      _
    // Predicated region
    $region10: #{multihead_attention_forward.5} parent=1 // pred_check
      _
    $region11: #{multihead_attention_forward.5} parent=1 // pred_check_branch
      %14 = sbr.rel (0) target = $region13
    $region12: #{multihead_attention_forward.5} parent=1 // pred_region
      _
    $region13: #{multihead_attention_forward.5} parent=1 // pred_fallthru
      _
    %v15 = vld [vmem:[%s0] sm:$0xff]
    %v16 = vld [vmem:[%s0 + $0x8] sm:$0xff]
    %v17 = vld [vmem:[%s1] sm:$0xff]
    %v18 = vld [vmem:[%s1 + $0x8] sm:$0xff]
    %v19 = vld [vmem:[%s1 + $0x10] sm:$0xff]
    %v20 = vld [vmem:[%s1 + $0x18] sm:$0xff]
    %v21 = vld [vmem:[%s2] sm:$0x1]
    %v23 = vlaneseq
    %v24 = vshrl.u32 %v23, 7
    %v25 = vsub.s32 0, %v24
    %v26 = vrot.slane %v21, %v25
    %vm28 = vcmask 261120
    %v30 = vsel %vm28, %v15, 0
    %v33 = vsel %vm28, %v16, 0
    %35 = vmatprep.subr.mxu0 0.0
    %36 = vmatpush1.msra.mxu0 %v17
    %37 = vmatprep.subr.mxu0 0.0
    %38 = vmatpush1.msra.mxu0 %v18
    %39 = vmatprep.subr.mxu0 0.0
    %40 = vmatpush1.msra.mxu0 %v19
    %41 = vmatprep.subr.mxu0 0.0
    %42 = vmatpush1.msra.mxu0 %v20
    %43 = vmatprep.subr.mxu0 0.0
    %44 = vmatpush1.msra.mxu0 0.0
    %45 = vmatprep.subr.mxu0 0.0
    %46 = vmatpush1.msra.mxu0 0.0
    %47 = vmatprep.subr.mxu0 0.0
    %48 = vmatpush1.msra.mxu0 0.0
    %49 = vmatprep.subr.mxu0 0.0
    %50 = vmatpush1.msra.mxu0 0.0
    %51 = vmatprep.subr.mxu0 0.0
    %52 = vmatpush1.msra.mxu0 0.0
    %53 = vmatprep.subr.mxu0 0.0
    %54 = vmatpush1.msra.mxu0 0.0
    %55 = vmatprep.subr.mxu0 0.0
    %56 = vmatpush1.msra.mxu0 0.0
    %57 = vmatprep.subr.mxu0 0.0
    %58 = vmatpush1.msra.mxu0 0.0
    %59 = vmatprep.subr.mxu0 0.0
    %60 = vmatpush1.msra.mxu0 0.0
    %61 = vmatprep.subr.mxu0 0.0
    %62 = vmatpush1.msra.mxu0 0.0
    %63 = vmatprep.subr.mxu0 0.0
    %64 = vmatpush1.msra.mxu0 0.0
    %65 = vmatprep.subr.mxu0 0.0
    %66 = vmatpush1.msra.mxu0 0.0
    %67 = vmatprep.subr.mxu0 0.0
    %68 = vmatpush1.msra.mxu0 0.0
    %69 = vmatprep.subr.mxu0 0.0
    %70 = vmatpush1.msra.mxu0 0.0
    %71 = vmatprep.subr.mxu0 0.0
    %72 = vmatpush1.msra.mxu0 0.0
    %73 = vmatprep.subr.mxu0 0.0
    %74 = vmatpush1.msra.mxu0 0.0
    %75 = vmatprep.subr.mxu0 0.0
    %76 = vmatpush1.msra.mxu0 0.0
    %77 = vmatprep.subr.mxu0 0.0
    %78 = vmatpush1.msra.mxu0 0.0
    %79 = vmatprep.subr.mxu0 0.0
    %80 = vmatpush1.msra.mxu0 0.0
    %81 = vmatprep.subr.mxu0 0.0
    %82 = vmatpush1.msra.mxu0 0.0
    %83 = vmatprep.subr.mxu0 0.0
    %84 = vmatpush1.msra.mxu0 0.0
    %85 = vmatprep.subr.mxu0 0.0
    %86 = vmatpush1.msra.mxu0 0.0
    %87 = vmatprep.subr.mxu0 0.0
    %88 = vmatpush1.msra.mxu0 0.0
    %89 = vmatprep.subr.mxu0 0.0
    %90 = vmatpush1.msra.mxu0 0.0
    %91 = vmatprep.subr.mxu0 0.0
    %92 = vmatpush1.msra.mxu0 0.0
    %93 = vmatprep.subr.mxu0 0.0
    %94 = vmatpush1.msra.mxu0 0.0
    %95 = vmatprep.subr.mxu0 0.0
    %96 = vmatpush1.msra.mxu0 0.0
    %97 = vmatprep.subr.mxu0 0.0
    %98 = vmatpush1.msra.mxu0 0.0
    %99 = vmatprep.mubr.f32.mxu0 0.0
    %100 = vmatmul.mubr.f32.gmra.mrb[0].mxu0 %v30
    %v101 = vpop.f32.mrb[0].mxu0
    %v102 = vadd.f32 %v26, %v101
    %v103 = vpop.f32.mrb[0].mxu0
    %104 = vmatprep.mubr.f32.mxu0 0.0
    %105 = vmatmul.mubr.f32.gmra.mrb[0].mxu0 %v33
    %v106 = vpop.f32.mrb[0].mxu0
    %v107 = vadd.f32 %v26, %v106
    %v108 = vpop.f32.mrb[0].mxu0
    %109 = vdwg.mxu0
    %110 = vst.msk [vmem:[#allocation2] sm:$0xff] %vm28, %v102
    %111 = vst.msk [vmem:[#allocation2 + $0x8] sm:$0xff] %vm28, %v107
    // Predicated region
    $region14: #{multihead_attention_forward.5} parent=1 // pred_check
      _
    $region15: #{multihead_attention_forward.5} parent=1 // pred_check_branch
      %113 = sbr.rel (0) target = $region17
    $region16: #{multihead_attention_forward.5} parent=1 // pred_region
      %s115 = ssub.s32 256, 256
      %116 = vsyncadd [#allocation3], %s115
      %s117 = sshll.u32 [#allocation2], 4
      %s118 = int_to_ptr.vmem [resolvable:$true] %s117
      %123 = dma.vmem_to_hbm [thread:$0]  %s118, 256, %s3, [#allocation3], 128, 128, 8
    $region17: #{multihead_attention_forward.5} parent=1 // pred_fallthru
      _
    // Predicated region
    $region18: #{multihead_attention_forward.5} parent=1 // pred_check
      _
    $region19: #{multihead_attention_forward.5} parent=1 // pred_check_branch
      %125 = sbr.rel (0) target = $region21
    $region20: #{multihead_attention_forward.5} parent=1 // pred_region
      %126 = dma.done [#allocation3], 256
    $region21: #{multihead_attention_forward.5} parent=1 // pred_fallthru
      _
    %127 = vsyncpa [#allocation3], 1

// kernel: multihead_attention_forward.3
$region0: #{multihead_attention_forward.3}
  #allocation0 [shape = 'u32[]', space=smem, size = 0x4, offset = 0x4, fixed_abs, tag = 'smem constant byte address 0x4 - core index']
  #allocation1 [shape = 'u32[144,128]{1,0:T(1,128)}', space=vmem, size = 0x12000, scoped, tag = 'internal scratch']
  %s0 = inlined_call_operand.vmem [shape: f32[3,16,32], index: 0, kind: input, shape index: {}]
  %s1 = inlined_call_operand.vmem [shape: f32[3,32,32], index: 1, kind: input, shape index: {}]
  %s2 = inlined_call_operand.vmem [shape: f32[3,1,32], index: 2, kind: input, shape index: {}]
  %s3 = inlined_call_operand.vmem [shape: f32[3,16,32], index: 3, kind: output, shape index: {}]
  %s4 = sld [smem:[#allocation0]]
  $region45: #{multihead_attention_forward.3} parent=0
    _
  %s6 = ssub.s32 1, %s4
  %s7 = scalar_select 0, %s6, %s4
  loop: start=0, step=1, limit=5
  $region2: #{multihead_attention_forward.3} parent=0 // loop_pre_header
    _
  $region3: #{multihead_attention_forward.3} parent=0 // loop_header
    %s9 = sphi 0, %s13
    %p10 = scmp.ge.s32.totalorder %s9, 5
    %s16 = sphi 0, %s28
    %s17 = sphi 0, %s24
    %s18 = sphi 0, %s16
    %s19 = sphi 0, %s17
    %s20 = sphi 0, %s18
    %s21 = sphi 0, %s19
    %s33 = sphi 0, %s35
    %s36 = sphi 0, %s33
    %s37 = sphi 0, %s36
    %s53 = sphi 0, %s37
    %s59 = sphi 0, %s61
    %s62 = sphi 0, %s59
    %s63 = sphi 0, %s62
    %s79 = sphi 0, %s63
    %s85 = sphi 0, %s87
    %s88 = sphi 0, %s85
    %s89 = sphi 0, %s88
    %s105 = sphi 0, %s89
    %s113 = sphi 0, %s115
    %s116 = sphi 0, %s113
    %s117 = sphi 0, %s116
    %s133 = sphi 0, %s117
  $region4: #{multihead_attention_forward.3} parent=0 // loop_header_branch
    %12 = sbr.rel (%p10) target = $region8
  $region5: #{multihead_attention_forward.3} parent=0 // loop_body
    %s14 = ssub.s32 %s9, 1
    %s15 = ssub.s32 %s9, 2
    %s22 = sadd.s32 1, %s17
    %p23 = scmp.ge.s32.totalorder %s22, 1
    %s24 = scalar_select %p23, 0, %s22
    %s25 = sadd.s32 1, %s16
    %s26 = scalar_select %p23, %s25, %s16
    %p27 = scmp.ge.s32.totalorder %s26, 3
    %s28 = scalar_select %p27, 0, %s26
    %s29 = ssub.s32 %s16, %s28
    %s30 = ssub.s32 %s17, %s24
    %s31 = sor.u32 %s29, %s30
    %p32 = scmp.eq.s32.totalorder %s31, 0
    %s34 = sadd.s32 %s33, 1
    %s35 = scalar_select %p32, %s33, %s34
    %p38 = pneg %p32
    %p39 = scmp.eq.s32.totalorder %s9, 2
    %p40 = por %p38, %p39
    %p41 = scmp.ne.s32.totalorder %s33, %s36
    %p42 = scmp.eq.s32.totalorder %s9, 0
    %p43 = por %p41, %p42
    %p44 = scmp.ne.s32.totalorder %s33, %s36
    %p45 = scmp.eq.s32.totalorder %s14, 2
    %p46 = por %p44, %p45
    %p47 = scmp.ne.s32.totalorder %s36, %s37
    %p48 = scmp.eq.s32.totalorder %s14, 0
    %p49 = por %p47, %p48
    %p50 = scmp.ne.s32.totalorder %s36, %s37
    %p51 = scmp.eq.s32.totalorder %s15, 2
    %p52 = por %p50, %p51
    %p54 = scmp.ne.s32.totalorder %s37, %s53
    %p55 = scmp.eq.s32.totalorder %s15, 0
    %p56 = por %p54, %p55
    %s57 = ssub.s32 %s16, %s28
    %p58 = scmp.eq.s32.totalorder %s57, 0
    %s60 = sadd.s32 %s59, 1
    %s61 = scalar_select %p58, %s59, %s60
    %p64 = pneg %p58
    %p65 = scmp.eq.s32.totalorder %s9, 2
    %p66 = por %p64, %p65
    %p67 = scmp.ne.s32.totalorder %s59, %s62
    %p68 = scmp.eq.s32.totalorder %s9, 0
    %p69 = por %p67, %p68
    %p70 = scmp.ne.s32.totalorder %s59, %s62
    %p71 = scmp.eq.s32.totalorder %s14, 2
    %p72 = por %p70, %p71
    %p73 = scmp.ne.s32.totalorder %s62, %s63
    %p74 = scmp.eq.s32.totalorder %s14, 0
    %p75 = por %p73, %p74
    %p76 = scmp.ne.s32.totalorder %s62, %s63
    %p77 = scmp.eq.s32.totalorder %s15, 2
    %p78 = por %p76, %p77
    %p80 = scmp.ne.s32.totalorder %s63, %s79
    %p81 = scmp.eq.s32.totalorder %s15, 0
    %p82 = por %p80, %p81
    %s83 = ssub.s32 %s16, %s28
    %p84 = scmp.eq.s32.totalorder %s83, 0
    %s86 = sadd.s32 %s85, 1
    %s87 = scalar_select %p84, %s85, %s86
    %p90 = pneg %p84
    %p91 = scmp.eq.s32.totalorder %s9, 2
    %p92 = por %p90, %p91
    %p93 = scmp.ne.s32.totalorder %s85, %s88
    %p94 = scmp.eq.s32.totalorder %s9, 0
    %p95 = por %p93, %p94
    %p96 = scmp.ne.s32.totalorder %s85, %s88
    %p97 = scmp.eq.s32.totalorder %s14, 2
    %p98 = por %p96, %p97
    %p99 = scmp.ne.s32.totalorder %s88, %s89
    %p100 = scmp.eq.s32.totalorder %s14, 0
    %p101 = por %p99, %p100
    %p102 = scmp.ne.s32.totalorder %s88, %s89
    %p103 = scmp.eq.s32.totalorder %s15, 2
    %p104 = por %p102, %p103
    %p106 = scmp.ne.s32.totalorder %s89, %s105
    %p107 = scmp.eq.s32.totalorder %s15, 0
    %p108 = por %p106, %p107
    %s109 = ssub.s32 %s16, %s28
    %s110 = ssub.s32 %s17, %s24
    %s111 = sor.u32 %s109, %s110
    %p112 = scmp.eq.s32.totalorder %s111, 0
    %s114 = sadd.s32 %s113, 1
    %s115 = scalar_select %p112, %s113, %s114
    %p118 = pneg %p112
    %p119 = scmp.eq.s32.totalorder %s9, 2
    %p120 = por %p118, %p119
    %p121 = scmp.ne.s32.totalorder %s113, %s116
    %p122 = scmp.eq.s32.totalorder %s9, 0
    %p123 = por %p121, %p122
    %p124 = scmp.ne.s32.totalorder %s113, %s116
    %p125 = scmp.eq.s32.totalorder %s14, 2
    %p126 = por %p124, %p125
    %p127 = scmp.ne.s32.totalorder %s116, %s117
    %p128 = scmp.eq.s32.totalorder %s14, 0
    %p129 = por %p127, %p128
    %p130 = scmp.ne.s32.totalorder %s116, %s117
    %p131 = scmp.eq.s32.totalorder %s15, 2
    %p132 = por %p130, %p131
    %p134 = scmp.ne.s32.totalorder %s117, %s133
    %p135 = scmp.eq.s32.totalorder %s15, 0
    %p136 = por %p134, %p135
    %p137 = scmp.le.s32.totalorder 1, %s9
    %p138 = scmp.lt.s32.totalorder %s9, 4
    %p139 = pnand %p137, %p138
    %p140 = pneg %p139
    // Predicated region
    $region9: #{multihead_attention_forward.3} parent=5 // pred_check
      _
    $region10: #{multihead_attention_forward.3} parent=5 // pred_check_branch
      %142 = sbr.rel (%p139) target = $region12
    $region11: #{multihead_attention_forward.3} parent=5 // pred_region
      %s143 = ssub.s32 %s9, 1
    $region12: #{multihead_attention_forward.3} parent=5 // pred_fallthru
      _
    %p144 = scmp.lt.s32.totalorder %s9, 3
    // Predicated region
    $region13: #{multihead_attention_forward.3} parent=5 // pred_check
      %p145 = pneg %p144
    $region14: #{multihead_attention_forward.3} parent=5 // pred_check_branch
      %147 = sbr.rel (%p145) target = $region16
    $region15: #{multihead_attention_forward.3} parent=5 // pred_region
      // Predicated region
      $region17: #{multihead_attention_forward.3} parent=15 // pred_check
        %p148 = pneg %p43
      $region18: #{multihead_attention_forward.3} parent=15 // pred_check_branch
        %150 = sbr.rel (%p148) target = $region20
      $region19: #{multihead_attention_forward.3} parent=15 // pred_region
        %s151 = smul.u32 2, %s17
        %p152 = scmp.lt.s32.totalorder %s16, 2
        %s153 = scalar_select %p152, %s16, 2
        %p154 = scmp.lt.s32.totalorder %s151, 1
        %s155 = scalar_select %p154, %s151, 1
        %s156 = smul.addr %s153, 2
        %s157 = sadd.s32 %s155, %s156
        %s158 = smul.addr %s157, 8
        %s159 = scalar_lea.vmem %s0, %s158
        %s160 = smul.u32 2, %s17
      $region20: #{multihead_attention_forward.3} parent=15 // pred_fallthru
        _
      // Predicated region
      $region21: #{multihead_attention_forward.3} parent=15 // pred_check
        %p161 = pneg %p69
      $region22: #{multihead_attention_forward.3} parent=15 // pred_check_branch
        %163 = sbr.rel (%p161) target = $region24
      $region23: #{multihead_attention_forward.3} parent=15 // pred_region
        %p164 = scmp.lt.s32.totalorder %s16, 2
        %s165 = scalar_select %p164, %s16, 2
        %s166 = smul.addr %s165, 4
        %s167 = smul.addr %s166, 8
        %s168 = scalar_lea.vmem %s1, %s167
      $region24: #{multihead_attention_forward.3} parent=15 // pred_fallthru
        _
      // Predicated region
      $region25: #{multihead_attention_forward.3} parent=15 // pred_check
        %p169 = pneg %p95
      $region26: #{multihead_attention_forward.3} parent=15 // pred_check_branch
        %171 = sbr.rel (%p169) target = $region28
      $region27: #{multihead_attention_forward.3} parent=15 // pred_region
        %p172 = scmp.lt.s32.totalorder %s16, 2
        %s173 = scalar_select %p172, %s16, 2
        %s174 = scalar_lea.vmem %s2, %s173
      $region28: #{multihead_attention_forward.3} parent=15 // pred_fallthru
        _
    $region16: #{multihead_attention_forward.3} parent=5 // pred_fallthru
      _
    %p175 = scmp.le.s32.totalorder 1, %s9
    %p176 = scmp.lt.s32.totalorder %s9, 4
    %p177 = pnand %p175, %p176
    %p178 = pneg %p177
    // Predicated region
    $region29: #{multihead_attention_forward.3} parent=5 // pred_check
      _
    $region30: #{multihead_attention_forward.3} parent=5 // pred_check_branch
      %180 = sbr.rel (%p177) target = $region32
    $region31: #{multihead_attention_forward.3} parent=5 // pred_region
      %s181 = ssub.s32 %s9, 1
      %s182 = smul.u32 2, %s19
      %p183 = scmp.lt.s32.totalorder %s18, 2
      %s184 = scalar_select %p183, %s18, 2
      %p185 = scmp.lt.s32.totalorder %s182, 1
      %s186 = scalar_select %p185, %s182, 1
      %s187 = smul.addr %s184, 2
      %s188 = sadd.s32 %s186, %s187
      %s189 = smul.addr %s188, 8
      %s190 = scalar_lea.vmem %s0, %s189
      %p191 = pneg %p49
      %p192 = pneg %p46
      %p193 = scmp.lt.s32.totalorder %s18, 2
      %s194 = scalar_select %p193, %s18, 2
      %s195 = smul.addr %s194, 4
      %s196 = smul.addr %s195, 8
      %s197 = scalar_lea.vmem %s1, %s196
      %p198 = pneg %p75
      %p199 = pneg %p72
      %p200 = scmp.lt.s32.totalorder %s18, 2
      %s201 = scalar_select %p200, %s18, 2
      %s202 = scalar_lea.vmem %s2, %s201
      %p203 = pneg %p101
      %p204 = pneg %p98
      %p205 = pneg %p129
      %p206 = pneg %p126
      %s207 = smul.u32 2, %s19
      %p208 = scmp.lt.s32.totalorder %s18, 2
      %s209 = scalar_select %p208, %s18, 2
      %p210 = scmp.lt.s32.totalorder %s207, 1
      %s211 = scalar_select %p210, %s207, 1
      %s212 = smul.addr %s209, 2
      %s213 = sadd.s32 %s211, %s212
      %s214 = smul.addr %s213, 8
      %s215 = scalar_lea.vmem %s3, %s214
      %s216 = smul.u32 2, %s19
      %p217 = scmp.lt.s32.totalorder %s18, 2
      %s218 = scalar_select %p217, %s18, 2
      %p219 = scmp.lt.s32.totalorder %s216, 1
      %s220 = scalar_select %p219, %s216, 1
      %s221 = smul.addr %s218, 2
      %s222 = sadd.s32 %s220, %s221
      %s223 = smul.addr %s222, 8
      %s224 = scalar_lea.vmem %s0, %s223
      %s225 = smul.u32 2, %s19
      %p226 = scmp.lt.s32.totalorder %s18, 2
      %s227 = scalar_select %p226, %s18, 2
      %s228 = smul.addr %s227, 4
      %s229 = smul.addr %s228, 8
      %s230 = scalar_lea.vmem %s1, %s229
      %p231 = scmp.lt.s32.totalorder %s18, 2
      %s232 = scalar_select %p231, %s18, 2
      %s233 = scalar_lea.vmem %s2, %s232
      %s234 = smul.u32 2, %s19
      %p235 = scmp.lt.s32.totalorder %s18, 2
      %s236 = scalar_select %p235, %s18, 2
      %p237 = scmp.lt.s32.totalorder %s234, 1
      %s238 = scalar_select %p237, %s234, 1
      %s239 = smul.addr %s236, 2
      %s240 = sadd.s32 %s238, %s239
      %s241 = smul.addr %s240, 8
      %s242 = scalar_lea.vmem %s3, %s241
      %s243 = smul.u32 2, %s19
      %v244 = vld [vmem:[%s224] sm:$0xff]
      %v245 = vld [vmem:[%s224 + $0x8] sm:$0xff]
      %v246 = vld [vmem:[%s230] sm:$0xff]
      %v247 = vld [vmem:[%s230 + $0x8] sm:$0xff]
      %v248 = vld [vmem:[%s230 + $0x10] sm:$0xff]
      %v249 = vld [vmem:[%s230 + $0x18] sm:$0xff]
      %v250 = vld [vmem:[%s233] sm:$0x1]
      %v252 = vlaneseq
      %v253 = vshrl.u32 %v252, 7
      %v254 = vsub.s32 0, %v253
      %v255 = vrot.slane %v250, %v254
      %vm257 = vcmask 261120
      %v259 = vsel %vm257, %v244, 0
      %v262 = vsel %vm257, %v245, 0
      %264 = vmatprep.subr.mxu0 0.0
      %265 = vmatpush1.msra.mxu0 %v246
      %266 = vmatprep.subr.mxu0 0.0
      %267 = vmatpush1.msra.mxu0 %v247
      %268 = vmatprep.subr.mxu0 0.0
      %269 = vmatpush1.msra.mxu0 %v248
      %270 = vmatprep.subr.mxu0 0.0
      %271 = vmatpush1.msra.mxu0 %v249
      %272 = vmatprep.subr.mxu0 0.0
      %273 = vmatpush1.msra.mxu0 0.0
      %274 = vmatprep.subr.mxu0 0.0
      %275 = vmatpush1.msra.mxu0 0.0
      %276 = vmatprep.subr.mxu0 0.0
      %277 = vmatpush1.msra.mxu0 0.0
      %278 = vmatprep.subr.mxu0 0.0
      %279 = vmatpush1.msra.mxu0 0.0
      %280 = vmatprep.subr.mxu0 0.0
      %281 = vmatpush1.msra.mxu0 0.0
      %282 = vmatprep.subr.mxu0 0.0
      %283 = vmatpush1.msra.mxu0 0.0
      %284 = vmatprep.subr.mxu0 0.0
      %285 = vmatpush1.msra.mxu0 0.0
      %286 = vmatprep.subr.mxu0 0.0
      %287 = vmatpush1.msra.mxu0 0.0
      %288 = vmatprep.subr.mxu0 0.0
      %289 = vmatpush1.msra.mxu0 0.0
      %290 = vmatprep.subr.mxu0 0.0
      %291 = vmatpush1.msra.mxu0 0.0
      %292 = vmatprep.subr.mxu0 0.0
      %293 = vmatpush1.msra.mxu0 0.0
      %294 = vmatprep.subr.mxu0 0.0
      %295 = vmatpush1.msra.mxu0 0.0
      %296 = vmatprep.subr.mxu0 0.0
      %297 = vmatpush1.msra.mxu0 0.0
      %298 = vmatprep.subr.mxu0 0.0
      %299 = vmatpush1.msra.mxu0 0.0
      %300 = vmatprep.subr.mxu0 0.0
      %301 = vmatpush1.msra.mxu0 0.0
      %302 = vmatprep.subr.mxu0 0.0
      %303 = vmatpush1.msra.mxu0 0.0
      %304 = vmatprep.subr.mxu0 0.0
      %305 = vmatpush1.msra.mxu0 0.0
      %306 = vmatprep.subr.mxu0 0.0
      %307 = vmatpush1.msra.mxu0 0.0
      %308 = vmatprep.subr.mxu0 0.0
      %309 = vmatpush1.msra.mxu0 0.0
      %310 = vmatprep.subr.mxu0 0.0
      %311 = vmatpush1.msra.mxu0 0.0
      %312 = vmatprep.subr.mxu0 0.0
      %313 = vmatpush1.msra.mxu0 0.0
      %314 = vmatprep.subr.mxu0 0.0
      %315 = vmatpush1.msra.mxu0 0.0
      %316 = vmatprep.subr.mxu0 0.0
      %317 = vmatpush1.msra.mxu0 0.0
      %318 = vmatprep.subr.mxu0 0.0
      %319 = vmatpush1.msra.mxu0 0.0
      %320 = vmatprep.subr.mxu0 0.0
      %321 = vmatpush1.msra.mxu0 0.0
      %322 = vmatprep.subr.mxu0 0.0
      %323 = vmatpush1.msra.mxu0 0.0
      %324 = vmatprep.subr.mxu0 0.0
      %325 = vmatpush1.msra.mxu0 0.0
      %326 = vmatprep.subr.mxu0 0.0
      %327 = vmatpush1.msra.mxu0 0.0
      %328 = vmatprep.mubr.f32.mxu0 0.0
      %329 = vmatmul.mubr.f32.gmra.mrb[0].mxu0 %v259
      %v330 = vpop.f32.mrb[0].mxu0
      %v331 = vadd.f32 %v255, %v330
      %v332 = vpop.f32.mrb[0].mxu0
      %333 = vmatprep.mubr.f32.mxu0 0.0
      %334 = vmatmul.mubr.f32.gmra.mrb[0].mxu0 %v262
      %v335 = vpop.f32.mrb[0].mxu0
      %v336 = vadd.f32 %v255, %v335
      %v337 = vpop.f32.mrb[0].mxu0
      %338 = vdwg.mxu0
      %339 = vst.msk [vmem:[%s242] sm:$0xff] %vm257, %v331
      %340 = vst.msk [vmem:[%s242 + $0x8] sm:$0xff] %vm257, %v336
      %s341 = smul.u32 2, %s19
      %p342 = scmp.lt.s32.totalorder %s18, 2
      %s343 = scalar_select %p342, %s18, 2
      %p344 = scmp.lt.s32.totalorder %s341, 1
      %s345 = scalar_select %p344, %s341, 1
      %s346 = smul.addr %s343, 2
      %s347 = sadd.s32 %s345, %s346
      %s348 = smul.addr %s347, 8
      %s349 = scalar_lea.vmem %s3, %s348
      // Predicated region
      $region33: #{multihead_attention_forward.3} parent=31 // pred_check
        %p350 = pneg %p126
      $region34: #{multihead_attention_forward.3} parent=31 // pred_check_branch
        %352 = sbr.rel (%p350) target = $region36
      $region35: #{multihead_attention_forward.3} parent=31 // pred_region
        %s353 = smul.u32 2, %s19
      $region36: #{multihead_attention_forward.3} parent=31 // pred_fallthru
        _
    $region32: #{multihead_attention_forward.3} parent=5 // pred_fallthru
      _
    %p354 = scmp.le.s32.totalorder 2, %s9
    // Predicated region
    $region37: #{multihead_attention_forward.3} parent=5 // pred_check
      %p355 = pneg %p354
    $region38: #{multihead_attention_forward.3} parent=5 // pred_check_branch
      %357 = sbr.rel (%p355) target = $region40
    $region39: #{multihead_attention_forward.3} parent=5 // pred_region
      %s358 = ssub.s32 %s9, 2
      // Predicated region
      $region41: #{multihead_attention_forward.3} parent=39 // pred_check
        %p359 = pneg %p132
      $region42: #{multihead_attention_forward.3} parent=39 // pred_check_branch
        %361 = sbr.rel (%p359) target = $region44
      $region43: #{multihead_attention_forward.3} parent=39 // pred_region
        %s362 = smul.u32 2, %s21
        %p363 = scmp.lt.s32.totalorder %s20, 2
        %s364 = scalar_select %p363, %s20, 2
        %p365 = scmp.lt.s32.totalorder %s362, 1
        %s366 = scalar_select %p365, %s362, 1
        %s367 = smul.addr %s364, 2
        %s368 = sadd.s32 %s366, %s367
        %s369 = smul.addr %s368, 8
        %s370 = scalar_lea.vmem %s3, %s369
      $region44: #{multihead_attention_forward.3} parent=39 // pred_fallthru
        _
    $region40: #{multihead_attention_forward.3} parent=5 // pred_fallthru
      _
  $region6: #{multihead_attention_forward.3} parent=0 // loop_footer
    %s13 = sadd.s32 1, %s9
  $region7: #{multihead_attention_forward.3} parent=0 // loop_footer_branch
    %8 = sbr.rel target = $region3
  $region8: #{multihead_attention_forward.3} parent=0 // loop_exit
    _

// kernel: multihead_attention_forward.4
$region0: #{multihead_attention_forward.4}
  #allocation0 [shape = 'u32[]', space=smem, size = 0x4, offset = 0x4, fixed_abs, tag = 'smem constant byte address 0x4 - core index']
  #allocation1 [shape = 'u32[144,128]{1,0:T(1,128)}', space=vmem, size = 0x12000, scoped, tag = 'internal scratch']
  %s0 = inlined_call_operand.vmem [shape: f32[24,2,4,8], index: 0, kind: input, shape index: {}, may-alias: {0,1,2}]
  %s1 = inlined_call_operand.vmem [shape: f32[24,2,4,8], index: 1, kind: input, shape index: {}, may-alias: {0,1,2}]
  %s2 = inlined_call_operand.vmem [shape: f32[24,2,4,8], index: 2, kind: input, shape index: {}, may-alias: {0,1,2}]
  %s3 = inlined_call_operand.vmem [shape: f32[8,2,4,8], index: 3, kind: output, shape index: {0}]
  %s4 = inlined_call_operand.hbm [shape: f32[2,8,8], index: 4, kind: output, shape index: {1}]
  %5 = xla_tuple %s3, %s4
  %s6 = sld [smem:[#allocation0]]
  $region213: #{multihead_attention_forward.4} parent=0
    _
  %s8 = ssub.s32 1, %s6
  %s9 = scalar_select 0, %s8, %s6
  $region1: #{multihead_attention_forward.4} parent=0
    #allocation2 [shape = 'u8[32768]{0}', space=vmem, size = 0x8000, scoped, tag = 'input window, operand 0']
    #allocation3 [shape = 'u8[32768]{0}', space=vmem, size = 0x8000, scoped, tag = 'input window, operand 1']
    #allocation4 [shape = 'u8[32768]{0}', space=vmem, size = 0x8000, scoped, tag = 'input window, operand 2']
    #allocation5 [shape = 'u8[32768]{0}', space=vmem, size = 0x8000, scoped, tag = 'output window, operand 0']
    #allocation6 [shape = 'u8[8192]{0}', space=vmem, size = 0x2000, scoped, tag = 'output window, operand 1']
    #allocation7 [shape = 's32[2]{0}', space=sflag, size = 0x8, scoped, tag = 'scoped memory for multihead_attention_forward.4']
    %10 = vsyncpa [#allocation7], 0
    %s11 = scalar_lea.sflag [#allocation7], 1
    %12 = vsyncpa %s11, 0
    loop: start=0, step=1, limit=4
    $region2: #{multihead_attention_forward.4} parent=1 // loop_pre_header
      _
    $region3: #{multihead_attention_forward.4} parent=1 // loop_header
      %s14 = sphi 0, %s18
      %p15 = scmp.ge.s32.totalorder %s14, 4
      %s24 = sphi 0, %s26
      %s27 = sphi 0, %s24
      %s28 = sphi 0, %s27
      %s44 = sphi 0, %s28
      %s50 = sphi 0, %s52
      %s53 = sphi 0, %s50
      %s54 = sphi 0, %s53
      %s70 = sphi 0, %s54
      %s76 = sphi 0, %s78
      %s79 = sphi 0, %s76
      %s80 = sphi 0, %s79
      %s96 = sphi 0, %s80
      %s102 = sphi 0, %s104
      %s105 = sphi 0, %s102
      %s106 = sphi 0, %s105
      %s122 = sphi 0, %s106
      %s128 = sphi 0, %s130
      %s131 = sphi 0, %s128
      %s132 = sphi 0, %s131
      %s148 = sphi 0, %s132
    $region4: #{multihead_attention_forward.4} parent=1 // loop_header_branch
      %17 = sbr.rel (%p15) target = $region8
    $region5: #{multihead_attention_forward.4} parent=1 // loop_body
      %s19 = ssub.s32 %s14, 1
      %s20 = ssub.s32 %s14, 2
      %s21 = sadd.s32 %s14, 1
      %s22 = ssub.s32 %s14, %s21
      %p23 = scmp.eq.s32.totalorder %s22, 0
      %s25 = sadd.s32 %s24, 1
      %s26 = scalar_select %p23, %s24, %s25
      %p29 = pneg %p23
      %p30 = scmp.eq.s32.totalorder %s14, 1
      %p31 = por %p29, %p30
      %p32 = scmp.ne.s32.totalorder %s24, %s27
      %p33 = scmp.eq.s32.totalorder %s14, 0
      %p34 = por %p32, %p33
      %p35 = scmp.ne.s32.totalorder %s24, %s27
      %p36 = scmp.eq.s32.totalorder %s19, 1
      %p37 = por %p35, %p36
      %p38 = scmp.ne.s32.totalorder %s27, %s28
      %p39 = scmp.eq.s32.totalorder %s19, 0
      %p40 = por %p38, %p39
      %p41 = scmp.ne.s32.totalorder %s27, %s28
      %p42 = scmp.eq.s32.totalorder %s20, 1
      %p43 = por %p41, %p42
      %p45 = scmp.ne.s32.totalorder %s28, %s44
      %p46 = scmp.eq.s32.totalorder %s20, 0
      %p47 = por %p45, %p46
      %s48 = ssub.s32 %s14, %s21
      %p49 = scmp.eq.s32.totalorder %s48, 0
      %s51 = sadd.s32 %s50, 1
      %s52 = scalar_select %p49, %s50, %s51
      %p55 = pneg %p49
      %p56 = scmp.eq.s32.totalorder %s14, 1
      %p57 = por %p55, %p56
      %p58 = scmp.ne.s32.totalorder %s50, %s53
      %p59 = scmp.eq.s32.totalorder %s14, 0
      %p60 = por %p58, %p59
      %p61 = scmp.ne.s32.totalorder %s50, %s53
      %p62 = scmp.eq.s32.totalorder %s19, 1
      %p63 = por %p61, %p62
      %p64 = scmp.ne.s32.totalorder %s53, %s54
      %p65 = scmp.eq.s32.totalorder %s19, 0
      %p66 = por %p64, %p65
      %p67 = scmp.ne.s32.totalorder %s53, %s54
      %p68 = scmp.eq.s32.totalorder %s20, 1
      %p69 = por %p67, %p68
      %p71 = scmp.ne.s32.totalorder %s54, %s70
      %p72 = scmp.eq.s32.totalorder %s20, 0
      %p73 = por %p71, %p72
      %s74 = ssub.s32 %s14, %s21
      %p75 = scmp.eq.s32.totalorder %s74, 0
      %s77 = sadd.s32 %s76, 1
      %s78 = scalar_select %p75, %s76, %s77
      %p81 = pneg %p75
      %p82 = scmp.eq.s32.totalorder %s14, 1
      %p83 = por %p81, %p82
      %p84 = scmp.ne.s32.totalorder %s76, %s79
      %p85 = scmp.eq.s32.totalorder %s14, 0
      %p86 = por %p84, %p85
      %p87 = scmp.ne.s32.totalorder %s76, %s79
      %p88 = scmp.eq.s32.totalorder %s19, 1
      %p89 = por %p87, %p88
      %p90 = scmp.ne.s32.totalorder %s79, %s80
      %p91 = scmp.eq.s32.totalorder %s19, 0
      %p92 = por %p90, %p91
      %p93 = scmp.ne.s32.totalorder %s79, %s80
      %p94 = scmp.eq.s32.totalorder %s20, 1
      %p95 = por %p93, %p94
      %p97 = scmp.ne.s32.totalorder %s80, %s96
      %p98 = scmp.eq.s32.totalorder %s20, 0
      %p99 = por %p97, %p98
      %s100 = ssub.s32 %s14, %s21
      %p101 = scmp.eq.s32.totalorder %s100, 0
      %s103 = sadd.s32 %s102, 1
      %s104 = scalar_select %p101, %s102, %s103
      %p107 = pneg %p101
      %p108 = scmp.eq.s32.totalorder %s14, 1
      %p109 = por %p107, %p108
      %p110 = scmp.ne.s32.totalorder %s102, %s105
      %p111 = scmp.eq.s32.totalorder %s14, 0
      %p112 = por %p110, %p111
      %p113 = scmp.ne.s32.totalorder %s102, %s105
      %p114 = scmp.eq.s32.totalorder %s19, 1
      %p115 = por %p113, %p114
      %p116 = scmp.ne.s32.totalorder %s105, %s106
      %p117 = scmp.eq.s32.totalorder %s19, 0
      %p118 = por %p116, %p117
      %p119 = scmp.ne.s32.totalorder %s105, %s106
      %p120 = scmp.eq.s32.totalorder %s20, 1
      %p121 = por %p119, %p120
      %p123 = scmp.ne.s32.totalorder %s106, %s122
      %p124 = scmp.eq.s32.totalorder %s20, 0
      %p125 = por %p123, %p124
      %s126 = ssub.s32 %s14, %s21
      %p127 = scmp.eq.s32.totalorder %s126, 0
      %s129 = sadd.s32 %s128, 1
      %s130 = scalar_select %p127, %s128, %s129
      %p133 = pneg %p127
      %p134 = scmp.eq.s32.totalorder %s14, 1
      %p135 = por %p133, %p134
      %p136 = scmp.ne.s32.totalorder %s128, %s131
      %p137 = scmp.eq.s32.totalorder %s14, 0
      %p138 = por %p136, %p137
      %p139 = scmp.ne.s32.totalorder %s128, %s131
      %p140 = scmp.eq.s32.totalorder %s19, 1
      %p141 = por %p139, %p140
      %p142 = scmp.ne.s32.totalorder %s131, %s132
      %p143 = scmp.eq.s32.totalorder %s19, 0
      %p144 = por %p142, %p143
      %p145 = scmp.ne.s32.totalorder %s131, %s132
      %p146 = scmp.eq.s32.totalorder %s20, 1
      %p147 = por %p145, %p146
      %p149 = scmp.ne.s32.totalorder %s132, %s148
      %p150 = scmp.eq.s32.totalorder %s20, 0
      %p151 = por %p149, %p150
      %p152 = scmp.le.s32.totalorder 1, %s14
      %p153 = scmp.lt.s32.totalorder %s14, 3
      %p154 = pnand %p152, %p153
      %p155 = pneg %p154
      // Predicated region
      $region9: #{multihead_attention_forward.4} parent=5 // pred_check
        _
      $region10: #{multihead_attention_forward.4} parent=5 // pred_check_branch
        %157 = sbr.rel (%p154) target = $region12
      $region11: #{multihead_attention_forward.4} parent=5 // pred_region
        %s158 = ssub.s32 %s14, 1
      $region12: #{multihead_attention_forward.4} parent=5 // pred_fallthru
        _
      %p159 = scmp.lt.s32.totalorder %s14, 2
      // Predicated region
      $region13: #{multihead_attention_forward.4} parent=5 // pred_check
        %p160 = pneg %p159
      $region14: #{multihead_attention_forward.4} parent=5 // pred_check_branch
        %162 = sbr.rel (%p160) target = $region16
      $region15: #{multihead_attention_forward.4} parent=5 // pred_region
        // Predicated region
        $region17: #{multihead_attention_forward.4} parent=15 // pred_check
          %p163 = pneg %p34
        $region18: #{multihead_attention_forward.4} parent=15 // pred_check_branch
          %165 = sbr.rel (%p163) target = $region20
        $region19: #{multihead_attention_forward.4} parent=15 // pred_region
          %s166 = sand.u32 %s24, 1
          %s167 = sand.u32 %s24, 1
          %s168 = smul.addr %s167, 32
          %s169 = scalar_lea.vmem [#allocation2], %s168
          %s170 = smul.addr %s14, 4
          %s171 = scalar_lea.vmem %s0, %s170
          // Predicated region
          $region21: #{multihead_attention_forward.4} parent=19 // pred_check
            _
          $region22: #{multihead_attention_forward.4} parent=19 // pred_check_branch
            %173 = sbr.rel (0) target = $region24
          $region23: #{multihead_attention_forward.4} parent=19 // pred_region
            // Predicated region
            $region25: #{multihead_attention_forward.4} parent=23 // pred_check
              _
            $region26: #{multihead_attention_forward.4} parent=23 // pred_check_branch
              %175 = sbr.rel target = $region28
            $region27: #{multihead_attention_forward.4} parent=23 // pred_region
              // Predicated region
              $region40: #{multihead_attention_forward.4} parent=27 // pred_check
                _
              $region41: #{multihead_attention_forward.4} parent=27 // pred_check_branch
                %204 = sbr.rel (0) target = $region43
              $region42: #{multihead_attention_forward.4} parent=27 // pred_region
                loop: start=0, step=1, limit=1
                $region44: #{multihead_attention_forward.4} parent=42 // loop_pre_header
                  _
                $region45: #{multihead_attention_forward.4} parent=42 // loop_header
                  %s206 = sphi 0, %s210
                  %p207 = scmp.ge.s32.totalorder %s206, 1
                  %s211 = sphi %s171, %s171
                  %s212 = sphi %s169, %s169
                $region46: #{multihead_attention_forward.4} parent=42 // loop_header_branch
                  %209 = sbr.rel (%p207) target = $region50
                $region47: #{multihead_attention_forward.4} parent=42 // loop_body
                  _
                $region48: #{multihead_attention_forward.4} parent=42 // loop_footer
                  %s210 = sadd.s32 1, %s206
                $region49: #{multihead_attention_forward.4} parent=42 // loop_footer_branch
                  %205 = sbr.rel target = $region45
                $region50: #{multihead_attention_forward.4} parent=42 // loop_exit
                  _
                loop: start=0, step=1, limit=1
                $region51: #{multihead_attention_forward.4} parent=42 // loop_pre_header
                  _
                $region52: #{multihead_attention_forward.4} parent=42 // loop_header
                  %s215 = sphi 0, %s219
                  %p216 = scmp.ge.s32.totalorder %s215, 1
                  %s220 = sphi %s171, %s171
                  %s221 = sphi %s169, %s169
                $region53: #{multihead_attention_forward.4} parent=42 // loop_header_branch
                  %218 = sbr.rel (%p216) target = $region57
                $region54: #{multihead_attention_forward.4} parent=42 // loop_body
                  %v222 = vld [vmem:[%s220] sm:$0xf]
                  %223 = vst [vmem:[%s221] sm:$0xf] %v222
                  %v224 = vld [vmem:[%s220 + $0x8] sm:$0xf]
                  %225 = vst [vmem:[%s221 + $0x4] sm:$0xf] %v224
                  %v226 = vld [vmem:[%s220 + $0x10] sm:$0xf]
                  %227 = vst [vmem:[%s221 + $0x8] sm:$0xf] %v226
                  %v228 = vld [vmem:[%s220 + $0x18] sm:$0xf]
                  %229 = vst [vmem:[%s221 + $0xc] sm:$0xf] %v228
                  %v230 = vld [vmem:[%s220 + $0x20] sm:$0xf]
                  %231 = vst [vmem:[%s221 + $0x10] sm:$0xf] %v230
                  %v232 = vld [vmem:[%s220 + $0x28] sm:$0xf]
                  %233 = vst [vmem:[%s221 + $0x14] sm:$0xf] %v232
                  %v234 = vld [vmem:[%s220 + $0x30] sm:$0xf]
                  %235 = vst [vmem:[%s221 + $0x18] sm:$0xf] %v234
                  %v236 = vld [vmem:[%s220 + $0x38] sm:$0xf]
                  %237 = vst [vmem:[%s221 + $0x1c] sm:$0xf] %v236
                $region55: #{multihead_attention_forward.4} parent=42 // loop_footer
                  %s219 = sadd.s32 1, %s215
                $region56: #{multihead_attention_forward.4} parent=42 // loop_footer_branch
                  %214 = sbr.rel target = $region52
                $region57: #{multihead_attention_forward.4} parent=42 // loop_exit
                  _
              $region43: #{multihead_attention_forward.4} parent=27 // pred_fallthru
                _
            $region28: #{multihead_attention_forward.4} parent=23 // pred_fallthru
              _
            // Predicated region
            $region29: #{multihead_attention_forward.4} parent=23 // pred_check
              _
            $region30: #{multihead_attention_forward.4} parent=23 // pred_check_branch
              %177 = sbr.rel (0) target = $region32
            $region31: #{multihead_attention_forward.4} parent=23 // pred_region
              loop: start=0, step=1, limit=1
              $region33: #{multihead_attention_forward.4} parent=31 // loop_pre_header
                _
              $region34: #{multihead_attention_forward.4} parent=31 // loop_header
                %s180 = sphi 0, %s184
                %p181 = scmp.ge.s32.totalorder %s180, 1
                %s185 = sphi %s171, %s171
                %s186 = sphi %s169, %s169
              $region35: #{multihead_attention_forward.4} parent=31 // loop_header_branch
                %183 = sbr.rel (%p181) target = $region39
              $region36: #{multihead_attention_forward.4} parent=31 // loop_body
                %v187 = vld [vmem:[%s185] sm:$0xf]
                %188 = vst [vmem:[%s186] sm:$0xf] %v187
                %v189 = vld [vmem:[%s185 + $0x8] sm:$0xf]
                %190 = vst [vmem:[%s186 + $0x4] sm:$0xf] %v189
                %v191 = vld [vmem:[%s185 + $0x10] sm:$0xf]
                %192 = vst [vmem:[%s186 + $0x8] sm:$0xf] %v191
                %v193 = vld [vmem:[%s185 + $0x18] sm:$0xf]
                %194 = vst [vmem:[%s186 + $0xc] sm:$0xf] %v193
                %v195 = vld [vmem:[%s185 + $0x20] sm:$0xf]
                %196 = vst [vmem:[%s186 + $0x10] sm:$0xf] %v195
                %v197 = vld [vmem:[%s185 + $0x28] sm:$0xf]
                %198 = vst [vmem:[%s186 + $0x14] sm:$0xf] %v197
                %v199 = vld [vmem:[%s185 + $0x30] sm:$0xf]
                %200 = vst [vmem:[%s186 + $0x18] sm:$0xf] %v199
                %v201 = vld [vmem:[%s185 + $0x38] sm:$0xf]
                %202 = vst [vmem:[%s186 + $0x1c] sm:$0xf] %v201
              $region37: #{multihead_attention_forward.4} parent=31 // loop_footer
                %s184 = sadd.s32 1, %s180
              $region38: #{multihead_attention_forward.4} parent=31 // loop_footer_branch
                %179 = sbr.rel target = $region34
              $region39: #{multihead_attention_forward.4} parent=31 // loop_exit
                _
            $region32: #{multihead_attention_forward.4} parent=23 // pred_fallthru
              _
          $region24: #{multihead_attention_forward.4} parent=19 // pred_fallthru
            _
          %238 = vnop
        $region20: #{multihead_attention_forward.4} parent=15 // pred_fallthru
          _
        // Predicated region
        $region58: #{multihead_attention_forward.4} parent=15 // pred_check
          %p239 = pneg %p60
        $region59: #{multihead_attention_forward.4} parent=15 // pred_check_branch
          %241 = sbr.rel (%p239) target = $region61
        $region60: #{multihead_attention_forward.4} parent=15 // pred_region
          %s242 = sand.u32 %s50, 1
          %s243 = sand.u32 %s50, 1
          %s244 = smul.addr %s243, 32
          %s245 = scalar_lea.vmem [#allocation3], %s244
          %s246 = sadd.s32 %s14, 16
          %s247 = smul.addr %s246, 4
          %s248 = scalar_lea.vmem %s1, %s247
          // Predicated region
          $region62: #{multihead_attention_forward.4} parent=60 // pred_check
            _
          $region63: #{multihead_attention_forward.4} parent=60 // pred_check_branch
            %250 = sbr.rel (0) target = $region65
          $region64: #{multihead_attention_forward.4} parent=60 // pred_region
            // Predicated region
            $region66: #{multihead_attention_forward.4} parent=64 // pred_check
              _
            $region67: #{multihead_attention_forward.4} parent=64 // pred_check_branch
              %252 = sbr.rel target = $region69
            $region68: #{multihead_attention_forward.4} parent=64 // pred_region
              // Predicated region
              $region81: #{multihead_attention_forward.4} parent=68 // pred_check
                _
              $region82: #{multihead_attention_forward.4} parent=68 // pred_check_branch
                %281 = sbr.rel (0) target = $region84
              $region83: #{multihead_attention_forward.4} parent=68 // pred_region
                loop: start=0, step=1, limit=1
                $region85: #{multihead_attention_forward.4} parent=83 // loop_pre_header
                  _
                $region86: #{multihead_attention_forward.4} parent=83 // loop_header
                  %s283 = sphi 0, %s287
                  %p284 = scmp.ge.s32.totalorder %s283, 1
                  %s288 = sphi %s248, %s248
                  %s289 = sphi %s245, %s245
                $region87: #{multihead_attention_forward.4} parent=83 // loop_header_branch
                  %286 = sbr.rel (%p284) target = $region91
                $region88: #{multihead_attention_forward.4} parent=83 // loop_body
                  _
                $region89: #{multihead_attention_forward.4} parent=83 // loop_footer
                  %s287 = sadd.s32 1, %s283
                $region90: #{multihead_attention_forward.4} parent=83 // loop_footer_branch
                  %282 = sbr.rel target = $region86
                $region91: #{multihead_attention_forward.4} parent=83 // loop_exit
                  _
                loop: start=0, step=1, limit=1
                $region92: #{multihead_attention_forward.4} parent=83 // loop_pre_header
                  _
                $region93: #{multihead_attention_forward.4} parent=83 // loop_header
                  %s292 = sphi 0, %s296
                  %p293 = scmp.ge.s32.totalorder %s292, 1
                  %s297 = sphi %s248, %s248
                  %s298 = sphi %s245, %s245
                $region94: #{multihead_attention_forward.4} parent=83 // loop_header_branch
                  %295 = sbr.rel (%p293) target = $region98
                $region95: #{multihead_attention_forward.4} parent=83 // loop_body
                  %v299 = vld [vmem:[%s297] sm:$0xf]
                  %300 = vst [vmem:[%s298] sm:$0xf] %v299
                  %v301 = vld [vmem:[%s297 + $0x8] sm:$0xf]
                  %302 = vst [vmem:[%s298 + $0x4] sm:$0xf] %v301
                  %v303 = vld [vmem:[%s297 + $0x10] sm:$0xf]
                  %304 = vst [vmem:[%s298 + $0x8] sm:$0xf] %v303
                  %v305 = vld [vmem:[%s297 + $0x18] sm:$0xf]
                  %306 = vst [vmem:[%s298 + $0xc] sm:$0xf] %v305
                  %v307 = vld [vmem:[%s297 + $0x20] sm:$0xf]
                  %308 = vst [vmem:[%s298 + $0x10] sm:$0xf] %v307
                  %v309 = vld [vmem:[%s297 + $0x28] sm:$0xf]
                  %310 = vst [vmem:[%s298 + $0x14] sm:$0xf] %v309
                  %v311 = vld [vmem:[%s297 + $0x30] sm:$0xf]
                  %312 = vst [vmem:[%s298 + $0x18] sm:$0xf] %v311
                  %v313 = vld [vmem:[%s297 + $0x38] sm:$0xf]
                  %314 = vst [vmem:[%s298 + $0x1c] sm:$0xf] %v313
                $region96: #{multihead_attention_forward.4} parent=83 // loop_footer
                  %s296 = sadd.s32 1, %s292
                $region97: #{multihead_attention_forward.4} parent=83 // loop_footer_branch
                  %291 = sbr.rel target = $region93
                $region98: #{multihead_attention_forward.4} parent=83 // loop_exit
                  _
              $region84: #{multihead_attention_forward.4} parent=68 // pred_fallthru
                _
            $region69: #{multihead_attention_forward.4} parent=64 // pred_fallthru
              _
            // Predicated region
            $region70: #{multihead_attention_forward.4} parent=64 // pred_check
              _
            $region71: #{multihead_attention_forward.4} parent=64 // pred_check_branch
              %254 = sbr.rel (0) target = $region73
            $region72: #{multihead_attention_forward.4} parent=64 // pred_region
              loop: start=0, step=1, limit=1
              $region74: #{multihead_attention_forward.4} parent=72 // loop_pre_header
                _
              $region75: #{multihead_attention_forward.4} parent=72 // loop_header
                %s257 = sphi 0, %s261
                %p258 = scmp.ge.s32.totalorder %s257, 1
                %s262 = sphi %s248, %s248
                %s263 = sphi %s245, %s245
              $region76: #{multihead_attention_forward.4} parent=72 // loop_header_branch
                %260 = sbr.rel (%p258) target = $region80
              $region77: #{multihead_attention_forward.4} parent=72 // loop_body
                %v264 = vld [vmem:[%s262] sm:$0xf]
                %265 = vst [vmem:[%s263] sm:$0xf] %v264
                %v266 = vld [vmem:[%s262 + $0x8] sm:$0xf]
                %267 = vst [vmem:[%s263 + $0x4] sm:$0xf] %v266
                %v268 = vld [vmem:[%s262 + $0x10] sm:$0xf]
                %269 = vst [vmem:[%s263 + $0x8] sm:$0xf] %v268
                %v270 = vld [vmem:[%s262 + $0x18] sm:$0xf]
                %271 = vst [vmem:[%s263 + $0xc] sm:$0xf] %v270
                %v272 = vld [vmem:[%s262 + $0x20] sm:$0xf]
                %273 = vst [vmem:[%s263 + $0x10] sm:$0xf] %v272
                %v274 = vld [vmem:[%s262 + $0x28] sm:$0xf]
                %275 = vst [vmem:[%s263 + $0x14] sm:$0xf] %v274
                %v276 = vld [vmem:[%s262 + $0x30] sm:$0xf]
                %277 = vst [vmem:[%s263 + $0x18] sm:$0xf] %v276
                %v278 = vld [vmem:[%s262 + $0x38] sm:$0xf]
                %279 = vst [vmem:[%s263 + $0x1c] sm:$0xf] %v278
              $region78: #{multihead_attention_forward.4} parent=72 // loop_footer
                %s261 = sadd.s32 1, %s257
              $region79: #{multihead_attention_forward.4} parent=72 // loop_footer_branch
                %256 = sbr.rel target = $region75
              $region80: #{multihead_attention_forward.4} parent=72 // loop_exit
                _
            $region73: #{multihead_attention_forward.4} parent=64 // pred_fallthru
              _
          $region65: #{multihead_attention_forward.4} parent=60 // pred_fallthru
            _
          %315 = vnop
        $region61: #{multihead_attention_forward.4} parent=15 // pred_fallthru
          _
        // Predicated region
        $region99: #{multihead_attention_forward.4} parent=15 // pred_check
          %p316 = pneg %p86
        $region100: #{multihead_attention_forward.4} parent=15 // pred_check_branch
          %318 = sbr.rel (%p316) target = $region102
        $region101: #{multihead_attention_forward.4} parent=15 // pred_region
          %s319 = sand.u32 %s76, 1
          %s320 = sand.u32 %s76, 1
          %s321 = smul.addr %s320, 32
          %s322 = scalar_lea.vmem [#allocation4], %s321
          %s323 = sadd.s32 %s14, 32
          %s324 = smul.addr %s323, 4
          %s325 = scalar_lea.vmem %s2, %s324
          // Predicated region
          $region103: #{multihead_attention_forward.4} parent=101 // pred_check
            _
          $region104: #{multihead_attention_forward.4} parent=101 // pred_check_branch
            %327 = sbr.rel (0) target = $region106
          $region105: #{multihead_attention_forward.4} parent=101 // pred_region
            // Predicated region
            $region107: #{multihead_attention_forward.4} parent=105 // pred_check
              _
            $region108: #{multihead_attention_forward.4} parent=105 // pred_check_branch
              %329 = sbr.rel target = $region110
            $region109: #{multihead_attention_forward.4} parent=105 // pred_region
              // Predicated region
              $region122: #{multihead_attention_forward.4} parent=109 // pred_check
                _
              $region123: #{multihead_attention_forward.4} parent=109 // pred_check_branch
                %358 = sbr.rel (0) target = $region125
              $region124: #{multihead_attention_forward.4} parent=109 // pred_region
                loop: start=0, step=1, limit=1
                $region126: #{multihead_attention_forward.4} parent=124 // loop_pre_header
                  _
                $region127: #{multihead_attention_forward.4} parent=124 // loop_header
                  %s360 = sphi 0, %s364
                  %p361 = scmp.ge.s32.totalorder %s360, 1
                  %s365 = sphi %s325, %s325
                  %s366 = sphi %s322, %s322
                $region128: #{multihead_attention_forward.4} parent=124 // loop_header_branch
                  %363 = sbr.rel (%p361) target = $region132
                $region129: #{multihead_attention_forward.4} parent=124 // loop_body
                  _
                $region130: #{multihead_attention_forward.4} parent=124 // loop_footer
                  %s364 = sadd.s32 1, %s360
                $region131: #{multihead_attention_forward.4} parent=124 // loop_footer_branch
                  %359 = sbr.rel target = $region127
                $region132: #{multihead_attention_forward.4} parent=124 // loop_exit
                  _
                loop: start=0, step=1, limit=1
                $region133: #{multihead_attention_forward.4} parent=124 // loop_pre_header
                  _
                $region134: #{multihead_attention_forward.4} parent=124 // loop_header
                  %s369 = sphi 0, %s373
                  %p370 = scmp.ge.s32.totalorder %s369, 1
                  %s374 = sphi %s325, %s325
                  %s375 = sphi %s322, %s322
                $region135: #{multihead_attention_forward.4} parent=124 // loop_header_branch
                  %372 = sbr.rel (%p370) target = $region139
                $region136: #{multihead_attention_forward.4} parent=124 // loop_body
                  %v376 = vld [vmem:[%s374] sm:$0xf]
                  %377 = vst [vmem:[%s375] sm:$0xf] %v376
                  %v378 = vld [vmem:[%s374 + $0x8] sm:$0xf]
                  %379 = vst [vmem:[%s375 + $0x4] sm:$0xf] %v378
                  %v380 = vld [vmem:[%s374 + $0x10] sm:$0xf]
                  %381 = vst [vmem:[%s375 + $0x8] sm:$0xf] %v380
                  %v382 = vld [vmem:[%s374 + $0x18] sm:$0xf]
                  %383 = vst [vmem:[%s375 + $0xc] sm:$0xf] %v382
                  %v384 = vld [vmem:[%s374 + $0x20] sm:$0xf]
                  %385 = vst [vmem:[%s375 + $0x10] sm:$0xf] %v384
                  %v386 = vld [vmem:[%s374 + $0x28] sm:$0xf]
                  %387 = vst [vmem:[%s375 + $0x14] sm:$0xf] %v386
                  %v388 = vld [vmem:[%s374 + $0x30] sm:$0xf]
                  %389 = vst [vmem:[%s375 + $0x18] sm:$0xf] %v388
                  %v390 = vld [vmem:[%s374 + $0x38] sm:$0xf]
                  %391 = vst [vmem:[%s375 + $0x1c] sm:$0xf] %v390
                $region137: #{multihead_attention_forward.4} parent=124 // loop_footer
                  %s373 = sadd.s32 1, %s369
                $region138: #{multihead_attention_forward.4} parent=124 // loop_footer_branch
                  %368 = sbr.rel target = $region134
                $region139: #{multihead_attention_forward.4} parent=124 // loop_exit
                  _
              $region125: #{multihead_attention_forward.4} parent=109 // pred_fallthru
                _
            $region110: #{multihead_attention_forward.4} parent=105 // pred_fallthru
              _
            // Predicated region
            $region111: #{multihead_attention_forward.4} parent=105 // pred_check
              _
            $region112: #{multihead_attention_forward.4} parent=105 // pred_check_branch
              %331 = sbr.rel (0) target = $region114
            $region113: #{multihead_attention_forward.4} parent=105 // pred_region
              loop: start=0, step=1, limit=1
              $region115: #{multihead_attention_forward.4} parent=113 // loop_pre_header
                _
              $region116: #{multihead_attention_forward.4} parent=113 // loop_header
                %s334 = sphi 0, %s338
                %p335 = scmp.ge.s32.totalorder %s334, 1
                %s339 = sphi %s325, %s325
                %s340 = sphi %s322, %s322
              $region117: #{multihead_attention_forward.4} parent=113 // loop_header_branch
                %337 = sbr.rel (%p335) target = $region121
              $region118: #{multihead_attention_forward.4} parent=113 // loop_body
                %v341 = vld [vmem:[%s339] sm:$0xf]
                %342 = vst [vmem:[%s340] sm:$0xf] %v341
                %v343 = vld [vmem:[%s339 + $0x8] sm:$0xf]
                %344 = vst [vmem:[%s340 + $0x4] sm:$0xf] %v343
                %v345 = vld [vmem:[%s339 + $0x10] sm:$0xf]
                %346 = vst [vmem:[%s340 + $0x8] sm:$0xf] %v345
                %v347 = vld [vmem:[%s339 + $0x18] sm:$0xf]
                %348 = vst [vmem:[%s340 + $0xc] sm:$0xf] %v347
                %v349 = vld [vmem:[%s339 + $0x20] sm:$0xf]
                %350 = vst [vmem:[%s340 + $0x10] sm:$0xf] %v349
                %v351 = vld [vmem:[%s339 + $0x28] sm:$0xf]
                %352 = vst [vmem:[%s340 + $0x14] sm:$0xf] %v351
                %v353 = vld [vmem:[%s339 + $0x30] sm:$0xf]
                %354 = vst [vmem:[%s340 + $0x18] sm:$0xf] %v353
                %v355 = vld [vmem:[%s339 + $0x38] sm:$0xf]
                %356 = vst [vmem:[%s340 + $0x1c] sm:$0xf] %v355
              $region119: #{multihead_attention_forward.4} parent=113 // loop_footer
                %s338 = sadd.s32 1, %s334
              $region120: #{multihead_attention_forward.4} parent=113 // loop_footer_branch
                %333 = sbr.rel target = $region116
              $region121: #{multihead_attention_forward.4} parent=113 // loop_exit
                _
            $region114: #{multihead_attention_forward.4} parent=105 // pred_fallthru
              _
          $region106: #{multihead_attention_forward.4} parent=101 // pred_fallthru
            _
          %392 = vnop
        $region102: #{multihead_attention_forward.4} parent=15 // pred_fallthru
          _
      $region16: #{multihead_attention_forward.4} parent=5 // pred_fallthru
        _
      %p393 = scmp.le.s32.totalorder 1, %s14
      %p394 = scmp.lt.s32.totalorder %s14, 3
      %p395 = pnand %p393, %p394
      %p396 = pneg %p395
      // Predicated region
      $region140: #{multihead_attention_forward.4} parent=5 // pred_check
        _
      $region141: #{multihead_attention_forward.4} parent=5 // pred_check_branch
        %398 = sbr.rel (%p395) target = $region143
      $region142: #{multihead_attention_forward.4} parent=5 // pred_region
        %s399 = ssub.s32 %s14, 1
        %s400 = sand.u32 %s27, 1
        %s401 = sand.u32 %s27, 1
        %s402 = smul.addr %s401, 32
        %s403 = scalar_lea.vmem [#allocation2], %s402
        // Predicated region
        $region144: #{multihead_attention_forward.4} parent=142 // pred_check
          %p404 = pneg %p40
        $region145: #{multihead_attention_forward.4} parent=142 // pred_check_branch
          %406 = sbr.rel (%p404) target = $region147
        $region146: #{multihead_attention_forward.4} parent=142 // pred_region
          _
        $region147: #{multihead_attention_forward.4} parent=142 // pred_fallthru
          _
        %s407 = sand.u32 %s53, 1
        %s408 = sand.u32 %s53, 1
        %s409 = smul.addr %s408, 32
        %s410 = scalar_lea.vmem [#allocation3], %s409
        // Predicated region
        $region148: #{multihead_attention_forward.4} parent=142 // pred_check
          %p411 = pneg %p66
        $region149: #{multihead_attention_forward.4} parent=142 // pred_check_branch
          %413 = sbr.rel (%p411) target = $region151
        $region150: #{multihead_attention_forward.4} parent=142 // pred_region
          _
        $region151: #{multihead_attention_forward.4} parent=142 // pred_fallthru
          _
        %s414 = sand.u32 %s79, 1
        %s415 = sand.u32 %s79, 1
        %s416 = smul.addr %s415, 32
        %s417 = scalar_lea.vmem [#allocation4], %s416
        // Predicated region
        $region152: #{multihead_attention_forward.4} parent=142 // pred_check
          %p418 = pneg %p92
        $region153: #{multihead_attention_forward.4} parent=142 // pred_check_branch
          %420 = sbr.rel (%p418) target = $region155
        $region154: #{multihead_attention_forward.4} parent=142 // pred_region
          _
        $region155: #{multihead_attention_forward.4} parent=142 // pred_fallthru
          _
        %s421 = sand.u32 %s27, 1
        %s422 = sand.u32 %s27, 1
        %s423 = smul.addr %s422, 32
        %s424 = scalar_lea.vmem [#allocation2], %s423
        %p425 = pneg %p40
        %p426 = pneg %p37
        %s427 = sand.u32 %s53, 1
        %s428 = sand.u32 %s53, 1
        %s429 = smul.addr %s428, 32
        %s430 = scalar_lea.vmem [#allocation3], %s429
        %p431 = pneg %p66
        %p432 = pneg %p63
        %s433 = sand.u32 %s79, 1
        %s434 = sand.u32 %s79, 1
        %s435 = smul.addr %s434, 32
        %s436 = scalar_lea.vmem [#allocation4], %s435
        %p437 = pneg %p92
        %p438 = pneg %p89
        %p439 = pneg %p118
        %p440 = pneg %p115
        %s441 = sand.u32 %s105, 1
        %s442 = sand.u32 %s105, 1
        %s443 = smul.addr %s442, 32
        %s444 = scalar_lea.vmem [#allocation5], %s443
        %p445 = pneg %p144
        %p446 = pneg %p141
        %s447 = sand.u32 %s131, 1
        %s448 = scalar_lea.sflag [#allocation7], %s447
        %s449 = sand.u32 %s131, 1
        %s450 = smul.addr %s449, 8
        %s451 = scalar_lea.vmem [#allocation6], %s450
        %v452 = vld [vmem:[%s403] sm:$0xf]
        %v453 = vld [vmem:[%s403 + $0x4] sm:$0xf]
        %v454 = vld [vmem:[%s403 + $0x8] sm:$0xf]
        %v455 = vld [vmem:[%s403 + $0xc] sm:$0xf]
        %v456 = vld [vmem:[%s403 + $0x10] sm:$0xf]
        %v457 = vld [vmem:[%s403 + $0x14] sm:$0xf]
        %v458 = vld [vmem:[%s403 + $0x18] sm:$0xf]
        %v459 = vld [vmem:[%s403 + $0x1c] sm:$0xf]
        %v460 = vld [vmem:[%s410] sm:$0xf]
        %v461 = vld [vmem:[%s410 + $0x4] sm:$0xf]
        %v462 = vld [vmem:[%s410 + $0x8] sm:$0xf]
        %v463 = vld [vmem:[%s410 + $0xc] sm:$0xf]
        %v464 = vld [vmem:[%s410 + $0x10] sm:$0xf]
        %v465 = vld [vmem:[%s410 + $0x14] sm:$0xf]
        %v466 = vld [vmem:[%s410 + $0x18] sm:$0xf]
        %v467 = vld [vmem:[%s410 + $0x1c] sm:$0xf]
        %v468 = vld [vmem:[%s417] sm:$0xf]
        %v469 = vld [vmem:[%s417 + $0x4] sm:$0xf]
        %v470 = vld [vmem:[%s417 + $0x8] sm:$0xf]
        %v471 = vld [vmem:[%s417 + $0xc] sm:$0xf]
        %v472 = vld [vmem:[%s417 + $0x10] sm:$0xf]
        %v473 = vld [vmem:[%s417 + $0x14] sm:$0xf]
        %v474 = vld [vmem:[%s417 + $0x18] sm:$0xf]
        %v475 = vld [vmem:[%s417 + $0x1c] sm:$0xf]
        %v476 = vcombine.low %v452, %v454
        %v478 = vunpack.c.l.s4 1983009808
        %v479 = vunpack.c.0.s8 %v478
        %v480 = vlaneseq
        %v481 = vshrl.u32 %v480, 7
        %v482 = vsub.s32 %v479, %v481
        %v483 = vrot.slane %v476, %v482
        %v484 = vcombine.low %v453, %v455
        %v486 = vunpack.c.l.s4 1983009808
        %v487 = vunpack.c.0.s8 %v486
        %v488 = vlaneseq
        %v489 = vshrl.u32 %v488, 7
        %v490 = vsub.s32 %v487, %v489
        %v491 = vrot.slane %v484, %v490
        %v492 = vcombine.low %v456, %v458
        %v494 = vunpack.c.l.s4 1983009808
        %v495 = vunpack.c.0.s8 %v494
        %v496 = vlaneseq
        %v497 = vshrl.u32 %v496, 7
        %v498 = vsub.s32 %v495, %v497
        %v499 = vrot.slane %v492, %v498
        %v500 = vcombine.low %v457, %v459
        %v502 = vunpack.c.l.s4 1983009808
        %v503 = vunpack.c.0.s8 %v502
        %v504 = vlaneseq
        %v505 = vshrl.u32 %v504, 7
        %v506 = vsub.s32 %v503, %v505
        %v507 = vrot.slane %v500, %v506
        %v508 = vcombine.low %v483, %v491
        %v509 = vcombine.high %v483, %v491
        %v511 = vunpack.c.l.s4 1934713408
        %v512 = vunpack.c.0.s8 %v511
        %v513 = vlaneseq
        %v514 = vshrl.u32 %v513, 7
        %v515 = vsub.s32 %v512, %v514
        %v516 = vrot.slane %v508, %v515
        %v518 = vunpack.c.l.s4 1934713408
        %v519 = vunpack.c.0.s8 %v518
        %v520 = vlaneseq
        %v521 = vshrl.u32 %v520, 7
        %v522 = vsub.s32 %v519, %v521
        %v523 = vrot.slane %v509, %v522
        %v524 = vcombine.low %v499, %v507
        %v525 = vcombine.high %v499, %v507
        %v527 = vunpack.c.l.s4 1934713408
        %v528 = vunpack.c.0.s8 %v527
        %v529 = vlaneseq
        %v530 = vshrl.u32 %v529, 7
        %v531 = vsub.s32 %v528, %v530
        %v532 = vrot.slane %v524, %v531
        %v534 = vunpack.c.l.s4 1934713408
        %v535 = vunpack.c.0.s8 %v534
        %v536 = vlaneseq
        %v537 = vshrl.u32 %v536, 7
        %v538 = vsub.s32 %v535, %v537
        %v539 = vrot.slane %v525, %v538
        %v540 = vcombine.low %v516, %v532
        %v541 = vcombine.high %v516, %v532
        %v542 = vcombine.low %v523, %v539
        %v543 = vcombine.high %v523, %v539
        %544 = vxpose.xlu0.b32.start [1/16] %v460, 128
        %545 = vxpose.xlu0.b32.cont [2/16] 0.0, 128
        %546 = vxpose.xlu0.b32.cont [3/16] 0.0, 128
        %547 = vxpose.xlu0.b32.cont [4/16] 0.0, 128
        %548 = vxpose.xlu0.b32.cont [5/16] 0.0, 128
        %549 = vxpose.xlu0.b32.cont [6/16] 0.0, 128
        %550 = vxpose.xlu0.b32.cont [7/16] 0.0, 128
        %551 = vxpose.xlu0.b32.cont [8/16] 0.0, 128
        %552 = vxpose.xlu0.b32.cont [9/16] 0.0, 128
        %553 = vxpose.xlu0.b32.cont [10/16] 0.0, 128
        %554 = vxpose.xlu0.b32.cont [11/16] 0.0, 128
        %555 = vxpose.xlu0.b32.cont [12/16] 0.0, 128
        %556 = vxpose.xlu0.b32.cont [13/16] 0.0, 128
        %557 = vxpose.xlu0.b32.cont [14/16] 0.0, 128
        %558 = vxpose.xlu0.b32.cont [15/16] 0.0, 128
        %559 = vxpose.xlu0.b32.end [16/16] 0.0, 128
        %v560 = vpop.trf.xlu0
        %v561 = vpop.trf.xlu0
        %v562 = vpop.trf.xlu0
        %v563 = vpop.trf.xlu0
        %v564 = vpop.trf.xlu0
        %v565 = vpop.trf.xlu0
        %v566 = vpop.trf.xlu0
        %v567 = vpop.trf.xlu0
        %v568 = vpop.trf.xlu0
        %v569 = vpop.trf.xlu0
        %v570 = vpop.trf.xlu0
        %v571 = vpop.trf.xlu0
        %v572 = vpop.trf.xlu0
        %v573 = vpop.trf.xlu0
        %v574 = vpop.trf.xlu0
        %v575 = vpop.trf.xlu0
        %576 = vxpose.xlu0.b32.start [1/16] %v461, 128
        %577 = vxpose.xlu0.b32.cont [2/16] 0.0, 128
        %578 = vxpose.xlu0.b32.cont [3/16] 0.0, 128
        %579 = vxpose.xlu0.b32.cont [4/16] 0.0, 128
        %580 = vxpose.xlu0.b32.cont [5/16] 0.0, 128
        %581 = vxpose.xlu0.b32.cont [6/16] 0.0, 128
        %582 = vxpose.xlu0.b32.cont [7/16] 0.0, 128
        %583 = vxpose.xlu0.b32.cont [8/16] 0.0, 128
        %584 = vxpose.xlu0.b32.cont [9/16] 0.0, 128
        %585 = vxpose.xlu0.b32.cont [10/16] 0.0, 128
        %586 = vxpose.xlu0.b32.cont [11/16] 0.0, 128
        %587 = vxpose.xlu0.b32.cont [12/16] 0.0, 128
        %588 = vxpose.xlu0.b32.cont [13/16] 0.0, 128
        %589 = vxpose.xlu0.b32.cont [14/16] 0.0, 128
        %590 = vxpose.xlu0.b32.cont [15/16] 0.0, 128
        %591 = vxpose.xlu0.b32.end [16/16] 0.0, 128
        %v592 = vpop.trf.xlu0
        %v593 = vpop.trf.xlu0
        %v594 = vpop.trf.xlu0
        %v595 = vpop.trf.xlu0
        %v596 = vpop.trf.xlu0
        %v597 = vpop.trf.xlu0
        %v598 = vpop.trf.xlu0
        %v599 = vpop.trf.xlu0
        %v600 = vpop.trf.xlu0
        %v601 = vpop.trf.xlu0
        %v602 = vpop.trf.xlu0
        %v603 = vpop.trf.xlu0
        %v604 = vpop.trf.xlu0
        %v605 = vpop.trf.xlu0
        %v606 = vpop.trf.xlu0
        %v607 = vpop.trf.xlu0
        %608 = vxpose.xlu0.b32.start [1/16] %v462, 128
        %609 = vxpose.xlu0.b32.cont [2/16] 0.0, 128
        %610 = vxpose.xlu0.b32.cont [3/16] 0.0, 128
        %611 = vxpose.xlu0.b32.cont [4/16] 0.0, 128
        %612 = vxpose.xlu0.b32.cont [5/16] 0.0, 128
        %613 = vxpose.xlu0.b32.cont [6/16] 0.0, 128
        %614 = vxpose.xlu0.b32.cont [7/16] 0.0, 128
        %615 = vxpose.xlu0.b32.cont [8/16] 0.0, 128
        %616 = vxpose.xlu0.b32.cont [9/16] 0.0, 128
        %617 = vxpose.xlu0.b32.cont [10/16] 0.0, 128
        %618 = vxpose.xlu0.b32.cont [11/16] 0.0, 128
        %619 = vxpose.xlu0.b32.cont [12/16] 0.0, 128
        %620 = vxpose.xlu0.b32.cont [13/16] 0.0, 128
        %621 = vxpose.xlu0.b32.cont [14/16] 0.0, 128
        %622 = vxpose.xlu0.b32.cont [15/16] 0.0, 128
        %623 = vxpose.xlu0.b32.end [16/16] 0.0, 128
        %v624 = vpop.trf.xlu0
        %v625 = vpop.trf.xlu0
        %v626 = vpop.trf.xlu0
        %v627 = vpop.trf.xlu0
        %v628 = vpop.trf.xlu0
        %v629 = vpop.trf.xlu0
        %v630 = vpop.trf.xlu0
        %v631 = vpop.trf.xlu0
        %v632 = vpop.trf.xlu0
        %v633 = vpop.trf.xlu0
        %v634 = vpop.trf.xlu0
        %v635 = vpop.trf.xlu0
        %v636 = vpop.trf.xlu0
        %v637 = vpop.trf.xlu0
        %v638 = vpop.trf.xlu0
        %v639 = vpop.trf.xlu0
        %640 = vxpose.xlu0.b32.start [1/16] %v463, 128
        %641 = vxpose.xlu0.b32.cont [2/16] 0.0, 128
        %642 = vxpose.xlu0.b32.cont [3/16] 0.0, 128
        %643 = vxpose.xlu0.b32.cont [4/16] 0.0, 128
        %644 = vxpose.xlu0.b32.cont [5/16] 0.0, 128
        %645 = vxpose.xlu0.b32.cont [6/16] 0.0, 128
        %646 = vxpose.xlu0.b32.cont [7/16] 0.0, 128
        %647 = vxpose.xlu0.b32.cont [8/16] 0.0, 128
        %648 = vxpose.xlu0.b32.cont [9/16] 0.0, 128
        %649 = vxpose.xlu0.b32.cont [10/16] 0.0, 128
        %650 = vxpose.xlu0.b32.cont [11/16] 0.0, 128
        %651 = vxpose.xlu0.b32.cont [12/16] 0.0, 128
        %652 = vxpose.xlu0.b32.cont [13/16] 0.0, 128
        %653 = vxpose.xlu0.b32.cont [14/16] 0.0, 128
        %654 = vxpose.xlu0.b32.cont [15/16] 0.0, 128
        %655 = vxpose.xlu0.b32.end [16/16] 0.0, 128
        %v656 = vpop.trf.xlu0
        %v657 = vpop.trf.xlu0
        %v658 = vpop.trf.xlu0
        %v659 = vpop.trf.xlu0
        %v660 = vpop.trf.xlu0
        %v661 = vpop.trf.xlu0
        %v662 = vpop.trf.xlu0
        %v663 = vpop.trf.xlu0
        %v664 = vpop.trf.xlu0
        %v665 = vpop.trf.xlu0
        %v666 = vpop.trf.xlu0
        %v667 = vpop.trf.xlu0
        %v668 = vpop.trf.xlu0
        %v669 = vpop.trf.xlu0
        %v670 = vpop.trf.xlu0
        %v671 = vpop.trf.xlu0
        %672 = vxpose.xlu0.b32.start [1/16] %v464, 128
        %673 = vxpose.xlu0.b32.cont [2/16] 0.0, 128
        %674 = vxpose.xlu0.b32.cont [3/16] 0.0, 128
        %675 = vxpose.xlu0.b32.cont [4/16] 0.0, 128
        %676 = vxpose.xlu0.b32.cont [5/16] 0.0, 128
        %677 = vxpose.xlu0.b32.cont [6/16] 0.0, 128
        %678 = vxpose.xlu0.b32.cont [7/16] 0.0, 128
        %679 = vxpose.xlu0.b32.cont [8/16] 0.0, 128
        %680 = vxpose.xlu0.b32.cont [9/16] 0.0, 128
        %681 = vxpose.xlu0.b32.cont [10/16] 0.0, 128
        %682 = vxpose.xlu0.b32.cont [11/16] 0.0, 128
        %683 = vxpose.xlu0.b32.cont [12/16] 0.0, 128
        %684 = vxpose.xlu0.b32.cont [13/16] 0.0, 128
        %685 = vxpose.xlu0.b32.cont [14/16] 0.0, 128
        %686 = vxpose.xlu0.b32.cont [15/16] 0.0, 128
        %687 = vxpose.xlu0.b32.end [16/16] 0.0, 128
        %v688 = vpop.trf.xlu0
        %v689 = vpop.trf.xlu0
        %v690 = vpop.trf.xlu0
        %v691 = vpop.trf.xlu0
        %v692 = vpop.trf.xlu0
        %v693 = vpop.trf.xlu0
        %v694 = vpop.trf.xlu0
        %v695 = vpop.trf.xlu0
        %v696 = vpop.trf.xlu0
        %v697 = vpop.trf.xlu0
        %v698 = vpop.trf.xlu0
        %v699 = vpop.trf.xlu0
        %v700 = vpop.trf.xlu0
        %v701 = vpop.trf.xlu0
        %v702 = vpop.trf.xlu0
        %v703 = vpop.trf.xlu0
        %704 = vxpose.xlu0.b32.start [1/16] %v465, 128
        %705 = vxpose.xlu0.b32.cont [2/16] 0.0, 128
        %706 = vxpose.xlu0.b32.cont [3/16] 0.0, 128
        %707 = vxpose.xlu0.b32.cont [4/16] 0.0, 128
        %708 = vxpose.xlu0.b32.cont [5/16] 0.0, 128
        %709 = vxpose.xlu0.b32.cont [6/16] 0.0, 128
        %710 = vxpose.xlu0.b32.cont [7/16] 0.0, 128
        %711 = vxpose.xlu0.b32.cont [8/16] 0.0, 128
        %712 = vxpose.xlu0.b32.cont [9/16] 0.0, 128
        %713 = vxpose.xlu0.b32.cont [10/16] 0.0, 128
        %714 = vxpose.xlu0.b32.cont [11/16] 0.0, 128
        %715 = vxpose.xlu0.b32.cont [12/16] 0.0, 128
        %716 = vxpose.xlu0.b32.cont [13/16] 0.0, 128
        %717 = vxpose.xlu0.b32.cont [14/16] 0.0, 128
        %718 = vxpose.xlu0.b32.cont [15/16] 0.0, 128
        %719 = vxpose.xlu0.b32.end [16/16] 0.0, 128
        %v720 = vpop.trf.xlu0
        %v721 = vpop.trf.xlu0
        %v722 = vpop.trf.xlu0
        %v723 = vpop.trf.xlu0
        %v724 = vpop.trf.xlu0
        %v725 = vpop.trf.xlu0
        %v726 = vpop.trf.xlu0
        %v727 = vpop.trf.xlu0
        %v728 = vpop.trf.xlu0
        %v729 = vpop.trf.xlu0
        %v730 = vpop.trf.xlu0
        %v731 = vpop.trf.xlu0
        %v732 = vpop.trf.xlu0
        %v733 = vpop.trf.xlu0
        %v734 = vpop.trf.xlu0
        %v735 = vpop.trf.xlu0
        %736 = vxpose.xlu0.b32.start [1/16] %v466, 128
        %737 = vxpose.xlu0.b32.cont [2/16] 0.0, 128
        %738 = vxpose.xlu0.b32.cont [3/16] 0.0, 128
        %739 = vxpose.xlu0.b32.cont [4/16] 0.0, 128
        %740 = vxpose.xlu0.b32.cont [5/16] 0.0, 128
        %741 = vxpose.xlu0.b32.cont [6/16] 0.0, 128
        %742 = vxpose.xlu0.b32.cont [7/16] 0.0, 128
        %743 = vxpose.xlu0.b32.cont [8/16] 0.0, 128
        %744 = vxpose.xlu0.b32.cont [9/16] 0.0, 128
        %745 = vxpose.xlu0.b32.cont [10/16] 0.0, 128
        %746 = vxpose.xlu0.b32.cont [11/16] 0.0, 128
        %747 = vxpose.xlu0.b32.cont [12/16] 0.0, 128
        %748 = vxpose.xlu0.b32.cont [13/16] 0.0, 128
        %749 = vxpose.xlu0.b32.cont [14/16] 0.0, 128
        %750 = vxpose.xlu0.b32.cont [15/16] 0.0, 128
        %751 = vxpose.xlu0.b32.end [16/16] 0.0, 128
        %v752 = vpop.trf.xlu0
        %v753 = vpop.trf.xlu0
        %v754 = vpop.trf.xlu0
        %v755 = vpop.trf.xlu0
        %v756 = vpop.trf.xlu0
        %v757 = vpop.trf.xlu0
        %v758 = vpop.trf.xlu0
        %v759 = vpop.trf.xlu0
        %v760 = vpop.trf.xlu0
        %v761 = vpop.trf.xlu0
        %v762 = vpop.trf.xlu0
        %v763 = vpop.trf.xlu0
        %v764 = vpop.trf.xlu0
        %v765 = vpop.trf.xlu0
        %v766 = vpop.trf.xlu0
        %v767 = vpop.trf.xlu0
        %768 = vxpose.xlu0.b32.start [1/16] %v467, 128
        %769 = vxpose.xlu0.b32.cont [2/16] 0.0, 128
        %770 = vxpose.xlu0.b32.cont [3/16] 0.0, 128
        %771 = vxpose.xlu0.b32.cont [4/16] 0.0, 128
        %772 = vxpose.xlu0.b32.cont [5/16] 0.0, 128
        %773 = vxpose.xlu0.b32.cont [6/16] 0.0, 128
        %774 = vxpose.xlu0.b32.cont [7/16] 0.0, 128
        %775 = vxpose.xlu0.b32.cont [8/16] 0.0, 128
        %776 = vxpose.xlu0.b32.cont [9/16] 0.0, 128
        %777 = vxpose.xlu0.b32.cont [10/16] 0.0, 128
        %778 = vxpose.xlu0.b32.cont [11/16] 0.0, 128
        %779 = vxpose.xlu0.b32.cont [12/16] 0.0, 128
        %780 = vxpose.xlu0.b32.cont [13/16] 0.0, 128
        %781 = vxpose.xlu0.b32.cont [14/16] 0.0, 128
        %782 = vxpose.xlu0.b32.cont [15/16] 0.0, 128
        %783 = vxpose.xlu0.b32.end [16/16] 0.0, 128
        %v784 = vpop.trf.xlu0
        %v785 = vpop.trf.xlu0
        %v786 = vpop.trf.xlu0
        %v787 = vpop.trf.xlu0
        %v788 = vpop.trf.xlu0
        %v789 = vpop.trf.xlu0
        %v790 = vpop.trf.xlu0
        %v791 = vpop.trf.xlu0
        %v792 = vpop.trf.xlu0
        %v793 = vpop.trf.xlu0
        %v794 = vpop.trf.xlu0
        %v795 = vpop.trf.xlu0
        %v796 = vpop.trf.xlu0
        %v797 = vpop.trf.xlu0
        %v798 = vpop.trf.xlu0
        %v799 = vpop.trf.xlu0
        %v800 = vcombine.low %v560, %v624
        %v801 = vcombine.high %v560, %v624
        %v803 = vunpack.c.l.s4 1983009808
        %v804 = vunpack.c.0.s8 %v803
        %v805 = vlaneseq
        %v806 = vshrl.u32 %v805, 7
        %v807 = vsub.s32 %v804, %v806
        %v808 = vrot.slane %v800, %v807
        %v810 = vunpack.c.l.s4 1983009808
        %v811 = vunpack.c.0.s8 %v810
        %v812 = vlaneseq
        %v813 = vshrl.u32 %v812, 7
        %v814 = vsub.s32 %v811, %v813
        %v815 = vrot.slane %v801, %v814
        %v816 = vcombine.low %v592, %v656
        %v817 = vcombine.high %v592, %v656
        %v819 = vunpack.c.l.s4 1983009808
        %v820 = vunpack.c.0.s8 %v819
        %v821 = vlaneseq
        %v822 = vshrl.u32 %v821, 7
        %v823 = vsub.s32 %v820, %v822
        %v824 = vrot.slane %v816, %v823
        %v826 = vunpack.c.l.s4 1983009808
        %v827 = vunpack.c.0.s8 %v826
        %v828 = vlaneseq
        %v829 = vshrl.u32 %v828, 7
        %v830 = vsub.s32 %v827, %v829
        %v831 = vrot.slane %v817, %v830
        %v832 = vcombine.low %v688, %v752
        %v833 = vcombine.high %v688, %v752
        %v835 = vunpack.c.l.s4 1983009808
        %v836 = vunpack.c.0.s8 %v835
        %v837 = vlaneseq
        %v838 = vshrl.u32 %v837, 7
        %v839 = vsub.s32 %v836, %v838
        %v840 = vrot.slane %v832, %v839
        %v842 = vunpack.c.l.s4 1983009808
        %v843 = vunpack.c.0.s8 %v842
        %v844 = vlaneseq
        %v845 = vshrl.u32 %v844, 7
        %v846 = vsub.s32 %v843, %v845
        %v847 = vrot.slane %v833, %v846
        %v848 = vcombine.low %v720, %v784
        %v849 = vcombine.high %v720, %v784
        %v851 = vunpack.c.l.s4 1983009808
        %v852 = vunpack.c.0.s8 %v851
        %v853 = vlaneseq
        %v854 = vshrl.u32 %v853, 7
        %v855 = vsub.s32 %v852, %v854
        %v856 = vrot.slane %v848, %v855
        %v858 = vunpack.c.l.s4 1983009808
        %v859 = vunpack.c.0.s8 %v858
        %v860 = vlaneseq
        %v861 = vshrl.u32 %v860, 7
        %v862 = vsub.s32 %v859, %v861
        %v863 = vrot.slane %v849, %v862
        %v864 = vcombine.low %v808, %v824
        %v865 = vcombine.high %v808, %v824
        %v867 = vunpack.c.l.s4 1934713408
        %v868 = vunpack.c.0.s8 %v867
        %v869 = vlaneseq
        %v870 = vshrl.u32 %v869, 7
        %v871 = vsub.s32 %v868, %v870
        %v872 = vrot.slane %v864, %v871
        %v874 = vunpack.c.l.s4 1934713408
        %v875 = vunpack.c.0.s8 %v874
        %v876 = vlaneseq
        %v877 = vshrl.u32 %v876, 7
        %v878 = vsub.s32 %v875, %v877
        %v879 = vrot.slane %v865, %v878
        %v880 = vcombine.low %v815, %v831
        %v881 = vcombine.high %v815, %v831
        %v883 = vunpack.c.l.s4 1934713408
        %v884 = vunpack.c.0.s8 %v883
        %v885 = vlaneseq
        %v886 = vshrl.u32 %v885, 7
        %v887 = vsub.s32 %v884, %v886
        %v888 = vrot.slane %v880, %v887
        %v890 = vunpack.c.l.s4 1934713408
        %v891 = vunpack.c.0.s8 %v890
        %v892 = vlaneseq
        %v893 = vshrl.u32 %v892, 7
        %v894 = vsub.s32 %v891, %v893
        %v895 = vrot.slane %v881, %v894
        %v896 = vcombine.low %v840, %v856
        %v897 = vcombine.high %v840, %v856
        %v899 = vunpack.c.l.s4 1934713408
        %v900 = vunpack.c.0.s8 %v899
        %v901 = vlaneseq
        %v902 = vshrl.u32 %v901, 7
        %v903 = vsub.s32 %v900, %v902
        %v904 = vrot.slane %v896, %v903
        %v906 = vunpack.c.l.s4 1934713408
        %v907 = vunpack.c.0.s8 %v906
        %v908 = vlaneseq
        %v909 = vshrl.u32 %v908, 7
        %v910 = vsub.s32 %v907, %v909
        %v911 = vrot.slane %v897, %v910
        %v912 = vcombine.low %v847, %v863
        %v913 = vcombine.high %v847, %v863
        %v915 = vunpack.c.l.s4 1934713408
        %v916 = vunpack.c.0.s8 %v915
        %v917 = vlaneseq
        %v918 = vshrl.u32 %v917, 7
        %v919 = vsub.s32 %v916, %v918
        %v920 = vrot.slane %v912, %v919
        %v922 = vunpack.c.l.s4 1934713408
        %v923 = vunpack.c.0.s8 %v922
        %v924 = vlaneseq
        %v925 = vshrl.u32 %v924, 7
        %v926 = vsub.s32 %v923, %v925
        %v927 = vrot.slane %v913, %v926
        %v928 = vcombine.low %v872, %v904
        %v929 = vcombine.high %v872, %v904
        %v930 = vcombine.low %v879, %v911
        %v931 = vcombine.high %v879, %v911
        %v932 = vcombine.low %v888, %v920
        %v933 = vcombine.high %v888, %v920
        %v934 = vcombine.low %v895, %v927
        %v935 = vcombine.high %v895, %v927
        %936 = vxpose.xlu0.b32.start [1/16] %v928, 128
        %937 = vxpose.xlu0.b32.cont [2/16] 0.0, 128
        %938 = vxpose.xlu0.b32.cont [3/16] 0.0, 128
        %939 = vxpose.xlu0.b32.cont [4/16] 0.0, 128
        %940 = vxpose.xlu0.b32.cont [5/16] 0.0, 128
        %941 = vxpose.xlu0.b32.cont [6/16] 0.0, 128
        %942 = vxpose.xlu0.b32.cont [7/16] 0.0, 128
        %943 = vxpose.xlu0.b32.cont [8/16] 0.0, 128
        %944 = vxpose.xlu0.b32.cont [9/16] 0.0, 128
        %945 = vxpose.xlu0.b32.cont [10/16] 0.0, 128
        %946 = vxpose.xlu0.b32.cont [11/16] 0.0, 128
        %947 = vxpose.xlu0.b32.cont [12/16] 0.0, 128
        %948 = vxpose.xlu0.b32.cont [13/16] 0.0, 128
        %949 = vxpose.xlu0.b32.cont [14/16] 0.0, 128
        %950 = vxpose.xlu0.b32.cont [15/16] 0.0, 128
        %951 = vxpose.xlu0.b32.end [16/16] 0.0, 128
        %v952 = vpop.trf.xlu0
        %v953 = vpop.trf.xlu0
        %v954 = vpop.trf.xlu0
        %v955 = vpop.trf.xlu0
        %v956 = vpop.trf.xlu0
        %v957 = vpop.trf.xlu0
        %v958 = vpop.trf.xlu0
        %v959 = vpop.trf.xlu0
        %v960 = vpop.trf.xlu0
        %v961 = vpop.trf.xlu0
        %v962 = vpop.trf.xlu0
        %v963 = vpop.trf.xlu0
        %v964 = vpop.trf.xlu0
        %v965 = vpop.trf.xlu0
        %v966 = vpop.trf.xlu0
        %v967 = vpop.trf.xlu0
        %968 = vxpose.xlu0.b32.start [1/16] %v929, 128
        %969 = vxpose.xlu0.b32.cont [2/16] 0.0, 128
        %970 = vxpose.xlu0.b32.cont [3/16] 0.0, 128
        %971 = vxpose.xlu0.b32.cont [4/16] 0.0, 128
        %972 = vxpose.xlu0.b32.cont [5/16] 0.0, 128
        %973 = vxpose.xlu0.b32.cont [6/16] 0.0, 128
        %974 = vxpose.xlu0.b32.cont [7/16] 0.0, 128
        %975 = vxpose.xlu0.b32.cont [8/16] 0.0, 128
        %976 = vxpose.xlu0.b32.cont [9/16] 0.0, 128
        %977 = vxpose.xlu0.b32.cont [10/16] 0.0, 128
        %978 = vxpose.xlu0.b32.cont [11/16] 0.0, 128
        %979 = vxpose.xlu0.b32.cont [12/16] 0.0, 128
        %980 = vxpose.xlu0.b32.cont [13/16] 0.0, 128
        %981 = vxpose.xlu0.b32.cont [14/16] 0.0, 128
        %982 = vxpose.xlu0.b32.cont [15/16] 0.0, 128
        %983 = vxpose.xlu0.b32.end [16/16] 0.0, 128
        %v984 = vpop.trf.xlu0
        %v985 = vpop.trf.xlu0
        %v986 = vpop.trf.xlu0
        %v987 = vpop.trf.xlu0
        %v988 = vpop.trf.xlu0
        %v989 = vpop.trf.xlu0
        %v990 = vpop.trf.xlu0
        %v991 = vpop.trf.xlu0
        %v992 = vpop.trf.xlu0
        %v993 = vpop.trf.xlu0
        %v994 = vpop.trf.xlu0
        %v995 = vpop.trf.xlu0
        %v996 = vpop.trf.xlu0
        %v997 = vpop.trf.xlu0
        %v998 = vpop.trf.xlu0
        %v999 = vpop.trf.xlu0
        %1000 = vxpose.xlu0.b32.start [1/16] %v930, 128
        %1001 = vxpose.xlu0.b32.cont [2/16] 0.0, 128
        %1002 = vxpose.xlu0.b32.cont [3/16] 0.0, 128
        %1003 = vxpose.xlu0.b32.cont [4/16] 0.0, 128
        %1004 = vxpose.xlu0.b32.cont [5/16] 0.0, 128
        %1005 = vxpose.xlu0.b32.cont [6/16] 0.0, 128
        %1006 = vxpose.xlu0.b32.cont [7/16] 0.0, 128
        %1007 = vxpose.xlu0.b32.cont [8/16] 0.0, 128
        %1008 = vxpose.xlu0.b32.cont [9/16] 0.0, 128
        %1009 = vxpose.xlu0.b32.cont [10/16] 0.0, 128
        %1010 = vxpose.xlu0.b32.cont [11/16] 0.0, 128
        %1011 = vxpose.xlu0.b32.cont [12/16] 0.0, 128
        %1012 = vxpose.xlu0.b32.cont [13/16] 0.0, 128
        %1013 = vxpose.xlu0.b32.cont [14/16] 0.0, 128
        %1014 = vxpose.xlu0.b32.cont [15/16] 0.0, 128
        %1015 = vxpose.xlu0.b32.end [16/16] 0.0, 128
        %v1016 = vpop.trf.xlu0
        %v1017 = vpop.trf.xlu0
        %v1018 = vpop.trf.xlu0
        %v1019 = vpop.trf.xlu0
        %v1020 = vpop.trf.xlu0
        %v1021 = vpop.trf.xlu0
        %v1022 = vpop.trf.xlu0
        %v1023 = vpop.trf.xlu0
        %v1024 = vpop.trf.xlu0
        %v1025 = vpop.trf.xlu0
        %v1026 = vpop.trf.xlu0
        %v1027 = vpop.trf.xlu0
        %v1028 = vpop.trf.xlu0
        %v1029 = vpop.trf.xlu0
        %v1030 = vpop.trf.xlu0
        %v1031 = vpop.trf.xlu0
        %1032 = vxpose.xlu0.b32.start [1/16] %v931, 128
        %1033 = vxpose.xlu0.b32.cont [2/16] 0.0, 128
        %1034 = vxpose.xlu0.b32.cont [3/16] 0.0, 128
        %1035 = vxpose.xlu0.b32.cont [4/16] 0.0, 128
        %1036 = vxpose.xlu0.b32.cont [5/16] 0.0, 128
        %1037 = vxpose.xlu0.b32.cont [6/16] 0.0, 128
        %1038 = vxpose.xlu0.b32.cont [7/16] 0.0, 128
        %1039 = vxpose.xlu0.b32.cont [8/16] 0.0, 128
        %1040 = vxpose.xlu0.b32.cont [9/16] 0.0, 128
        %1041 = vxpose.xlu0.b32.cont [10/16] 0.0, 128
        %1042 = vxpose.xlu0.b32.cont [11/16] 0.0, 128
        %1043 = vxpose.xlu0.b32.cont [12/16] 0.0, 128
        %1044 = vxpose.xlu0.b32.cont [13/16] 0.0, 128
        %1045 = vxpose.xlu0.b32.cont [14/16] 0.0, 128
        %1046 = vxpose.xlu0.b32.cont [15/16] 0.0, 128
        %1047 = vxpose.xlu0.b32.end [16/16] 0.0, 128
        %v1048 = vpop.trf.xlu0
        %v1049 = vpop.trf.xlu0
        %v1050 = vpop.trf.xlu0
        %v1051 = vpop.trf.xlu0
        %v1052 = vpop.trf.xlu0
        %v1053 = vpop.trf.xlu0
        %v1054 = vpop.trf.xlu0
        %v1055 = vpop.trf.xlu0
        %v1056 = vpop.trf.xlu0
        %v1057 = vpop.trf.xlu0
        %v1058 = vpop.trf.xlu0
        %v1059 = vpop.trf.xlu0
        %v1060 = vpop.trf.xlu0
        %v1061 = vpop.trf.xlu0
        %v1062 = vpop.trf.xlu0
        %v1063 = vpop.trf.xlu0
        %1064 = vxpose.xlu0.b32.start [1/16] %v932, 128
        %1065 = vxpose.xlu0.b32.cont [2/16] 0.0, 128
        %1066 = vxpose.xlu0.b32.cont [3/16] 0.0, 128
        %1067 = vxpose.xlu0.b32.cont [4/16] 0.0, 128
        %1068 = vxpose.xlu0.b32.cont [5/16] 0.0, 128
        %1069 = vxpose.xlu0.b32.cont [6/16] 0.0, 128
        %1070 = vxpose.xlu0.b32.cont [7/16] 0.0, 128
        %1071 = vxpose.xlu0.b32.cont [8/16] 0.0, 128
        %1072 = vxpose.xlu0.b32.cont [9/16] 0.0, 128
        %1073 = vxpose.xlu0.b32.cont [10/16] 0.0, 128
        %1074 = vxpose.xlu0.b32.cont [11/16] 0.0, 128
        %1075 = vxpose.xlu0.b32.cont [12/16] 0.0, 128
        %1076 = vxpose.xlu0.b32.cont [13/16] 0.0, 128
        %1077 = vxpose.xlu0.b32.cont [14/16] 0.0, 128
        %1078 = vxpose.xlu0.b32.cont [15/16] 0.0, 128
        %1079 = vxpose.xlu0.b32.end [16/16] 0.0, 128
        %v1080 = vpop.trf.xlu0
        %v1081 = vpop.trf.xlu0
        %v1082 = vpop.trf.xlu0
        %v1083 = vpop.trf.xlu0
        %v1084 = vpop.trf.xlu0
        %v1085 = vpop.trf.xlu0
        %v1086 = vpop.trf.xlu0
        %v1087 = vpop.trf.xlu0
        %v1088 = vpop.trf.xlu0
        %v1089 = vpop.trf.xlu0
        %v1090 = vpop.trf.xlu0
        %v1091 = vpop.trf.xlu0
        %v1092 = vpop.trf.xlu0
        %v1093 = vpop.trf.xlu0
        %v1094 = vpop.trf.xlu0
        %v1095 = vpop.trf.xlu0
        %1096 = vxpose.xlu0.b32.start [1/16] %v933, 128
        %1097 = vxpose.xlu0.b32.cont [2/16] 0.0, 128
        %1098 = vxpose.xlu0.b32.cont [3/16] 0.0, 128
        %1099 = vxpose.xlu0.b32.cont [4/16] 0.0, 128
        %1100 = vxpose.xlu0.b32.cont [5/16] 0.0, 128
        %1101 = vxpose.xlu0.b32.cont [6/16] 0.0, 128
        %1102 = vxpose.xlu0.b32.cont [7/16] 0.0, 128
        %1103 = vxpose.xlu0.b32.cont [8/16] 0.0, 128
        %1104 = vxpose.xlu0.b32.cont [9/16] 0.0, 128
        %1105 = vxpose.xlu0.b32.cont [10/16] 0.0, 128
        %1106 = vxpose.xlu0.b32.cont [11/16] 0.0, 128
        %1107 = vxpose.xlu0.b32.cont [12/16] 0.0, 128
        %1108 = vxpose.xlu0.b32.cont [13/16] 0.0, 128
        %1109 = vxpose.xlu0.b32.cont [14/16] 0.0, 128
        %1110 = vxpose.xlu0.b32.cont [15/16] 0.0, 128
        %1111 = vxpose.xlu0.b32.end [16/16] 0.0, 128
        %v1112 = vpop.trf.xlu0
        %v1113 = vpop.trf.xlu0
        %v1114 = vpop.trf.xlu0
        %v1115 = vpop.trf.xlu0
        %v1116 = vpop.trf.xlu0
        %v1117 = vpop.trf.xlu0
        %v1118 = vpop.trf.xlu0
        %v1119 = vpop.trf.xlu0
        %v1120 = vpop.trf.xlu0
        %v1121 = vpop.trf.xlu0
        %v1122 = vpop.trf.xlu0
        %v1123 = vpop.trf.xlu0
        %v1124 = vpop.trf.xlu0
        %v1125 = vpop.trf.xlu0
        %v1126 = vpop.trf.xlu0
        %v1127 = vpop.trf.xlu0
        %1128 = vxpose.xlu0.b32.start [1/16] %v934, 128
        %1129 = vxpose.xlu0.b32.cont [2/16] 0.0, 128
        %1130 = vxpose.xlu0.b32.cont [3/16] 0.0, 128
        %1131 = vxpose.xlu0.b32.cont [4/16] 0.0, 128
        %1132 = vxpose.xlu0.b32.cont [5/16] 0.0, 128
        %1133 = vxpose.xlu0.b32.cont [6/16] 0.0, 128
        %1134 = vxpose.xlu0.b32.cont [7/16] 0.0, 128
        %1135 = vxpose.xlu0.b32.cont [8/16] 0.0, 128
        %1136 = vxpose.xlu0.b32.cont [9/16] 0.0, 128
        %1137 = vxpose.xlu0.b32.cont [10/16] 0.0, 128
        %1138 = vxpose.xlu0.b32.cont [11/16] 0.0, 128
        %1139 = vxpose.xlu0.b32.cont [12/16] 0.0, 128
        %1140 = vxpose.xlu0.b32.cont [13/16] 0.0, 128
        %1141 = vxpose.xlu0.b32.cont [14/16] 0.0, 128
        %1142 = vxpose.xlu0.b32.cont [15/16] 0.0, 128
        %1143 = vxpose.xlu0.b32.end [16/16] 0.0, 128
        %v1144 = vpop.trf.xlu0
        %v1145 = vpop.trf.xlu0
        %v1146 = vpop.trf.xlu0
        %v1147 = vpop.trf.xlu0
        %v1148 = vpop.trf.xlu0
        %v1149 = vpop.trf.xlu0
        %v1150 = vpop.trf.xlu0
        %v1151 = vpop.trf.xlu0
        %v1152 = vpop.trf.xlu0
        %v1153 = vpop.trf.xlu0
        %v1154 = vpop.trf.xlu0
        %v1155 = vpop.trf.xlu0
        %v1156 = vpop.trf.xlu0
        %v1157 = vpop.trf.xlu0
        %v1158 = vpop.trf.xlu0
        %v1159 = vpop.trf.xlu0
        %1160 = vxpose.xlu0.b32.start [1/16] %v935, 128
        %1161 = vxpose.xlu0.b32.cont [2/16] 0.0, 128
        %1162 = vxpose.xlu0.b32.cont [3/16] 0.0, 128
        %1163 = vxpose.xlu0.b32.cont [4/16] 0.0, 128
        %1164 = vxpose.xlu0.b32.cont [5/16] 0.0, 128
        %1165 = vxpose.xlu0.b32.cont [6/16] 0.0, 128
        %1166 = vxpose.xlu0.b32.cont [7/16] 0.0, 128
        %1167 = vxpose.xlu0.b32.cont [8/16] 0.0, 128
        %1168 = vxpose.xlu0.b32.cont [9/16] 0.0, 128
        %1169 = vxpose.xlu0.b32.cont [10/16] 0.0, 128
        %1170 = vxpose.xlu0.b32.cont [11/16] 0.0, 128
        %1171 = vxpose.xlu0.b32.cont [12/16] 0.0, 128
        %1172 = vxpose.xlu0.b32.cont [13/16] 0.0, 128
        %1173 = vxpose.xlu0.b32.cont [14/16] 0.0, 128
        %1174 = vxpose.xlu0.b32.cont [15/16] 0.0, 128
        %1175 = vxpose.xlu0.b32.end [16/16] 0.0, 128
        %v1176 = vpop.trf.xlu0
        %v1177 = vpop.trf.xlu0
        %v1178 = vpop.trf.xlu0
        %v1179 = vpop.trf.xlu0
        %v1180 = vpop.trf.xlu0
        %v1181 = vpop.trf.xlu0
        %v1182 = vpop.trf.xlu0
        %v1183 = vpop.trf.xlu0
        %v1184 = vpop.trf.xlu0
        %v1185 = vpop.trf.xlu0
        %v1186 = vpop.trf.xlu0
        %v1187 = vpop.trf.xlu0
        %v1188 = vpop.trf.xlu0
        %v1189 = vpop.trf.xlu0
        %v1190 = vpop.trf.xlu0
        %v1191 = vpop.trf.xlu0
        %v1192 = vcombine.low %v952, %v1016
        %v1194 = vunpack.c.l.s4 1983009808
        %v1195 = vunpack.c.0.s8 %v1194
        %v1196 = vlaneseq
        %v1197 = vshrl.u32 %v1196, 7
        %v1198 = vsub.s32 %v1195, %v1197
        %v1199 = vrot.slane %v1192, %v1198
        %v1200 = vcombine.low %v984, %v1048
        %v1202 = vunpack.c.l.s4 1983009808
        %v1203 = vunpack.c.0.s8 %v1202
        %v1204 = vlaneseq
        %v1205 = vshrl.u32 %v1204, 7
        %v1206 = vsub.s32 %v1203, %v1205
        %v1207 = vrot.slane %v1200, %v1206
        %v1208 = vcombine.low %v1080, %v1144
        %v1210 = vunpack.c.l.s4 1983009808
        %v1211 = vunpack.c.0.s8 %v1210
        %v1212 = vlaneseq
        %v1213 = vshrl.u32 %v1212, 7
        %v1214 = vsub.s32 %v1211, %v1213
        %v1215 = vrot.slane %v1208, %v1214
        %v1216 = vcombine.low %v1112, %v1176
        %v1218 = vunpack.c.l.s4 1983009808
        %v1219 = vunpack.c.0.s8 %v1218
        %v1220 = vlaneseq
        %v1221 = vshrl.u32 %v1220, 7
        %v1222 = vsub.s32 %v1219, %v1221
        %v1223 = vrot.slane %v1216, %v1222
        %v1224 = vcombine.low %v1199, %v1207
        %v1225 = vcombine.high %v1199, %v1207
        %v1227 = vunpack.c.l.s4 1934713408
        %v1228 = vunpack.c.0.s8 %v1227
        %v1229 = vlaneseq
        %v1230 = vshrl.u32 %v1229, 7
        %v1231 = vsub.s32 %v1228, %v1230
        %v1232 = vrot.slane %v1224, %v1231
        %v1234 = vunpack.c.l.s4 1934713408
        %v1235 = vunpack.c.0.s8 %v1234
        %v1236 = vlaneseq
        %v1237 = vshrl.u32 %v1236, 7
        %v1238 = vsub.s32 %v1235, %v1237
        %v1239 = vrot.slane %v1225, %v1238
        %v1240 = vcombine.low %v1215, %v1223
        %v1241 = vcombine.high %v1215, %v1223
        %v1243 = vunpack.c.l.s4 1934713408
        %v1244 = vunpack.c.0.s8 %v1243
        %v1245 = vlaneseq
        %v1246 = vshrl.u32 %v1245, 7
        %v1247 = vsub.s32 %v1244, %v1246
        %v1248 = vrot.slane %v1240, %v1247
        %v1250 = vunpack.c.l.s4 1934713408
        %v1251 = vunpack.c.0.s8 %v1250
        %v1252 = vlaneseq
        %v1253 = vshrl.u32 %v1252, 7
        %v1254 = vsub.s32 %v1251, %v1253
        %v1255 = vrot.slane %v1241, %v1254
        %v1256 = vcombine.low %v1232, %v1248
        %v1257 = vcombine.high %v1232, %v1248
        %v1258 = vcombine.low %v1239, %v1255
        %v1259 = vcombine.high %v1239, %v1255
        %vm1260 = vcmask 64512
        %v1262 = vsel %vm1260, %v540, 0
        %1264 = vmatprep.subr.mxu0 0.0
        %1265 = vmatpush1.msra.mxu0 %v1256
        %1266 = vmatprep.subr.mxu0 0.0
        %1267 = vmatpush1.msra.mxu0 0.0
        %1268 = vmatprep.subr.mxu0 0.0
        %1269 = vmatpush1.msra.mxu0 0.0
        %1270 = vmatprep.subr.mxu0 0.0
        %1271 = vmatpush1.msra.mxu0 0.0
        %1272 = vmatprep.subr.mxu0 0.0
        %1273 = vmatpush1.msra.mxu0 0.0
        %1274 = vmatprep.subr.mxu0 0.0
        %1275 = vmatpush1.msra.mxu0 0.0
        %1276 = vmatprep.subr.mxu0 0.0
        %1277 = vmatpush1.msra.mxu0 0.0
        %1278 = vmatprep.subr.mxu0 0.0
        %1279 = vmatpush1.msra.mxu0 0.0
        %1280 = vmatprep.subr.mxu0 0.0
        %1281 = vmatpush1.msra.mxu0 0.0
        %1282 = vmatprep.subr.mxu0 0.0
        %1283 = vmatpush1.msra.mxu0 0.0
        %1284 = vmatprep.subr.mxu0 0.0
        %1285 = vmatpush1.msra.mxu0 0.0
        %1286 = vmatprep.subr.mxu0 0.0
        %1287 = vmatpush1.msra.mxu0 0.0
        %1288 = vmatprep.subr.mxu0 0.0
        %1289 = vmatpush1.msra.mxu0 0.0
        %1290 = vmatprep.subr.mxu0 0.0
        %1291 = vmatpush1.msra.mxu0 0.0
        %1292 = vmatprep.subr.mxu0 0.0
        %1293 = vmatpush1.msra.mxu0 0.0
        %1294 = vmatprep.subr.mxu0 0.0
        %1295 = vmatpush1.msra.mxu0 0.0
        %1296 = vmatprep.subr.mxu0 0.0
        %1297 = vmatpush1.msra.mxu0 0.0
        %1298 = vmatprep.subr.mxu0 0.0
        %1299 = vmatpush1.msra.mxu0 0.0
        %1300 = vmatprep.subr.mxu0 0.0
        %1301 = vmatpush1.msra.mxu0 0.0
        %1302 = vmatprep.subr.mxu0 0.0
        %1303 = vmatpush1.msra.mxu0 0.0
        %1304 = vmatprep.subr.mxu0 0.0
        %1305 = vmatpush1.msra.mxu0 0.0
        %1306 = vmatprep.subr.mxu0 0.0
        %1307 = vmatpush1.msra.mxu0 0.0
        %1308 = vmatprep.subr.mxu0 0.0
        %1309 = vmatpush1.msra.mxu0 0.0
        %1310 = vmatprep.subr.mxu0 0.0
        %1311 = vmatpush1.msra.mxu0 0.0
        %1312 = vmatprep.subr.mxu0 0.0
        %1313 = vmatpush1.msra.mxu0 0.0
        %1314 = vmatprep.subr.mxu0 0.0
        %1315 = vmatpush1.msra.mxu0 0.0
        %1316 = vmatprep.subr.mxu0 0.0
        %1317 = vmatpush1.msra.mxu0 0.0
        %1318 = vmatprep.subr.mxu0 0.0
        %1319 = vmatpush1.msra.mxu0 0.0
        %1320 = vmatprep.subr.mxu0 0.0
        %1321 = vmatpush1.msra.mxu0 0.0
        %1322 = vmatprep.subr.mxu0 0.0
        %1323 = vmatpush1.msra.mxu0 0.0
        %1324 = vmatprep.subr.mxu0 0.0
        %1325 = vmatpush1.msra.mxu0 0.0
        %1326 = vmatprep.subr.mxu0 0.0
        %1327 = vmatpush1.msra.mxu0 0.0
        %1328 = vmatprep.mubr.f32.mxu0 0.0
        %1329 = vmatmul.mubr.f32.gmra.mrb[0].mxu0 %v1262
        %v1330 = vpop.f32.mrb[0].mxu0
        %v1331 = vadd.f32 0.0, %v1330
        %v1332 = vpop.f32.mrb[0].mxu0
        %1333 = vdwg.mxu0
        %v1335 = vsel %vm1260, %v541, 0
        %1337 = vmatprep.subr.mxu0 0.0
        %1338 = vmatpush1.msra.mxu0 %v1257
        %1339 = vmatprep.subr.mxu0 0.0
        %1340 = vmatpush1.msra.mxu0 0.0
        %1341 = vmatprep.subr.mxu0 0.0
        %1342 = vmatpush1.msra.mxu0 0.0
        %1343 = vmatprep.subr.mxu0 0.0
        %1344 = vmatpush1.msra.mxu0 0.0
        %1345 = vmatprep.subr.mxu0 0.0
        %1346 = vmatpush1.msra.mxu0 0.0
        %1347 = vmatprep.subr.mxu0 0.0
        %1348 = vmatpush1.msra.mxu0 0.0
        %1349 = vmatprep.subr.mxu0 0.0
        %1350 = vmatpush1.msra.mxu0 0.0
        %1351 = vmatprep.subr.mxu0 0.0
        %1352 = vmatpush1.msra.mxu0 0.0
        %1353 = vmatprep.subr.mxu0 0.0
        %1354 = vmatpush1.msra.mxu0 0.0
        %1355 = vmatprep.subr.mxu0 0.0
        %1356 = vmatpush1.msra.mxu0 0.0
        %1357 = vmatprep.subr.mxu0 0.0
        %1358 = vmatpush1.msra.mxu0 0.0
        %1359 = vmatprep.subr.mxu0 0.0
        %1360 = vmatpush1.msra.mxu0 0.0
        %1361 = vmatprep.subr.mxu0 0.0
        %1362 = vmatpush1.msra.mxu0 0.0
        %1363 = vmatprep.subr.mxu0 0.0
        %1364 = vmatpush1.msra.mxu0 0.0
        %1365 = vmatprep.subr.mxu0 0.0
        %1366 = vmatpush1.msra.mxu0 0.0
        %1367 = vmatprep.subr.mxu0 0.0
        %1368 = vmatpush1.msra.mxu0 0.0
        %1369 = vmatprep.subr.mxu0 0.0
        %1370 = vmatpush1.msra.mxu0 0.0
        %1371 = vmatprep.subr.mxu0 0.0
        %1372 = vmatpush1.msra.mxu0 0.0
        %1373 = vmatprep.subr.mxu0 0.0
        %1374 = vmatpush1.msra.mxu0 0.0
        %1375 = vmatprep.subr.mxu0 0.0
        %1376 = vmatpush1.msra.mxu0 0.0
        %1377 = vmatprep.subr.mxu0 0.0
        %1378 = vmatpush1.msra.mxu0 0.0
        %1379 = vmatprep.subr.mxu0 0.0
        %1380 = vmatpush1.msra.mxu0 0.0
        %1381 = vmatprep.subr.mxu0 0.0
        %1382 = vmatpush1.msra.mxu0 0.0
        %1383 = vmatprep.subr.mxu0 0.0
        %1384 = vmatpush1.msra.mxu0 0.0
        %1385 = vmatprep.subr.mxu0 0.0
        %1386 = vmatpush1.msra.mxu0 0.0
        %1387 = vmatprep.subr.mxu0 0.0
        %1388 = vmatpush1.msra.mxu0 0.0
        %1389 = vmatprep.subr.mxu0 0.0
        %1390 = vmatpush1.msra.mxu0 0.0
        %1391 = vmatprep.subr.mxu0 0.0
        %1392 = vmatpush1.msra.mxu0 0.0
        %1393 = vmatprep.subr.mxu0 0.0
        %1394 = vmatpush1.msra.mxu0 0.0
        %1395 = vmatprep.subr.mxu0 0.0
        %1396 = vmatpush1.msra.mxu0 0.0
        %1397 = vmatprep.subr.mxu0 0.0
        %1398 = vmatpush1.msra.mxu0 0.0
        %1399 = vmatprep.subr.mxu0 0.0
        %1400 = vmatpush1.msra.mxu0 0.0
        %1401 = vmatprep.mubr.f32.mxu0 0.0
        %1402 = vmatmul.mubr.f32.gmra.mrb[0].mxu0 %v1335
        %v1403 = vpop.f32.mrb[0].mxu0
        %v1404 = vadd.f32 0.0, %v1403
        %v1405 = vpop.f32.mrb[0].mxu0
        %1406 = vdwg.mxu0
        %v1408 = vsel %vm1260, %v542, 0
        %1410 = vmatprep.subr.mxu0 0.0
        %1411 = vmatpush1.msra.mxu0 %v1258
        %1412 = vmatprep.subr.mxu0 0.0
        %1413 = vmatpush1.msra.mxu0 0.0
        %1414 = vmatprep.subr.mxu0 0.0
        %1415 = vmatpush1.msra.mxu0 0.0
        %1416 = vmatprep.subr.mxu0 0.0
        %1417 = vmatpush1.msra.mxu0 0.0
        %1418 = vmatprep.subr.mxu0 0.0
        %1419 = vmatpush1.msra.mxu0 0.0
        %1420 = vmatprep.subr.mxu0 0.0
        %1421 = vmatpush1.msra.mxu0 0.0
        %1422 = vmatprep.subr.mxu0 0.0
        %1423 = vmatpush1.msra.mxu0 0.0
        %1424 = vmatprep.subr.mxu0 0.0
        %1425 = vmatpush1.msra.mxu0 0.0
        %1426 = vmatprep.subr.mxu0 0.0
        %1427 = vmatpush1.msra.mxu0 0.0
        %1428 = vmatprep.subr.mxu0 0.0
        %1429 = vmatpush1.msra.mxu0 0.0
        %1430 = vmatprep.subr.mxu0 0.0
        %1431 = vmatpush1.msra.mxu0 0.0
        %1432 = vmatprep.subr.mxu0 0.0
        %1433 = vmatpush1.msra.mxu0 0.0
        %1434 = vmatprep.subr.mxu0 0.0
        %1435 = vmatpush1.msra.mxu0 0.0
        %1436 = vmatprep.subr.mxu0 0.0
        %1437 = vmatpush1.msra.mxu0 0.0
        %1438 = vmatprep.subr.mxu0 0.0
        %1439 = vmatpush1.msra.mxu0 0.0
        %1440 = vmatprep.subr.mxu0 0.0
        %1441 = vmatpush1.msra.mxu0 0.0
        %1442 = vmatprep.subr.mxu0 0.0
        %1443 = vmatpush1.msra.mxu0 0.0
        %1444 = vmatprep.subr.mxu0 0.0
        %1445 = vmatpush1.msra.mxu0 0.0
        %1446 = vmatprep.subr.mxu0 0.0
        %1447 = vmatpush1.msra.mxu0 0.0
        %1448 = vmatprep.subr.mxu0 0.0
        %1449 = vmatpush1.msra.mxu0 0.0
        %1450 = vmatprep.subr.mxu0 0.0
        %1451 = vmatpush1.msra.mxu0 0.0
        %1452 = vmatprep.subr.mxu0 0.0
        %1453 = vmatpush1.msra.mxu0 0.0
        %1454 = vmatprep.subr.mxu0 0.0
        %1455 = vmatpush1.msra.mxu0 0.0
        %1456 = vmatprep.subr.mxu0 0.0
        %1457 = vmatpush1.msra.mxu0 0.0
        %1458 = vmatprep.subr.mxu0 0.0
        %1459 = vmatpush1.msra.mxu0 0.0
        %1460 = vmatprep.subr.mxu0 0.0
        %1461 = vmatpush1.msra.mxu0 0.0
        %1462 = vmatprep.subr.mxu0 0.0
        %1463 = vmatpush1.msra.mxu0 0.0
        %1464 = vmatprep.subr.mxu0 0.0
        %1465 = vmatpush1.msra.mxu0 0.0
        %1466 = vmatprep.subr.mxu0 0.0
        %1467 = vmatpush1.msra.mxu0 0.0
        %1468 = vmatprep.subr.mxu0 0.0
        %1469 = vmatpush1.msra.mxu0 0.0
        %1470 = vmatprep.subr.mxu0 0.0
        %1471 = vmatpush1.msra.mxu0 0.0
        %1472 = vmatprep.subr.mxu0 0.0
        %1473 = vmatpush1.msra.mxu0 0.0
        %1474 = vmatprep.mubr.f32.mxu0 0.0
        %1475 = vmatmul.mubr.f32.gmra.mrb[0].mxu0 %v1408
        %v1476 = vpop.f32.mrb[0].mxu0
        %v1477 = vadd.f32 0.0, %v1476
        %v1478 = vpop.f32.mrb[0].mxu0
        %1479 = vdwg.mxu0
        %v1481 = vsel %vm1260, %v543, 0
        %1483 = vmatprep.subr.mxu0 0.0
        %1484 = vmatpush1.msra.mxu0 %v1259
        %1485 = vmatprep.subr.mxu0 0.0
        %1486 = vmatpush1.msra.mxu0 0.0
        %1487 = vmatprep.subr.mxu0 0.0
        %1488 = vmatpush1.msra.mxu0 0.0
        %1489 = vmatprep.subr.mxu0 0.0
        %1490 = vmatpush1.msra.mxu0 0.0
        %1491 = vmatprep.subr.mxu0 0.0
        %1492 = vmatpush1.msra.mxu0 0.0
        %1493 = vmatprep.subr.mxu0 0.0
        %1494 = vmatpush1.msra.mxu0 0.0
        %1495 = vmatprep.subr.mxu0 0.0
        %1496 = vmatpush1.msra.mxu0 0.0
        %1497 = vmatprep.subr.mxu0 0.0
        %1498 = vmatpush1.msra.mxu0 0.0
        %1499 = vmatprep.subr.mxu0 0.0
        %1500 = vmatpush1.msra.mxu0 0.0
        %1501 = vmatprep.subr.mxu0 0.0
        %1502 = vmatpush1.msra.mxu0 0.0
        %1503 = vmatprep.subr.mxu0 0.0
        %1504 = vmatpush1.msra.mxu0 0.0
        %1505 = vmatprep.subr.mxu0 0.0
        %1506 = vmatpush1.msra.mxu0 0.0
        %1507 = vmatprep.subr.mxu0 0.0
        %1508 = vmatpush1.msra.mxu0 0.0
        %1509 = vmatprep.subr.mxu0 0.0
        %1510 = vmatpush1.msra.mxu0 0.0
        %1511 = vmatprep.subr.mxu0 0.0
        %1512 = vmatpush1.msra.mxu0 0.0
        %1513 = vmatprep.subr.mxu0 0.0
        %1514 = vmatpush1.msra.mxu0 0.0
        %1515 = vmatprep.subr.mxu0 0.0
        %1516 = vmatpush1.msra.mxu0 0.0
        %1517 = vmatprep.subr.mxu0 0.0
        %1518 = vmatpush1.msra.mxu0 0.0
        %1519 = vmatprep.subr.mxu0 0.0
        %1520 = vmatpush1.msra.mxu0 0.0
        %1521 = vmatprep.subr.mxu0 0.0
        %1522 = vmatpush1.msra.mxu0 0.0
        %1523 = vmatprep.subr.mxu0 0.0
        %1524 = vmatpush1.msra.mxu0 0.0
        %1525 = vmatprep.subr.mxu0 0.0
        %1526 = vmatpush1.msra.mxu0 0.0
        %1527 = vmatprep.subr.mxu0 0.0
        %1528 = vmatpush1.msra.mxu0 0.0
        %1529 = vmatprep.subr.mxu0 0.0
        %1530 = vmatpush1.msra.mxu0 0.0
        %1531 = vmatprep.subr.mxu0 0.0
        %1532 = vmatpush1.msra.mxu0 0.0
        %1533 = vmatprep.subr.mxu0 0.0
        %1534 = vmatpush1.msra.mxu0 0.0
        %1535 = vmatprep.subr.mxu0 0.0
        %1536 = vmatpush1.msra.mxu0 0.0
        %1537 = vmatprep.subr.mxu0 0.0
        %1538 = vmatpush1.msra.mxu0 0.0
        %1539 = vmatprep.subr.mxu0 0.0
        %1540 = vmatpush1.msra.mxu0 0.0
        %1541 = vmatprep.subr.mxu0 0.0
        %1542 = vmatpush1.msra.mxu0 0.0
        %1543 = vmatprep.subr.mxu0 0.0
        %1544 = vmatpush1.msra.mxu0 0.0
        %1545 = vmatprep.subr.mxu0 0.0
        %1546 = vmatpush1.msra.mxu0 0.0
        %1547 = vmatprep.mubr.f32.mxu0 0.0
        %1548 = vmatmul.mubr.f32.gmra.mrb[0].mxu0 %v1481
        %v1549 = vpop.f32.mrb[0].mxu0
        %v1550 = vadd.f32 0.0, %v1549
        %v1551 = vpop.f32.mrb[0].mxu0
        %1552 = vdwg.mxu0
        %v1553 = vsel %vm1260, %v1331, -inf
        %1554 = vmax.xlane.f32.xlu0 %v1553
        %v1555 = vpop.xlane.xlu0 %1554
        %v1556 = vsel %vm1260, %v1404, -inf
        %1557 = vmax.xlane.f32.xlu0 %v1556
        %v1558 = vpop.xlane.xlu0 %1557
        %v1559 = vsel %vm1260, %v1477, -inf
        %1560 = vmax.xlane.f32.xlu0 %v1559
        %v1561 = vpop.xlane.xlu0 %1560
        %v1562 = vsel %vm1260, %v1550, -inf
        %1563 = vmax.xlane.f32.xlu0 %v1562
        %v1564 = vpop.xlane.xlu0 %1563
        %v1565 = vsub.f32 %v1331, %v1555
        %v1566 = vsub.f32 %v1404, %v1558
        %v1567 = vsub.f32 %v1477, %v1561
        %v1568 = vsub.f32 %v1550, %v1564
        %v1569 = vmul.f32 %v1565, 1.442695
        %v1570 = vpow.pop %v1569
        %v1571 = vmul.f32 %v1566, 1.442695
        %v1572 = vpow.pop %v1571
        %v1573 = vmul.f32 %v1567, 1.442695
        %v1574 = vpow.pop %v1573
        %v1575 = vmul.f32 %v1568, 1.442695
        %v1576 = vpow.pop %v1575
        %v1577 = vsel %vm1260, %v1570, 0.0
        %1578 = vadd.xlane.f32.xlu0 %v1577
        %v1579 = vpop.xlane.xlu0 %1578
        %v1580 = vsel %vm1260, %v1572, 0.0
        %1581 = vadd.xlane.f32.xlu0 %v1580
        %v1582 = vpop.xlane.xlu0 %1581
        %v1583 = vsel %vm1260, %v1574, 0.0
        %1584 = vadd.xlane.f32.xlu0 %v1583
        %v1585 = vpop.xlane.xlu0 %1584
        %v1586 = vsel %vm1260, %v1576, 0.0
        %1587 = vadd.xlane.f32.xlu0 %v1586
        %v1588 = vpop.xlane.xlu0 %1587
        %v1589 = vrcp.pop %v1579
        %v1590 = vrcp.pop %v1582
        %v1591 = vrcp.pop %v1585
        %v1592 = vrcp.pop %v1588
        %v1593 = vmul.f32 %v1570, %v1589
        %v1594 = vmul.f32 %v1572, %v1590
        %v1595 = vmul.f32 %v1574, %v1591
        %v1596 = vmul.f32 %v1576, %v1592
        %1597 = vxpose.xlu0.b32.start [1/16] %v468, 128
        %1598 = vxpose.xlu0.b32.cont [2/16] 0.0, 128
        %1599 = vxpose.xlu0.b32.cont [3/16] 0.0, 128
        %1600 = vxpose.xlu0.b32.cont [4/16] 0.0, 128
        %1601 = vxpose.xlu0.b32.cont [5/16] 0.0, 128
        %1602 = vxpose.xlu0.b32.cont [6/16] 0.0, 128
        %1603 = vxpose.xlu0.b32.cont [7/16] 0.0, 128
        %1604 = vxpose.xlu0.b32.cont [8/16] 0.0, 128
        %1605 = vxpose.xlu0.b32.cont [9/16] 0.0, 128
        %1606 = vxpose.xlu0.b32.cont [10/16] 0.0, 128
        %1607 = vxpose.xlu0.b32.cont [11/16] 0.0, 128
        %1608 = vxpose.xlu0.b32.cont [12/16] 0.0, 128
        %1609 = vxpose.xlu0.b32.cont [13/16] 0.0, 128
        %1610 = vxpose.xlu0.b32.cont [14/16] 0.0, 128
        %1611 = vxpose.xlu0.b32.cont [15/16] 0.0, 128
        %1612 = vxpose.xlu0.b32.end [16/16] 0.0, 128
        %v1613 = vpop.trf.xlu0
        %v1614 = vpop.trf.xlu0
        %v1615 = vpop.trf.xlu0
        %v1616 = vpop.trf.xlu0
        %v1617 = vpop.trf.xlu0
        %v1618 = vpop.trf.xlu0
        %v1619 = vpop.trf.xlu0
        %v1620 = vpop.trf.xlu0
        %v1621 = vpop.trf.xlu0
        %v1622 = vpop.trf.xlu0
        %v1623 = vpop.trf.xlu0
        %v1624 = vpop.trf.xlu0
        %v1625 = vpop.trf.xlu0
        %v1626 = vpop.trf.xlu0
        %v1627 = vpop.trf.xlu0
        %v1628 = vpop.trf.xlu0
        %1629 = vxpose.xlu0.b32.start [1/16] %v469, 128
        %1630 = vxpose.xlu0.b32.cont [2/16] 0.0, 128
        %1631 = vxpose.xlu0.b32.cont [3/16] 0.0, 128
        %1632 = vxpose.xlu0.b32.cont [4/16] 0.0, 128
        %1633 = vxpose.xlu0.b32.cont [5/16] 0.0, 128
        %1634 = vxpose.xlu0.b32.cont [6/16] 0.0, 128
        %1635 = vxpose.xlu0.b32.cont [7/16] 0.0, 128
        %1636 = vxpose.xlu0.b32.cont [8/16] 0.0, 128
        %1637 = vxpose.xlu0.b32.cont [9/16] 0.0, 128
        %1638 = vxpose.xlu0.b32.cont [10/16] 0.0, 128
        %1639 = vxpose.xlu0.b32.cont [11/16] 0.0, 128
        %1640 = vxpose.xlu0.b32.cont [12/16] 0.0, 128
        %1641 = vxpose.xlu0.b32.cont [13/16] 0.0, 128
        %1642 = vxpose.xlu0.b32.cont [14/16] 0.0, 128
        %1643 = vxpose.xlu0.b32.cont [15/16] 0.0, 128
        %1644 = vxpose.xlu0.b32.end [16/16] 0.0, 128
        %v1645 = vpop.trf.xlu0
        %v1646 = vpop.trf.xlu0
        %v1647 = vpop.trf.xlu0
        %v1648 = vpop.trf.xlu0
        %v1649 = vpop.trf.xlu0
        %v1650 = vpop.trf.xlu0
        %v1651 = vpop.trf.xlu0
        %v1652 = vpop.trf.xlu0
        %v1653 = vpop.trf.xlu0
        %v1654 = vpop.trf.xlu0
        %v1655 = vpop.trf.xlu0
        %v1656 = vpop.trf.xlu0
        %v1657 = vpop.trf.xlu0
        %v1658 = vpop.trf.xlu0
        %v1659 = vpop.trf.xlu0
        %v1660 = vpop.trf.xlu0
        %1661 = vxpose.xlu0.b32.start [1/16] %v470, 128
        %1662 = vxpose.xlu0.b32.cont [2/16] 0.0, 128
        %1663 = vxpose.xlu0.b32.cont [3/16] 0.0, 128
        %1664 = vxpose.xlu0.b32.cont [4/16] 0.0, 128
        %1665 = vxpose.xlu0.b32.cont [5/16] 0.0, 128
        %1666 = vxpose.xlu0.b32.cont [6/16] 0.0, 128
        %1667 = vxpose.xlu0.b32.cont [7/16] 0.0, 128
        %1668 = vxpose.xlu0.b32.cont [8/16] 0.0, 128
        %1669 = vxpose.xlu0.b32.cont [9/16] 0.0, 128
        %1670 = vxpose.xlu0.b32.cont [10/16] 0.0, 128
        %1671 = vxpose.xlu0.b32.cont [11/16] 0.0, 128
        %1672 = vxpose.xlu0.b32.cont [12/16] 0.0, 128
        %1673 = vxpose.xlu0.b32.cont [13/16] 0.0, 128
        %1674 = vxpose.xlu0.b32.cont [14/16] 0.0, 128
        %1675 = vxpose.xlu0.b32.cont [15/16] 0.0, 128
        %1676 = vxpose.xlu0.b32.end [16/16] 0.0, 128
        %v1677 = vpop.trf.xlu0
        %v1678 = vpop.trf.xlu0
        %v1679 = vpop.trf.xlu0
        %v1680 = vpop.trf.xlu0
        %v1681 = vpop.trf.xlu0
        %v1682 = vpop.trf.xlu0
        %v1683 = vpop.trf.xlu0
        %v1684 = vpop.trf.xlu0
        %v1685 = vpop.trf.xlu0
        %v1686 = vpop.trf.xlu0
        %v1687 = vpop.trf.xlu0
        %v1688 = vpop.trf.xlu0
        %v1689 = vpop.trf.xlu0
        %v1690 = vpop.trf.xlu0
        %v1691 = vpop.trf.xlu0
        %v1692 = vpop.trf.xlu0
        %1693 = vxpose.xlu0.b32.start [1/16] %v471, 128
        %1694 = vxpose.xlu0.b32.cont [2/16] 0.0, 128
        %1695 = vxpose.xlu0.b32.cont [3/16] 0.0, 128
        %1696 = vxpose.xlu0.b32.cont [4/16] 0.0, 128
        %1697 = vxpose.xlu0.b32.cont [5/16] 0.0, 128
        %1698 = vxpose.xlu0.b32.cont [6/16] 0.0, 128
        %1699 = vxpose.xlu0.b32.cont [7/16] 0.0, 128
        %1700 = vxpose.xlu0.b32.cont [8/16] 0.0, 128
        %1701 = vxpose.xlu0.b32.cont [9/16] 0.0, 128
        %1702 = vxpose.xlu0.b32.cont [10/16] 0.0, 128
        %1703 = vxpose.xlu0.b32.cont [11/16] 0.0, 128
        %1704 = vxpose.xlu0.b32.cont [12/16] 0.0, 128
        %1705 = vxpose.xlu0.b32.cont [13/16] 0.0, 128
        %1706 = vxpose.xlu0.b32.cont [14/16] 0.0, 128
        %1707 = vxpose.xlu0.b32.cont [15/16] 0.0, 128
        %1708 = vxpose.xlu0.b32.end [16/16] 0.0, 128
        %v1709 = vpop.trf.xlu0
        %v1710 = vpop.trf.xlu0
        %v1711 = vpop.trf.xlu0
        %v1712 = vpop.trf.xlu0
        %v1713 = vpop.trf.xlu0
        %v1714 = vpop.trf.xlu0
        %v1715 = vpop.trf.xlu0
        %v1716 = vpop.trf.xlu0
        %v1717 = vpop.trf.xlu0
        %v1718 = vpop.trf.xlu0
        %v1719 = vpop.trf.xlu0
        %v1720 = vpop.trf.xlu0
        %v1721 = vpop.trf.xlu0
        %v1722 = vpop.trf.xlu0
        %v1723 = vpop.trf.xlu0
        %v1724 = vpop.trf.xlu0
        %1725 = vxpose.xlu0.b32.start [1/16] %v472, 128
        %1726 = vxpose.xlu0.b32.cont [2/16] 0.0, 128
        %1727 = vxpose.xlu0.b32.cont [3/16] 0.0, 128
        %1728 = vxpose.xlu0.b32.cont [4/16] 0.0, 128
        %1729 = vxpose.xlu0.b32.cont [5/16] 0.0, 128
        %1730 = vxpose.xlu0.b32.cont [6/16] 0.0, 128
        %1731 = vxpose.xlu0.b32.cont [7/16] 0.0, 128
        %1732 = vxpose.xlu0.b32.cont [8/16] 0.0, 128
        %1733 = vxpose.xlu0.b32.cont [9/16] 0.0, 128
        %1734 = vxpose.xlu0.b32.cont [10/16] 0.0, 128
        %1735 = vxpose.xlu0.b32.cont [11/16] 0.0, 128
        %1736 = vxpose.xlu0.b32.cont [12/16] 0.0, 128
        %1737 = vxpose.xlu0.b32.cont [13/16] 0.0, 128
        %1738 = vxpose.xlu0.b32.cont [14/16] 0.0, 128
        %1739 = vxpose.xlu0.b32.cont [15/16] 0.0, 128
        %1740 = vxpose.xlu0.b32.end [16/16] 0.0, 128
        %v1741 = vpop.trf.xlu0
        %v1742 = vpop.trf.xlu0
        %v1743 = vpop.trf.xlu0
        %v1744 = vpop.trf.xlu0
        %v1745 = vpop.trf.xlu0
        %v1746 = vpop.trf.xlu0
        %v1747 = vpop.trf.xlu0
        %v1748 = vpop.trf.xlu0
        %v1749 = vpop.trf.xlu0
        %v1750 = vpop.trf.xlu0
        %v1751 = vpop.trf.xlu0
        %v1752 = vpop.trf.xlu0
        %v1753 = vpop.trf.xlu0
        %v1754 = vpop.trf.xlu0
        %v1755 = vpop.trf.xlu0
        %v1756 = vpop.trf.xlu0
        %1757 = vxpose.xlu0.b32.start [1/16] %v473, 128
        %1758 = vxpose.xlu0.b32.cont [2/16] 0.0, 128
        %1759 = vxpose.xlu0.b32.cont [3/16] 0.0, 128
        %1760 = vxpose.xlu0.b32.cont [4/16] 0.0, 128
        %1761 = vxpose.xlu0.b32.cont [5/16] 0.0, 128
        %1762 = vxpose.xlu0.b32.cont [6/16] 0.0, 128
        %1763 = vxpose.xlu0.b32.cont [7/16] 0.0, 128
        %1764 = vxpose.xlu0.b32.cont [8/16] 0.0, 128
        %1765 = vxpose.xlu0.b32.cont [9/16] 0.0, 128
        %1766 = vxpose.xlu0.b32.cont [10/16] 0.0, 128
        %1767 = vxpose.xlu0.b32.cont [11/16] 0.0, 128
        %1768 = vxpose.xlu0.b32.cont [12/16] 0.0, 128
        %1769 = vxpose.xlu0.b32.cont [13/16] 0.0, 128
        %1770 = vxpose.xlu0.b32.cont [14/16] 0.0, 128
        %1771 = vxpose.xlu0.b32.cont [15/16] 0.0, 128
        %1772 = vxpose.xlu0.b32.end [16/16] 0.0, 128
        %v1773 = vpop.trf.xlu0
        %v1774 = vpop.trf.xlu0
        %v1775 = vpop.trf.xlu0
        %v1776 = vpop.trf.xlu0
        %v1777 = vpop.trf.xlu0
        %v1778 = vpop.trf.xlu0
        %v1779 = vpop.trf.xlu0
        %v1780 = vpop.trf.xlu0
        %v1781 = vpop.trf.xlu0
        %v1782 = vpop.trf.xlu0
        %v1783 = vpop.trf.xlu0
        %v1784 = vpop.trf.xlu0
        %v1785 = vpop.trf.xlu0
        %v1786 = vpop.trf.xlu0
        %v1787 = vpop.trf.xlu0
        %v1788 = vpop.trf.xlu0
        %1789 = vxpose.xlu0.b32.start [1/16] %v474, 128
        %1790 = vxpose.xlu0.b32.cont [2/16] 0.0, 128
        %1791 = vxpose.xlu0.b32.cont [3/16] 0.0, 128
        %1792 = vxpose.xlu0.b32.cont [4/16] 0.0, 128
        %1793 = vxpose.xlu0.b32.cont [5/16] 0.0, 128
        %1794 = vxpose.xlu0.b32.cont [6/16] 0.0, 128
        %1795 = vxpose.xlu0.b32.cont [7/16] 0.0, 128
        %1796 = vxpose.xlu0.b32.cont [8/16] 0.0, 128
        %1797 = vxpose.xlu0.b32.cont [9/16] 0.0, 128
        %1798 = vxpose.xlu0.b32.cont [10/16] 0.0, 128
        %1799 = vxpose.xlu0.b32.cont [11/16] 0.0, 128
        %1800 = vxpose.xlu0.b32.cont [12/16] 0.0, 128
        %1801 = vxpose.xlu0.b32.cont [13/16] 0.0, 128
        %1802 = vxpose.xlu0.b32.cont [14/16] 0.0, 128
        %1803 = vxpose.xlu0.b32.cont [15/16] 0.0, 128
        %1804 = vxpose.xlu0.b32.end [16/16] 0.0, 128
        %v1805 = vpop.trf.xlu0
        %v1806 = vpop.trf.xlu0
        %v1807 = vpop.trf.xlu0
        %v1808 = vpop.trf.xlu0
        %v1809 = vpop.trf.xlu0
        %v1810 = vpop.trf.xlu0
        %v1811 = vpop.trf.xlu0
        %v1812 = vpop.trf.xlu0
        %v1813 = vpop.trf.xlu0
        %v1814 = vpop.trf.xlu0
        %v1815 = vpop.trf.xlu0
        %v1816 = vpop.trf.xlu0
        %v1817 = vpop.trf.xlu0
        %v1818 = vpop.trf.xlu0
        %v1819 = vpop.trf.xlu0
        %v1820 = vpop.trf.xlu0
        %1821 = vxpose.xlu0.b32.start [1/16] %v475, 128
        %1822 = vxpose.xlu0.b32.cont [2/16] 0.0, 128
        %1823 = vxpose.xlu0.b32.cont [3/16] 0.0, 128
        %1824 = vxpose.xlu0.b32.cont [4/16] 0.0, 128
        %1825 = vxpose.xlu0.b32.cont [5/16] 0.0, 128
        %1826 = vxpose.xlu0.b32.cont [6/16] 0.0, 128
        %1827 = vxpose.xlu0.b32.cont [7/16] 0.0, 128
        %1828 = vxpose.xlu0.b32.cont [8/16] 0.0, 128
        %1829 = vxpose.xlu0.b32.cont [9/16] 0.0, 128
        %1830 = vxpose.xlu0.b32.cont [10/16] 0.0, 128
        %1831 = vxpose.xlu0.b32.cont [11/16] 0.0, 128
        %1832 = vxpose.xlu0.b32.cont [12/16] 0.0, 128
        %1833 = vxpose.xlu0.b32.cont [13/16] 0.0, 128
        %1834 = vxpose.xlu0.b32.cont [14/16] 0.0, 128
        %1835 = vxpose.xlu0.b32.cont [15/16] 0.0, 128
        %1836 = vxpose.xlu0.b32.end [16/16] 0.0, 128
        %v1837 = vpop.trf.xlu0
        %v1838 = vpop.trf.xlu0
        %v1839 = vpop.trf.xlu0
        %v1840 = vpop.trf.xlu0
        %v1841 = vpop.trf.xlu0
        %v1842 = vpop.trf.xlu0
        %v1843 = vpop.trf.xlu0
        %v1844 = vpop.trf.xlu0
        %v1845 = vpop.trf.xlu0
        %v1846 = vpop.trf.xlu0
        %v1847 = vpop.trf.xlu0
        %v1848 = vpop.trf.xlu0
        %v1849 = vpop.trf.xlu0
        %v1850 = vpop.trf.xlu0
        %v1851 = vpop.trf.xlu0
        %v1852 = vpop.trf.xlu0
        %v1853 = vcombine.low %v1613, %v1677
        %v1854 = vcombine.high %v1613, %v1677
        %v1856 = vunpack.c.l.s4 1983009808
        %v1857 = vunpack.c.0.s8 %v1856
        %v1858 = vlaneseq
        %v1859 = vshrl.u32 %v1858, 7
        %v1860 = vsub.s32 %v1857, %v1859
        %v1861 = vrot.slane %v1853, %v1860
        %v1863 = vunpack.c.l.s4 1983009808
        %v1864 = vunpack.c.0.s8 %v1863
        %v1865 = vlaneseq
        %v1866 = vshrl.u32 %v1865, 7
        %v1867 = vsub.s32 %v1864, %v1866
        %v1868 = vrot.slane %v1854, %v1867
        %v1869 = vcombine.low %v1645, %v1709
        %v1870 = vcombine.high %v1645, %v1709
        %v1872 = vunpack.c.l.s4 1983009808
        %v1873 = vunpack.c.0.s8 %v1872
        %v1874 = vlaneseq
        %v1875 = vshrl.u32 %v1874, 7
        %v1876 = vsub.s32 %v1873, %v1875
        %v1877 = vrot.slane %v1869, %v1876
        %v1879 = vunpack.c.l.s4 1983009808
        %v1880 = vunpack.c.0.s8 %v1879
        %v1881 = vlaneseq
        %v1882 = vshrl.u32 %v1881, 7
        %v1883 = vsub.s32 %v1880, %v1882
        %v1884 = vrot.slane %v1870, %v1883
        %v1885 = vcombine.low %v1741, %v1805
        %v1886 = vcombine.high %v1741, %v1805
        %v1888 = vunpack.c.l.s4 1983009808
        %v1889 = vunpack.c.0.s8 %v1888
        %v1890 = vlaneseq
        %v1891 = vshrl.u32 %v1890, 7
        %v1892 = vsub.s32 %v1889, %v1891
        %v1893 = vrot.slane %v1885, %v1892
        %v1895 = vunpack.c.l.s4 1983009808
        %v1896 = vunpack.c.0.s8 %v1895
        %v1897 = vlaneseq
        %v1898 = vshrl.u32 %v1897, 7
        %v1899 = vsub.s32 %v1896, %v1898
        %v1900 = vrot.slane %v1886, %v1899
        %v1901 = vcombine.low %v1773, %v1837
        %v1902 = vcombine.high %v1773, %v1837
        %v1904 = vunpack.c.l.s4 1983009808
        %v1905 = vunpack.c.0.s8 %v1904
        %v1906 = vlaneseq
        %v1907 = vshrl.u32 %v1906, 7
        %v1908 = vsub.s32 %v1905, %v1907
        %v1909 = vrot.slane %v1901, %v1908
        %v1911 = vunpack.c.l.s4 1983009808
        %v1912 = vunpack.c.0.s8 %v1911
        %v1913 = vlaneseq
        %v1914 = vshrl.u32 %v1913, 7
        %v1915 = vsub.s32 %v1912, %v1914
        %v1916 = vrot.slane %v1902, %v1915
        %v1917 = vcombine.low %v1861, %v1877
        %v1918 = vcombine.high %v1861, %v1877
        %v1920 = vunpack.c.l.s4 1934713408
        %v1921 = vunpack.c.0.s8 %v1920
        %v1922 = vlaneseq
        %v1923 = vshrl.u32 %v1922, 7
        %v1924 = vsub.s32 %v1921, %v1923
        %v1925 = vrot.slane %v1917, %v1924
        %v1927 = vunpack.c.l.s4 1934713408
        %v1928 = vunpack.c.0.s8 %v1927
        %v1929 = vlaneseq
        %v1930 = vshrl.u32 %v1929, 7
        %v1931 = vsub.s32 %v1928, %v1930
        %v1932 = vrot.slane %v1918, %v1931
        %v1933 = vcombine.low %v1868, %v1884
        %v1934 = vcombine.high %v1868, %v1884
        %v1936 = vunpack.c.l.s4 1934713408
        %v1937 = vunpack.c.0.s8 %v1936
        %v1938 = vlaneseq
        %v1939 = vshrl.u32 %v1938, 7
        %v1940 = vsub.s32 %v1937, %v1939
        %v1941 = vrot.slane %v1933, %v1940
        %v1943 = vunpack.c.l.s4 1934713408
        %v1944 = vunpack.c.0.s8 %v1943
        %v1945 = vlaneseq
        %v1946 = vshrl.u32 %v1945, 7
        %v1947 = vsub.s32 %v1944, %v1946
        %v1948 = vrot.slane %v1934, %v1947
        %v1949 = vcombine.low %v1893, %v1909
        %v1950 = vcombine.high %v1893, %v1909
        %v1952 = vunpack.c.l.s4 1934713408
        %v1953 = vunpack.c.0.s8 %v1952
        %v1954 = vlaneseq
        %v1955 = vshrl.u32 %v1954, 7
        %v1956 = vsub.s32 %v1953, %v1955
        %v1957 = vrot.slane %v1949, %v1956
        %v1959 = vunpack.c.l.s4 1934713408
        %v1960 = vunpack.c.0.s8 %v1959
        %v1961 = vlaneseq
        %v1962 = vshrl.u32 %v1961, 7
        %v1963 = vsub.s32 %v1960, %v1962
        %v1964 = vrot.slane %v1950, %v1963
        %v1965 = vcombine.low %v1900, %v1916
        %v1966 = vcombine.high %v1900, %v1916
        %v1968 = vunpack.c.l.s4 1934713408
        %v1969 = vunpack.c.0.s8 %v1968
        %v1970 = vlaneseq
        %v1971 = vshrl.u32 %v1970, 7
        %v1972 = vsub.s32 %v1969, %v1971
        %v1973 = vrot.slane %v1965, %v1972
        %v1975 = vunpack.c.l.s4 1934713408
        %v1976 = vunpack.c.0.s8 %v1975
        %v1977 = vlaneseq
        %v1978 = vshrl.u32 %v1977, 7
        %v1979 = vsub.s32 %v1976, %v1978
        %v1980 = vrot.slane %v1966, %v1979
        %v1981 = vcombine.low %v1925, %v1957
        %v1982 = vcombine.high %v1925, %v1957
        %v1983 = vcombine.low %v1932, %v1964
        %v1984 = vcombine.high %v1932, %v1964
        %v1985 = vcombine.low %v1941, %v1973
        %v1986 = vcombine.high %v1941, %v1973
        %v1987 = vcombine.low %v1948, %v1980
        %v1988 = vcombine.high %v1948, %v1980
        %1989 = vxpose.xlu0.b32.start [1/16] %v1981, 128
        %1990 = vxpose.xlu0.b32.cont [2/16] 0.0, 128
        %1991 = vxpose.xlu0.b32.cont [3/16] 0.0, 128
        %1992 = vxpose.xlu0.b32.cont [4/16] 0.0, 128
        %1993 = vxpose.xlu0.b32.cont [5/16] 0.0, 128
        %1994 = vxpose.xlu0.b32.cont [6/16] 0.0, 128
        %1995 = vxpose.xlu0.b32.cont [7/16] 0.0, 128
        %1996 = vxpose.xlu0.b32.cont [8/16] 0.0, 128
        %1997 = vxpose.xlu0.b32.cont [9/16] 0.0, 128
        %1998 = vxpose.xlu0.b32.cont [10/16] 0.0, 128
        %1999 = vxpose.xlu0.b32.cont [11/16] 0.0, 128
        %2000 = vxpose.xlu0.b32.cont [12/16] 0.0, 128
        %2001 = vxpose.xlu0.b32.cont [13/16] 0.0, 128
        %2002 = vxpose.xlu0.b32.cont [14/16] 0.0, 128
        %2003 = vxpose.xlu0.b32.cont [15/16] 0.0, 128
        %2004 = vxpose.xlu0.b32.end [16/16] 0.0, 128
        %v2005 = vpop.trf.xlu0
        %v2006 = vpop.trf.xlu0
        %v2007 = vpop.trf.xlu0
        %v2008 = vpop.trf.xlu0
        %v2009 = vpop.trf.xlu0
        %v2010 = vpop.trf.xlu0
        %v2011 = vpop.trf.xlu0
        %v2012 = vpop.trf.xlu0
        %v2013 = vpop.trf.xlu0
        %v2014 = vpop.trf.xlu0
        %v2015 = vpop.trf.xlu0
        %v2016 = vpop.trf.xlu0
        %v2017 = vpop.trf.xlu0
        %v2018 = vpop.trf.xlu0
        %v2019 = vpop.trf.xlu0
        %v2020 = vpop.trf.xlu0
        %2021 = vxpose.xlu0.b32.start [1/16] %v1982, 128
        %2022 = vxpose.xlu0.b32.cont [2/16] 0.0, 128
        %2023 = vxpose.xlu0.b32.cont [3/16] 0.0, 128
        %2024 = vxpose.xlu0.b32.cont [4/16] 0.0, 128
        %2025 = vxpose.xlu0.b32.cont [5/16] 0.0, 128
        %2026 = vxpose.xlu0.b32.cont [6/16] 0.0, 128
        %2027 = vxpose.xlu0.b32.cont [7/16] 0.0, 128
        %2028 = vxpose.xlu0.b32.cont [8/16] 0.0, 128
        %2029 = vxpose.xlu0.b32.cont [9/16] 0.0, 128
        %2030 = vxpose.xlu0.b32.cont [10/16] 0.0, 128
        %2031 = vxpose.xlu0.b32.cont [11/16] 0.0, 128
        %2032 = vxpose.xlu0.b32.cont [12/16] 0.0, 128
        %2033 = vxpose.xlu0.b32.cont [13/16] 0.0, 128
        %2034 = vxpose.xlu0.b32.cont [14/16] 0.0, 128
        %2035 = vxpose.xlu0.b32.cont [15/16] 0.0, 128
        %2036 = vxpose.xlu0.b32.end [16/16] 0.0, 128
        %v2037 = vpop.trf.xlu0
        %v2038 = vpop.trf.xlu0
        %v2039 = vpop.trf.xlu0
        %v2040 = vpop.trf.xlu0
        %v2041 = vpop.trf.xlu0
        %v2042 = vpop.trf.xlu0
        %v2043 = vpop.trf.xlu0
        %v2044 = vpop.trf.xlu0
        %v2045 = vpop.trf.xlu0
        %v2046 = vpop.trf.xlu0
        %v2047 = vpop.trf.xlu0
        %v2048 = vpop.trf.xlu0
        %v2049 = vpop.trf.xlu0
        %v2050 = vpop.trf.xlu0
        %v2051 = vpop.trf.xlu0
        %v2052 = vpop.trf.xlu0
        %2053 = vxpose.xlu0.b32.start [1/16] %v1983, 128
        %2054 = vxpose.xlu0.b32.cont [2/16] 0.0, 128
        %2055 = vxpose.xlu0.b32.cont [3/16] 0.0, 128
        %2056 = vxpose.xlu0.b32.cont [4/16] 0.0, 128
        %2057 = vxpose.xlu0.b32.cont [5/16] 0.0, 128
        %2058 = vxpose.xlu0.b32.cont [6/16] 0.0, 128
        %2059 = vxpose.xlu0.b32.cont [7/16] 0.0, 128
        %2060 = vxpose.xlu0.b32.cont [8/16] 0.0, 128
        %2061 = vxpose.xlu0.b32.cont [9/16] 0.0, 128
        %2062 = vxpose.xlu0.b32.cont [10/16] 0.0, 128
        %2063 = vxpose.xlu0.b32.cont [11/16] 0.0, 128
        %2064 = vxpose.xlu0.b32.cont [12/16] 0.0, 128
        %2065 = vxpose.xlu0.b32.cont [13/16] 0.0, 128
        %2066 = vxpose.xlu0.b32.cont [14/16] 0.0, 128
        %2067 = vxpose.xlu0.b32.cont [15/16] 0.0, 128
        %2068 = vxpose.xlu0.b32.end [16/16] 0.0, 128
        %v2069 = vpop.trf.xlu0
        %v2070 = vpop.trf.xlu0
        %v2071 = vpop.trf.xlu0
        %v2072 = vpop.trf.xlu0
        %v2073 = vpop.trf.xlu0
        %v2074 = vpop.trf.xlu0
        %v2075 = vpop.trf.xlu0
        %v2076 = vpop.trf.xlu0
        %v2077 = vpop.trf.xlu0
        %v2078 = vpop.trf.xlu0
        %v2079 = vpop.trf.xlu0
        %v2080 = vpop.trf.xlu0
        %v2081 = vpop.trf.xlu0
        %v2082 = vpop.trf.xlu0
        %v2083 = vpop.trf.xlu0
        %v2084 = vpop.trf.xlu0
        %2085 = vxpose.xlu0.b32.start [1/16] %v1984, 128
        %2086 = vxpose.xlu0.b32.cont [2/16] 0.0, 128
        %2087 = vxpose.xlu0.b32.cont [3/16] 0.0, 128
        %2088 = vxpose.xlu0.b32.cont [4/16] 0.0, 128
        %2089 = vxpose.xlu0.b32.cont [5/16] 0.0, 128
        %2090 = vxpose.xlu0.b32.cont [6/16] 0.0, 128
        %2091 = vxpose.xlu0.b32.cont [7/16] 0.0, 128
        %2092 = vxpose.xlu0.b32.cont [8/16] 0.0, 128
        %2093 = vxpose.xlu0.b32.cont [9/16] 0.0, 128
        %2094 = vxpose.xlu0.b32.cont [10/16] 0.0, 128
        %2095 = vxpose.xlu0.b32.cont [11/16] 0.0, 128
        %2096 = vxpose.xlu0.b32.cont [12/16] 0.0, 128
        %2097 = vxpose.xlu0.b32.cont [13/16] 0.0, 128
        %2098 = vxpose.xlu0.b32.cont [14/16] 0.0, 128
        %2099 = vxpose.xlu0.b32.cont [15/16] 0.0, 128
        %2100 = vxpose.xlu0.b32.end [16/16] 0.0, 128
        %v2101 = vpop.trf.xlu0
        %v2102 = vpop.trf.xlu0
        %v2103 = vpop.trf.xlu0
        %v2104 = vpop.trf.xlu0
        %v2105 = vpop.trf.xlu0
        %v2106 = vpop.trf.xlu0
        %v2107 = vpop.trf.xlu0
        %v2108 = vpop.trf.xlu0
        %v2109 = vpop.trf.xlu0
        %v2110 = vpop.trf.xlu0
        %v2111 = vpop.trf.xlu0
        %v2112 = vpop.trf.xlu0
        %v2113 = vpop.trf.xlu0
        %v2114 = vpop.trf.xlu0
        %v2115 = vpop.trf.xlu0
        %v2116 = vpop.trf.xlu0
        %2117 = vxpose.xlu0.b32.start [1/16] %v1985, 128
        %2118 = vxpose.xlu0.b32.cont [2/16] 0.0, 128
        %2119 = vxpose.xlu0.b32.cont [3/16] 0.0, 128
        %2120 = vxpose.xlu0.b32.cont [4/16] 0.0, 128
        %2121 = vxpose.xlu0.b32.cont [5/16] 0.0, 128
        %2122 = vxpose.xlu0.b32.cont [6/16] 0.0, 128
        %2123 = vxpose.xlu0.b32.cont [7/16] 0.0, 128
        %2124 = vxpose.xlu0.b32.cont [8/16] 0.0, 128
        %2125 = vxpose.xlu0.b32.cont [9/16] 0.0, 128
        %2126 = vxpose.xlu0.b32.cont [10/16] 0.0, 128
        %2127 = vxpose.xlu0.b32.cont [11/16] 0.0, 128
        %2128 = vxpose.xlu0.b32.cont [12/16] 0.0, 128
        %2129 = vxpose.xlu0.b32.cont [13/16] 0.0, 128
        %2130 = vxpose.xlu0.b32.cont [14/16] 0.0, 128
        %2131 = vxpose.xlu0.b32.cont [15/16] 0.0, 128
        %2132 = vxpose.xlu0.b32.end [16/16] 0.0, 128
        %v2133 = vpop.trf.xlu0
        %v2134 = vpop.trf.xlu0
        %v2135 = vpop.trf.xlu0
        %v2136 = vpop.trf.xlu0
        %v2137 = vpop.trf.xlu0
        %v2138 = vpop.trf.xlu0
        %v2139 = vpop.trf.xlu0
        %v2140 = vpop.trf.xlu0
        %v2141 = vpop.trf.xlu0
        %v2142 = vpop.trf.xlu0
        %v2143 = vpop.trf.xlu0
        %v2144 = vpop.trf.xlu0
        %v2145 = vpop.trf.xlu0
        %v2146 = vpop.trf.xlu0
        %v2147 = vpop.trf.xlu0
        %v2148 = vpop.trf.xlu0
        %2149 = vxpose.xlu0.b32.start [1/16] %v1986, 128
        %2150 = vxpose.xlu0.b32.cont [2/16] 0.0, 128
        %2151 = vxpose.xlu0.b32.cont [3/16] 0.0, 128
        %2152 = vxpose.xlu0.b32.cont [4/16] 0.0, 128
        %2153 = vxpose.xlu0.b32.cont [5/16] 0.0, 128
        %2154 = vxpose.xlu0.b32.cont [6/16] 0.0, 128
        %2155 = vxpose.xlu0.b32.cont [7/16] 0.0, 128
        %2156 = vxpose.xlu0.b32.cont [8/16] 0.0, 128
        %2157 = vxpose.xlu0.b32.cont [9/16] 0.0, 128
        %2158 = vxpose.xlu0.b32.cont [10/16] 0.0, 128
        %2159 = vxpose.xlu0.b32.cont [11/16] 0.0, 128
        %2160 = vxpose.xlu0.b32.cont [12/16] 0.0, 128
        %2161 = vxpose.xlu0.b32.cont [13/16] 0.0, 128
        %2162 = vxpose.xlu0.b32.cont [14/16] 0.0, 128
        %2163 = vxpose.xlu0.b32.cont [15/16] 0.0, 128
        %2164 = vxpose.xlu0.b32.end [16/16] 0.0, 128
        %v2165 = vpop.trf.xlu0
        %v2166 = vpop.trf.xlu0
        %v2167 = vpop.trf.xlu0
        %v2168 = vpop.trf.xlu0
        %v2169 = vpop.trf.xlu0
        %v2170 = vpop.trf.xlu0
        %v2171 = vpop.trf.xlu0
        %v2172 = vpop.trf.xlu0
        %v2173 = vpop.trf.xlu0
        %v2174 = vpop.trf.xlu0
        %v2175 = vpop.trf.xlu0
        %v2176 = vpop.trf.xlu0
        %v2177 = vpop.trf.xlu0
        %v2178 = vpop.trf.xlu0
        %v2179 = vpop.trf.xlu0
        %v2180 = vpop.trf.xlu0
        %2181 = vxpose.xlu0.b32.start [1/16] %v1987, 128
        %2182 = vxpose.xlu0.b32.cont [2/16] 0.0, 128
        %2183 = vxpose.xlu0.b32.cont [3/16] 0.0, 128
        %2184 = vxpose.xlu0.b32.cont [4/16] 0.0, 128
        %2185 = vxpose.xlu0.b32.cont [5/16] 0.0, 128
        %2186 = vxpose.xlu0.b32.cont [6/16] 0.0, 128
        %2187 = vxpose.xlu0.b32.cont [7/16] 0.0, 128
        %2188 = vxpose.xlu0.b32.cont [8/16] 0.0, 128
        %2189 = vxpose.xlu0.b32.cont [9/16] 0.0, 128
        %2190 = vxpose.xlu0.b32.cont [10/16] 0.0, 128
        %2191 = vxpose.xlu0.b32.cont [11/16] 0.0, 128
        %2192 = vxpose.xlu0.b32.cont [12/16] 0.0, 128
        %2193 = vxpose.xlu0.b32.cont [13/16] 0.0, 128
        %2194 = vxpose.xlu0.b32.cont [14/16] 0.0, 128
        %2195 = vxpose.xlu0.b32.cont [15/16] 0.0, 128
        %2196 = vxpose.xlu0.b32.end [16/16] 0.0, 128
        %v2197 = vpop.trf.xlu0
        %v2198 = vpop.trf.xlu0
        %v2199 = vpop.trf.xlu0
        %v2200 = vpop.trf.xlu0
        %v2201 = vpop.trf.xlu0
        %v2202 = vpop.trf.xlu0
        %v2203 = vpop.trf.xlu0
        %v2204 = vpop.trf.xlu0
        %v2205 = vpop.trf.xlu0
        %v2206 = vpop.trf.xlu0
        %v2207 = vpop.trf.xlu0
        %v2208 = vpop.trf.xlu0
        %v2209 = vpop.trf.xlu0
        %v2210 = vpop.trf.xlu0
        %v2211 = vpop.trf.xlu0
        %v2212 = vpop.trf.xlu0
        %2213 = vxpose.xlu0.b32.start [1/16] %v1988, 128
        %2214 = vxpose.xlu0.b32.cont [2/16] 0.0, 128
        %2215 = vxpose.xlu0.b32.cont [3/16] 0.0, 128
        %2216 = vxpose.xlu0.b32.cont [4/16] 0.0, 128
        %2217 = vxpose.xlu0.b32.cont [5/16] 0.0, 128
        %2218 = vxpose.xlu0.b32.cont [6/16] 0.0, 128
        %2219 = vxpose.xlu0.b32.cont [7/16] 0.0, 128
        %2220 = vxpose.xlu0.b32.cont [8/16] 0.0, 128
        %2221 = vxpose.xlu0.b32.cont [9/16] 0.0, 128
        %2222 = vxpose.xlu0.b32.cont [10/16] 0.0, 128
        %2223 = vxpose.xlu0.b32.cont [11/16] 0.0, 128
        %2224 = vxpose.xlu0.b32.cont [12/16] 0.0, 128
        %2225 = vxpose.xlu0.b32.cont [13/16] 0.0, 128
        %2226 = vxpose.xlu0.b32.cont [14/16] 0.0, 128
        %2227 = vxpose.xlu0.b32.cont [15/16] 0.0, 128
        %2228 = vxpose.xlu0.b32.end [16/16] 0.0, 128
        %v2229 = vpop.trf.xlu0
        %v2230 = vpop.trf.xlu0
        %v2231 = vpop.trf.xlu0
        %v2232 = vpop.trf.xlu0
        %v2233 = vpop.trf.xlu0
        %v2234 = vpop.trf.xlu0
        %v2235 = vpop.trf.xlu0
        %v2236 = vpop.trf.xlu0
        %v2237 = vpop.trf.xlu0
        %v2238 = vpop.trf.xlu0
        %v2239 = vpop.trf.xlu0
        %v2240 = vpop.trf.xlu0
        %v2241 = vpop.trf.xlu0
        %v2242 = vpop.trf.xlu0
        %v2243 = vpop.trf.xlu0
        %v2244 = vpop.trf.xlu0
        %v2245 = vcombine.low %v2005, %v2069
        %v2247 = vunpack.c.l.s4 1983009808
        %v2248 = vunpack.c.0.s8 %v2247
        %v2249 = vlaneseq
        %v2250 = vshrl.u32 %v2249, 7
        %v2251 = vsub.s32 %v2248, %v2250
        %v2252 = vrot.slane %v2245, %v2251
        %v2253 = vcombine.low %v2037, %v2101
        %v2255 = vunpack.c.l.s4 1983009808
        %v2256 = vunpack.c.0.s8 %v2255
        %v2257 = vlaneseq
        %v2258 = vshrl.u32 %v2257, 7
        %v2259 = vsub.s32 %v2256, %v2258
        %v2260 = vrot.slane %v2253, %v2259
        %v2261 = vcombine.low %v2133, %v2197
        %v2263 = vunpack.c.l.s4 1983009808
        %v2264 = vunpack.c.0.s8 %v2263
        %v2265 = vlaneseq
        %v2266 = vshrl.u32 %v2265, 7
        %v2267 = vsub.s32 %v2264, %v2266
        %v2268 = vrot.slane %v2261, %v2267
        %v2269 = vcombine.low %v2165, %v2229
        %v2271 = vunpack.c.l.s4 1983009808
        %v2272 = vunpack.c.0.s8 %v2271
        %v2273 = vlaneseq
        %v2274 = vshrl.u32 %v2273, 7
        %v2275 = vsub.s32 %v2272, %v2274
        %v2276 = vrot.slane %v2269, %v2275
        %v2277 = vcombine.low %v2252, %v2260
        %v2278 = vcombine.high %v2252, %v2260
        %v2280 = vunpack.c.l.s4 1934713408
        %v2281 = vunpack.c.0.s8 %v2280
        %v2282 = vlaneseq
        %v2283 = vshrl.u32 %v2282, 7
        %v2284 = vsub.s32 %v2281, %v2283
        %v2285 = vrot.slane %v2277, %v2284
        %v2287 = vunpack.c.l.s4 1934713408
        %v2288 = vunpack.c.0.s8 %v2287
        %v2289 = vlaneseq
        %v2290 = vshrl.u32 %v2289, 7
        %v2291 = vsub.s32 %v2288, %v2290
        %v2292 = vrot.slane %v2278, %v2291
        %v2293 = vcombine.low %v2268, %v2276
        %v2294 = vcombine.high %v2268, %v2276
        %v2296 = vunpack.c.l.s4 1934713408
        %v2297 = vunpack.c.0.s8 %v2296
        %v2298 = vlaneseq
        %v2299 = vshrl.u32 %v2298, 7
        %v2300 = vsub.s32 %v2297, %v2299
        %v2301 = vrot.slane %v2293, %v2300
        %v2303 = vunpack.c.l.s4 1934713408
        %v2304 = vunpack.c.0.s8 %v2303
        %v2305 = vlaneseq
        %v2306 = vshrl.u32 %v2305, 7
        %v2307 = vsub.s32 %v2304, %v2306
        %v2308 = vrot.slane %v2294, %v2307
        %v2309 = vcombine.low %v2285, %v2301
        %v2310 = vcombine.high %v2285, %v2301
        %v2311 = vcombine.low %v2292, %v2308
        %v2312 = vcombine.high %v2292, %v2308
        %v2314 = vsel %vm1260, %v2309, 0
        %v2317 = vsel %vm1260, %v1593, 0
        %2319 = vmatprep.subr.mxu0 0.0
        %2320 = vmatpush1.xpose.msra.mxu0 %v2317
        %2321 = vmatprep.subr.mxu0 0.0
        %2322 = vmatpush1.xpose.msra.mxu0 0.0
        %2323 = vmatprep.subr.mxu0 0.0
        %2324 = vmatpush1.xpose.msra.mxu0 0.0
        %2325 = vmatprep.subr.mxu0 0.0
        %2326 = vmatpush1.xpose.msra.mxu0 0.0
        %2327 = vmatprep.subr.mxu0 0.0
        %2328 = vmatpush1.xpose.msra.mxu0 0.0
        %2329 = vmatprep.subr.mxu0 0.0
        %2330 = vmatpush1.xpose.msra.mxu0 0.0
        %2331 = vmatprep.subr.mxu0 0.0
        %2332 = vmatpush1.xpose.msra.mxu0 0.0
        %2333 = vmatprep.subr.mxu0 0.0
        %2334 = vmatpush1.xpose.msra.mxu0 0.0
        %2335 = vmatprep.subr.mxu0 0.0
        %2336 = vmatpush1.xpose.msra.mxu0 0.0
        %2337 = vmatprep.subr.mxu0 0.0
        %2338 = vmatpush1.xpose.msra.mxu0 0.0
        %2339 = vmatprep.subr.mxu0 0.0
        %2340 = vmatpush1.xpose.msra.mxu0 0.0
        %2341 = vmatprep.subr.mxu0 0.0
        %2342 = vmatpush1.xpose.msra.mxu0 0.0
        %2343 = vmatprep.subr.mxu0 0.0
        %2344 = vmatpush1.xpose.msra.mxu0 0.0
        %2345 = vmatprep.subr.mxu0 0.0
        %2346 = vmatpush1.xpose.msra.mxu0 0.0
        %2347 = vmatprep.subr.mxu0 0.0
        %2348 = vmatpush1.xpose.msra.mxu0 0.0
        %2349 = vmatprep.subr.mxu0 0.0
        %2350 = vmatpush1.xpose.msra.mxu0 0.0
        %2351 = vmatprep.subr.mxu0 0.0
        %2352 = vmatpush1.xpose.msra.mxu0 0.0
        %2353 = vmatprep.subr.mxu0 0.0
        %2354 = vmatpush1.xpose.msra.mxu0 0.0
        %2355 = vmatprep.subr.mxu0 0.0
        %2356 = vmatpush1.xpose.msra.mxu0 0.0
        %2357 = vmatprep.subr.mxu0 0.0
        %2358 = vmatpush1.xpose.msra.mxu0 0.0
        %2359 = vmatprep.subr.mxu0 0.0
        %2360 = vmatpush1.xpose.msra.mxu0 0.0
        %2361 = vmatprep.subr.mxu0 0.0
        %2362 = vmatpush1.xpose.msra.mxu0 0.0
        %2363 = vmatprep.subr.mxu0 0.0
        %2364 = vmatpush1.xpose.msra.mxu0 0.0
        %2365 = vmatprep.subr.mxu0 0.0
        %2366 = vmatpush1.xpose.msra.mxu0 0.0
        %2367 = vmatprep.subr.mxu0 0.0
        %2368 = vmatpush1.xpose.msra.mxu0 0.0
        %2369 = vmatprep.subr.mxu0 0.0
        %2370 = vmatpush1.xpose.msra.mxu0 0.0
        %2371 = vmatprep.subr.mxu0 0.0
        %2372 = vmatpush1.xpose.msra.mxu0 0.0
        %2373 = vmatprep.subr.mxu0 0.0
        %2374 = vmatpush1.xpose.msra.mxu0 0.0
        %2375 = vmatprep.subr.mxu0 0.0
        %2376 = vmatpush1.xpose.msra.mxu0 0.0
        %2377 = vmatprep.subr.mxu0 0.0
        %2378 = vmatpush1.xpose.msra.mxu0 0.0
        %2379 = vmatprep.subr.mxu0 0.0
        %2380 = vmatpush1.xpose.msra.mxu0 0.0
        %2381 = vmatprep.subr.mxu0 0.0
        %2382 = vmatpush1.xpose.msra.mxu0 0.0
        %2383 = vmatprep.mubr.f32.mxu0 0.0
        %2384 = vmatmul.mubr.f32.gmra.mrb[0].mxu0 %v2314
        %v2385 = vpop.f32.mrb[0].mxu0
        %v2386 = vadd.f32 0.0, %v2385
        %v2387 = vpop.f32.mrb[0].mxu0
        %2388 = vdwg.mxu0
        %v2390 = vsel %vm1260, %v2310, 0
        %v2393 = vsel %vm1260, %v1594, 0
        %2395 = vmatprep.subr.mxu0 0.0
        %2396 = vmatpush1.xpose.msra.mxu0 %v2393
        %2397 = vmatprep.subr.mxu0 0.0
        %2398 = vmatpush1.xpose.msra.mxu0 0.0
        %2399 = vmatprep.subr.mxu0 0.0
        %2400 = vmatpush1.xpose.msra.mxu0 0.0
        %2401 = vmatprep.subr.mxu0 0.0
        %2402 = vmatpush1.xpose.msra.mxu0 0.0
        %2403 = vmatprep.subr.mxu0 0.0
        %2404 = vmatpush1.xpose.msra.mxu0 0.0
        %2405 = vmatprep.subr.mxu0 0.0
        %2406 = vmatpush1.xpose.msra.mxu0 0.0
        %2407 = vmatprep.subr.mxu0 0.0
        %2408 = vmatpush1.xpose.msra.mxu0 0.0
        %2409 = vmatprep.subr.mxu0 0.0
        %2410 = vmatpush1.xpose.msra.mxu0 0.0
        %2411 = vmatprep.subr.mxu0 0.0
        %2412 = vmatpush1.xpose.msra.mxu0 0.0
        %2413 = vmatprep.subr.mxu0 0.0
        %2414 = vmatpush1.xpose.msra.mxu0 0.0
        %2415 = vmatprep.subr.mxu0 0.0
        %2416 = vmatpush1.xpose.msra.mxu0 0.0
        %2417 = vmatprep.subr.mxu0 0.0
        %2418 = vmatpush1.xpose.msra.mxu0 0.0
        %2419 = vmatprep.subr.mxu0 0.0
        %2420 = vmatpush1.xpose.msra.mxu0 0.0
        %2421 = vmatprep.subr.mxu0 0.0
        %2422 = vmatpush1.xpose.msra.mxu0 0.0
        %2423 = vmatprep.subr.mxu0 0.0
        %2424 = vmatpush1.xpose.msra.mxu0 0.0
        %2425 = vmatprep.subr.mxu0 0.0
        %2426 = vmatpush1.xpose.msra.mxu0 0.0
        %2427 = vmatprep.subr.mxu0 0.0
        %2428 = vmatpush1.xpose.msra.mxu0 0.0
        %2429 = vmatprep.subr.mxu0 0.0
        %2430 = vmatpush1.xpose.msra.mxu0 0.0
        %2431 = vmatprep.subr.mxu0 0.0
        %2432 = vmatpush1.xpose.msra.mxu0 0.0
        %2433 = vmatprep.subr.mxu0 0.0
        %2434 = vmatpush1.xpose.msra.mxu0 0.0
        %2435 = vmatprep.subr.mxu0 0.0
        %2436 = vmatpush1.xpose.msra.mxu0 0.0
        %2437 = vmatprep.subr.mxu0 0.0
        %2438 = vmatpush1.xpose.msra.mxu0 0.0
        %2439 = vmatprep.subr.mxu0 0.0
        %2440 = vmatpush1.xpose.msra.mxu0 0.0
        %2441 = vmatprep.subr.mxu0 0.0
        %2442 = vmatpush1.xpose.msra.mxu0 0.0
        %2443 = vmatprep.subr.mxu0 0.0
        %2444 = vmatpush1.xpose.msra.mxu0 0.0
        %2445 = vmatprep.subr.mxu0 0.0
        %2446 = vmatpush1.xpose.msra.mxu0 0.0
        %2447 = vmatprep.subr.mxu0 0.0
        %2448 = vmatpush1.xpose.msra.mxu0 0.0
        %2449 = vmatprep.subr.mxu0 0.0
        %2450 = vmatpush1.xpose.msra.mxu0 0.0
        %2451 = vmatprep.subr.mxu0 0.0
        %2452 = vmatpush1.xpose.msra.mxu0 0.0
        %2453 = vmatprep.subr.mxu0 0.0
        %2454 = vmatpush1.xpose.msra.mxu0 0.0
        %2455 = vmatprep.subr.mxu0 0.0
        %2456 = vmatpush1.xpose.msra.mxu0 0.0
        %2457 = vmatprep.subr.mxu0 0.0
        %2458 = vmatpush1.xpose.msra.mxu0 0.0
        %2459 = vmatprep.mubr.f32.mxu0 0.0
        %2460 = vmatmul.mubr.f32.gmra.mrb[0].mxu0 %v2390
        %v2461 = vpop.f32.mrb[0].mxu0
        %v2462 = vadd.f32 0.0, %v2461
        %v2463 = vpop.f32.mrb[0].mxu0
        %2464 = vdwg.mxu0
        %v2466 = vsel %vm1260, %v2311, 0
        %v2469 = vsel %vm1260, %v1595, 0
        %2471 = vmatprep.subr.mxu0 0.0
        %2472 = vmatpush1.xpose.msra.mxu0 %v2469
        %2473 = vmatprep.subr.mxu0 0.0
        %2474 = vmatpush1.xpose.msra.mxu0 0.0
        %2475 = vmatprep.subr.mxu0 0.0
        %2476 = vmatpush1.xpose.msra.mxu0 0.0
        %2477 = vmatprep.subr.mxu0 0.0
        %2478 = vmatpush1.xpose.msra.mxu0 0.0
        %2479 = vmatprep.subr.mxu0 0.0
        %2480 = vmatpush1.xpose.msra.mxu0 0.0
        %2481 = vmatprep.subr.mxu0 0.0
        %2482 = vmatpush1.xpose.msra.mxu0 0.0
        %2483 = vmatprep.subr.mxu0 0.0
        %2484 = vmatpush1.xpose.msra.mxu0 0.0
        %2485 = vmatprep.subr.mxu0 0.0
        %2486 = vmatpush1.xpose.msra.mxu0 0.0
        %2487 = vmatprep.subr.mxu0 0.0
        %2488 = vmatpush1.xpose.msra.mxu0 0.0
        %2489 = vmatprep.subr.mxu0 0.0
        %2490 = vmatpush1.xpose.msra.mxu0 0.0
        %2491 = vmatprep.subr.mxu0 0.0
        %2492 = vmatpush1.xpose.msra.mxu0 0.0
        %2493 = vmatprep.subr.mxu0 0.0
        %2494 = vmatpush1.xpose.msra.mxu0 0.0
        %2495 = vmatprep.subr.mxu0 0.0
        %2496 = vmatpush1.xpose.msra.mxu0 0.0
        %2497 = vmatprep.subr.mxu0 0.0
        %2498 = vmatpush1.xpose.msra.mxu0 0.0
        %2499 = vmatprep.subr.mxu0 0.0
        %2500 = vmatpush1.xpose.msra.mxu0 0.0
        %2501 = vmatprep.subr.mxu0 0.0
        %2502 = vmatpush1.xpose.msra.mxu0 0.0
        %2503 = vmatprep.subr.mxu0 0.0
        %2504 = vmatpush1.xpose.msra.mxu0 0.0
        %2505 = vmatprep.subr.mxu0 0.0
        %2506 = vmatpush1.xpose.msra.mxu0 0.0
        %2507 = vmatprep.subr.mxu0 0.0
        %2508 = vmatpush1.xpose.msra.mxu0 0.0
        %2509 = vmatprep.subr.mxu0 0.0
        %2510 = vmatpush1.xpose.msra.mxu0 0.0
        %2511 = vmatprep.subr.mxu0 0.0
        %2512 = vmatpush1.xpose.msra.mxu0 0.0
        %2513 = vmatprep.subr.mxu0 0.0
        %2514 = vmatpush1.xpose.msra.mxu0 0.0
        %2515 = vmatprep.subr.mxu0 0.0
        %2516 = vmatpush1.xpose.msra.mxu0 0.0
        %2517 = vmatprep.subr.mxu0 0.0
        %2518 = vmatpush1.xpose.msra.mxu0 0.0
        %2519 = vmatprep.subr.mxu0 0.0
        %2520 = vmatpush1.xpose.msra.mxu0 0.0
        %2521 = vmatprep.subr.mxu0 0.0
        %2522 = vmatpush1.xpose.msra.mxu0 0.0
        %2523 = vmatprep.subr.mxu0 0.0
        %2524 = vmatpush1.xpose.msra.mxu0 0.0
        %2525 = vmatprep.subr.mxu0 0.0
        %2526 = vmatpush1.xpose.msra.mxu0 0.0
        %2527 = vmatprep.subr.mxu0 0.0
        %2528 = vmatpush1.xpose.msra.mxu0 0.0
        %2529 = vmatprep.subr.mxu0 0.0
        %2530 = vmatpush1.xpose.msra.mxu0 0.0
        %2531 = vmatprep.subr.mxu0 0.0
        %2532 = vmatpush1.xpose.msra.mxu0 0.0
        %2533 = vmatprep.subr.mxu0 0.0
        %2534 = vmatpush1.xpose.msra.mxu0 0.0
        %2535 = vmatprep.mubr.f32.mxu0 0.0
        %2536 = vmatmul.mubr.f32.gmra.mrb[0].mxu0 %v2466
        %v2537 = vpop.f32.mrb[0].mxu0
        %v2538 = vadd.f32 0.0, %v2537
        %v2539 = vpop.f32.mrb[0].mxu0
        %2540 = vdwg.mxu0
        %v2542 = vsel %vm1260, %v2312, 0
        %v2545 = vsel %vm1260, %v1596, 0
        %2547 = vmatprep.subr.mxu0 0.0
        %2548 = vmatpush1.xpose.msra.mxu0 %v2545
        %2549 = vmatprep.subr.mxu0 0.0
        %2550 = vmatpush1.xpose.msra.mxu0 0.0
        %2551 = vmatprep.subr.mxu0 0.0
        %2552 = vmatpush1.xpose.msra.mxu0 0.0
        %2553 = vmatprep.subr.mxu0 0.0
        %2554 = vmatpush1.xpose.msra.mxu0 0.0
        %2555 = vmatprep.subr.mxu0 0.0
        %2556 = vmatpush1.xpose.msra.mxu0 0.0
        %2557 = vmatprep.subr.mxu0 0.0
        %2558 = vmatpush1.xpose.msra.mxu0 0.0
        %2559 = vmatprep.subr.mxu0 0.0
        %2560 = vmatpush1.xpose.msra.mxu0 0.0
        %2561 = vmatprep.subr.mxu0 0.0
        %2562 = vmatpush1.xpose.msra.mxu0 0.0
        %2563 = vmatprep.subr.mxu0 0.0
        %2564 = vmatpush1.xpose.msra.mxu0 0.0
        %2565 = vmatprep.subr.mxu0 0.0
        %2566 = vmatpush1.xpose.msra.mxu0 0.0
        %2567 = vmatprep.subr.mxu0 0.0
        %2568 = vmatpush1.xpose.msra.mxu0 0.0
        %2569 = vmatprep.subr.mxu0 0.0
        %2570 = vmatpush1.xpose.msra.mxu0 0.0
        %2571 = vmatprep.subr.mxu0 0.0
        %2572 = vmatpush1.xpose.msra.mxu0 0.0
        %2573 = vmatprep.subr.mxu0 0.0
        %2574 = vmatpush1.xpose.msra.mxu0 0.0
        %2575 = vmatprep.subr.mxu0 0.0
        %2576 = vmatpush1.xpose.msra.mxu0 0.0
        %2577 = vmatprep.subr.mxu0 0.0
        %2578 = vmatpush1.xpose.msra.mxu0 0.0
        %2579 = vmatprep.subr.mxu0 0.0
        %2580 = vmatpush1.xpose.msra.mxu0 0.0
        %2581 = vmatprep.subr.mxu0 0.0
        %2582 = vmatpush1.xpose.msra.mxu0 0.0
        %2583 = vmatprep.subr.mxu0 0.0
        %2584 = vmatpush1.xpose.msra.mxu0 0.0
        %2585 = vmatprep.subr.mxu0 0.0
        %2586 = vmatpush1.xpose.msra.mxu0 0.0
        %2587 = vmatprep.subr.mxu0 0.0
        %2588 = vmatpush1.xpose.msra.mxu0 0.0
        %2589 = vmatprep.subr.mxu0 0.0
        %2590 = vmatpush1.xpose.msra.mxu0 0.0
        %2591 = vmatprep.subr.mxu0 0.0
        %2592 = vmatpush1.xpose.msra.mxu0 0.0
        %2593 = vmatprep.subr.mxu0 0.0
        %2594 = vmatpush1.xpose.msra.mxu0 0.0
        %2595 = vmatprep.subr.mxu0 0.0
        %2596 = vmatpush1.xpose.msra.mxu0 0.0
        %2597 = vmatprep.subr.mxu0 0.0
        %2598 = vmatpush1.xpose.msra.mxu0 0.0
        %2599 = vmatprep.subr.mxu0 0.0
        %2600 = vmatpush1.xpose.msra.mxu0 0.0
        %2601 = vmatprep.subr.mxu0 0.0
        %2602 = vmatpush1.xpose.msra.mxu0 0.0
        %2603 = vmatprep.subr.mxu0 0.0
        %2604 = vmatpush1.xpose.msra.mxu0 0.0
        %2605 = vmatprep.subr.mxu0 0.0
        %2606 = vmatpush1.xpose.msra.mxu0 0.0
        %2607 = vmatprep.subr.mxu0 0.0
        %2608 = vmatpush1.xpose.msra.mxu0 0.0
        %2609 = vmatprep.subr.mxu0 0.0
        %2610 = vmatpush1.xpose.msra.mxu0 0.0
        %2611 = vmatprep.mubr.f32.mxu0 0.0
        %2612 = vmatmul.mubr.f32.gmra.mrb[0].mxu0 %v2542
        %v2613 = vpop.f32.mrb[0].mxu0
        %v2614 = vadd.f32 0.0, %v2613
        %v2615 = vpop.f32.mrb[0].mxu0
        %2616 = vdwg.mxu0
        %2617 = vxpose.xlu0.b32.start [1/16] %v2386, 128
        %2618 = vxpose.xlu0.b32.cont [2/16] 0.0, 128
        %2619 = vxpose.xlu0.b32.cont [3/16] 0.0, 128
        %2620 = vxpose.xlu0.b32.cont [4/16] 0.0, 128
        %2621 = vxpose.xlu0.b32.cont [5/16] 0.0, 128
        %2622 = vxpose.xlu0.b32.cont [6/16] 0.0, 128
        %2623 = vxpose.xlu0.b32.cont [7/16] 0.0, 128
        %2624 = vxpose.xlu0.b32.cont [8/16] 0.0, 128
        %2625 = vxpose.xlu0.b32.cont [9/16] 0.0, 128
        %2626 = vxpose.xlu0.b32.cont [10/16] 0.0, 128
        %2627 = vxpose.xlu0.b32.cont [11/16] 0.0, 128
        %2628 = vxpose.xlu0.b32.cont [12/16] 0.0, 128
        %2629 = vxpose.xlu0.b32.cont [13/16] 0.0, 128
        %2630 = vxpose.xlu0.b32.cont [14/16] 0.0, 128
        %2631 = vxpose.xlu0.b32.cont [15/16] 0.0, 128
        %2632 = vxpose.xlu0.b32.end [16/16] 0.0, 128
        %v2633 = vpop.trf.xlu0
        %v2634 = vpop.trf.xlu0
        %v2635 = vpop.trf.xlu0
        %v2636 = vpop.trf.xlu0
        %v2637 = vpop.trf.xlu0
        %v2638 = vpop.trf.xlu0
        %v2639 = vpop.trf.xlu0
        %v2640 = vpop.trf.xlu0
        %v2641 = vpop.trf.xlu0
        %v2642 = vpop.trf.xlu0
        %v2643 = vpop.trf.xlu0
        %v2644 = vpop.trf.xlu0
        %v2645 = vpop.trf.xlu0
        %v2646 = vpop.trf.xlu0
        %v2647 = vpop.trf.xlu0
        %v2648 = vpop.trf.xlu0
        %2649 = vxpose.xlu0.b32.start [1/16] %v2462, 128
        %2650 = vxpose.xlu0.b32.cont [2/16] 0.0, 128
        %2651 = vxpose.xlu0.b32.cont [3/16] 0.0, 128
        %2652 = vxpose.xlu0.b32.cont [4/16] 0.0, 128
        %2653 = vxpose.xlu0.b32.cont [5/16] 0.0, 128
        %2654 = vxpose.xlu0.b32.cont [6/16] 0.0, 128
        %2655 = vxpose.xlu0.b32.cont [7/16] 0.0, 128
        %2656 = vxpose.xlu0.b32.cont [8/16] 0.0, 128
        %2657 = vxpose.xlu0.b32.cont [9/16] 0.0, 128
        %2658 = vxpose.xlu0.b32.cont [10/16] 0.0, 128
        %2659 = vxpose.xlu0.b32.cont [11/16] 0.0, 128
        %2660 = vxpose.xlu0.b32.cont [12/16] 0.0, 128
        %2661 = vxpose.xlu0.b32.cont [13/16] 0.0, 128
        %2662 = vxpose.xlu0.b32.cont [14/16] 0.0, 128
        %2663 = vxpose.xlu0.b32.cont [15/16] 0.0, 128
        %2664 = vxpose.xlu0.b32.end [16/16] 0.0, 128
        %v2665 = vpop.trf.xlu0
        %v2666 = vpop.trf.xlu0
        %v2667 = vpop.trf.xlu0
        %v2668 = vpop.trf.xlu0
        %v2669 = vpop.trf.xlu0
        %v2670 = vpop.trf.xlu0
        %v2671 = vpop.trf.xlu0
        %v2672 = vpop.trf.xlu0
        %v2673 = vpop.trf.xlu0
        %v2674 = vpop.trf.xlu0
        %v2675 = vpop.trf.xlu0
        %v2676 = vpop.trf.xlu0
        %v2677 = vpop.trf.xlu0
        %v2678 = vpop.trf.xlu0
        %v2679 = vpop.trf.xlu0
        %v2680 = vpop.trf.xlu0
        %2681 = vxpose.xlu0.b32.start [1/16] %v2538, 128
        %2682 = vxpose.xlu0.b32.cont [2/16] 0.0, 128
        %2683 = vxpose.xlu0.b32.cont [3/16] 0.0, 128
        %2684 = vxpose.xlu0.b32.cont [4/16] 0.0, 128
        %2685 = vxpose.xlu0.b32.cont [5/16] 0.0, 128
        %2686 = vxpose.xlu0.b32.cont [6/16] 0.0, 128
        %2687 = vxpose.xlu0.b32.cont [7/16] 0.0, 128
        %2688 = vxpose.xlu0.b32.cont [8/16] 0.0, 128
        %2689 = vxpose.xlu0.b32.cont [9/16] 0.0, 128
        %2690 = vxpose.xlu0.b32.cont [10/16] 0.0, 128
        %2691 = vxpose.xlu0.b32.cont [11/16] 0.0, 128
        %2692 = vxpose.xlu0.b32.cont [12/16] 0.0, 128
        %2693 = vxpose.xlu0.b32.cont [13/16] 0.0, 128
        %2694 = vxpose.xlu0.b32.cont [14/16] 0.0, 128
        %2695 = vxpose.xlu0.b32.cont [15/16] 0.0, 128
        %2696 = vxpose.xlu0.b32.end [16/16] 0.0, 128
        %v2697 = vpop.trf.xlu0
        %v2698 = vpop.trf.xlu0
        %v2699 = vpop.trf.xlu0
        %v2700 = vpop.trf.xlu0
        %v2701 = vpop.trf.xlu0
        %v2702 = vpop.trf.xlu0
        %v2703 = vpop.trf.xlu0
        %v2704 = vpop.trf.xlu0
        %v2705 = vpop.trf.xlu0
        %v2706 = vpop.trf.xlu0
        %v2707 = vpop.trf.xlu0
        %v2708 = vpop.trf.xlu0
        %v2709 = vpop.trf.xlu0
        %v2710 = vpop.trf.xlu0
        %v2711 = vpop.trf.xlu0
        %v2712 = vpop.trf.xlu0
        %2713 = vxpose.xlu0.b32.start [1/16] %v2614, 128
        %2714 = vxpose.xlu0.b32.cont [2/16] 0.0, 128
        %2715 = vxpose.xlu0.b32.cont [3/16] 0.0, 128
        %2716 = vxpose.xlu0.b32.cont [4/16] 0.0, 128
        %2717 = vxpose.xlu0.b32.cont [5/16] 0.0, 128
        %2718 = vxpose.xlu0.b32.cont [6/16] 0.0, 128
        %2719 = vxpose.xlu0.b32.cont [7/16] 0.0, 128
        %2720 = vxpose.xlu0.b32.cont [8/16] 0.0, 128
        %2721 = vxpose.xlu0.b32.cont [9/16] 0.0, 128
        %2722 = vxpose.xlu0.b32.cont [10/16] 0.0, 128
        %2723 = vxpose.xlu0.b32.cont [11/16] 0.0, 128
        %2724 = vxpose.xlu0.b32.cont [12/16] 0.0, 128
        %2725 = vxpose.xlu0.b32.cont [13/16] 0.0, 128
        %2726 = vxpose.xlu0.b32.cont [14/16] 0.0, 128
        %2727 = vxpose.xlu0.b32.cont [15/16] 0.0, 128
        %2728 = vxpose.xlu0.b32.end [16/16] 0.0, 128
        %v2729 = vpop.trf.xlu0
        %v2730 = vpop.trf.xlu0
        %v2731 = vpop.trf.xlu0
        %v2732 = vpop.trf.xlu0
        %v2733 = vpop.trf.xlu0
        %v2734 = vpop.trf.xlu0
        %v2735 = vpop.trf.xlu0
        %v2736 = vpop.trf.xlu0
        %v2737 = vpop.trf.xlu0
        %v2738 = vpop.trf.xlu0
        %v2739 = vpop.trf.xlu0
        %v2740 = vpop.trf.xlu0
        %v2741 = vpop.trf.xlu0
        %v2742 = vpop.trf.xlu0
        %v2743 = vpop.trf.xlu0
        %v2744 = vpop.trf.xlu0
        %v2745 = vcombine.low %v2633, %v2697
        %v2746 = vcombine.high %v2633, %v2697
        %v2748 = vunpack.c.l.s4 1983009808
        %v2749 = vunpack.c.0.s8 %v2748
        %v2750 = vlaneseq
        %v2751 = vshrl.u32 %v2750, 7
        %v2752 = vsub.s32 %v2749, %v2751
        %v2753 = vrot.slane %v2745, %v2752
        %v2755 = vunpack.c.l.s4 1983009808
        %v2756 = vunpack.c.0.s8 %v2755
        %v2757 = vlaneseq
        %v2758 = vshrl.u32 %v2757, 7
        %v2759 = vsub.s32 %v2756, %v2758
        %v2760 = vrot.slane %v2746, %v2759
        %v2761 = vcombine.low %v2665, %v2729
        %v2762 = vcombine.high %v2665, %v2729
        %v2764 = vunpack.c.l.s4 1983009808
        %v2765 = vunpack.c.0.s8 %v2764
        %v2766 = vlaneseq
        %v2767 = vshrl.u32 %v2766, 7
        %v2768 = vsub.s32 %v2765, %v2767
        %v2769 = vrot.slane %v2761, %v2768
        %v2771 = vunpack.c.l.s4 1983009808
        %v2772 = vunpack.c.0.s8 %v2771
        %v2773 = vlaneseq
        %v2774 = vshrl.u32 %v2773, 7
        %v2775 = vsub.s32 %v2772, %v2774
        %v2776 = vrot.slane %v2762, %v2775
        %v2777 = vcombine.low %v2753, %v2769
        %v2778 = vcombine.high %v2753, %v2769
        %v2780 = vunpack.c.l.s4 1934713408
        %v2781 = vunpack.c.0.s8 %v2780
        %v2782 = vlaneseq
        %v2783 = vshrl.u32 %v2782, 7
        %v2784 = vsub.s32 %v2781, %v2783
        %v2785 = vrot.slane %v2777, %v2784
        %v2787 = vunpack.c.l.s4 1934713408
        %v2788 = vunpack.c.0.s8 %v2787
        %v2789 = vlaneseq
        %v2790 = vshrl.u32 %v2789, 7
        %v2791 = vsub.s32 %v2788, %v2790
        %v2792 = vrot.slane %v2778, %v2791
        %v2793 = vcombine.low %v2760, %v2776
        %v2794 = vcombine.high %v2760, %v2776
        %v2796 = vunpack.c.l.s4 1934713408
        %v2797 = vunpack.c.0.s8 %v2796
        %v2798 = vlaneseq
        %v2799 = vshrl.u32 %v2798, 7
        %v2800 = vsub.s32 %v2797, %v2799
        %v2801 = vrot.slane %v2793, %v2800
        %v2803 = vunpack.c.l.s4 1934713408
        %v2804 = vunpack.c.0.s8 %v2803
        %v2805 = vlaneseq
        %v2806 = vshrl.u32 %v2805, 7
        %v2807 = vsub.s32 %v2804, %v2806
        %v2808 = vrot.slane %v2794, %v2807
        %v2809 = vcombine.high %v2785, 0.0
        %v2810 = vcombine.high %v2792, 0.0
        %v2811 = vcombine.high %v2801, 0.0
        %v2812 = vcombine.high %v2808, 0.0
        %vm2813 = vcmask 60416
        %2814 = vst.msk [vmem:[%s444] sm:$0xf] %vm2813, %v2785
        %2815 = vst.msk [vmem:[%s444 + $0x4] sm:$0xf] %vm2813, %v2809
        %2816 = vst.msk [vmem:[%s444 + $0x8] sm:$0xf] %vm2813, %v2792
        %2817 = vst.msk [vmem:[%s444 + $0xc] sm:$0xf] %vm2813, %v2810
        %2818 = vst.msk [vmem:[%s444 + $0x10] sm:$0xf] %vm2813, %v2801
        %2819 = vst.msk [vmem:[%s444 + $0x14] sm:$0xf] %vm2813, %v2811
        %2820 = vst.msk [vmem:[%s444 + $0x18] sm:$0xf] %vm2813, %v2808
        %2821 = vst.msk [vmem:[%s444 + $0x1c] sm:$0xf] %vm2813, %v2812
        %v2822 = vsel %vm1260, %v1593, 0.0
        %v2823 = vsel %vm1260, %v1594, 0.0
        %v2824 = vadd.f32 %v2822, %v2823
        %v2825 = vsel %vm1260, %v1595, 0.0
        %v2826 = vadd.f32 %v2824, %v2825
        %v2827 = vsel %vm1260, %v1596, 0.0
        %v2828 = vadd.f32 %v2826, %v2827
        %v2829 = vmul.f32 %v2828, 0.25
        %2830 = vst.msk [vmem:[%s451] sm:$0xff] %vm1260, %v2829
        %s2831 = sand.u32 %s105, 1
        %s2832 = sand.u32 %s105, 1
        %s2833 = smul.addr %s2832, 32
        %s2834 = scalar_lea.vmem [#allocation5], %s2833
        %s2835 = sand.u32 %s131, 1
        %s2836 = scalar_lea.sflag [#allocation7], %s2835
        %s2837 = sand.u32 %s131, 1
        %s2838 = smul.addr %s2837, 8
        %s2839 = scalar_lea.vmem [#allocation6], %s2838
        // Predicated region
        $region156: #{multihead_attention_forward.4} parent=142 // pred_check
          %p2840 = pneg %p115
        $region157: #{multihead_attention_forward.4} parent=142 // pred_check_branch
          %2842 = sbr.rel (%p2840) target = $region159
        $region158: #{multihead_attention_forward.4} parent=142 // pred_region
          %s2843 = smul.addr %s19, 4
          %s2844 = scalar_lea.vmem %s3, %s2843
          // Predicated region
          $region160: #{multihead_attention_forward.4} parent=158 // pred_check
            _
          $region161: #{multihead_attention_forward.4} parent=158 // pred_check_branch
            %2846 = sbr.rel (0) target = $region163
          $region162: #{multihead_attention_forward.4} parent=158 // pred_region
            // Predicated region
            $region164: #{multihead_attention_forward.4} parent=162 // pred_check
              _
            $region165: #{multihead_attention_forward.4} parent=162 // pred_check_branch
              %2848 = sbr.rel target = $region167
            $region166: #{multihead_attention_forward.4} parent=162 // pred_region
              // Predicated region
              $region179: #{multihead_attention_forward.4} parent=166 // pred_check
                _
              $region180: #{multihead_attention_forward.4} parent=166 // pred_check_branch
                %2877 = sbr.rel (0) target = $region182
              $region181: #{multihead_attention_forward.4} parent=166 // pred_region
                loop: start=0, step=1, limit=1
                $region183: #{multihead_attention_forward.4} parent=181 // loop_pre_header
                  _
                $region184: #{multihead_attention_forward.4} parent=181 // loop_header
                  %s2879 = sphi 0, %s2883
                  %p2880 = scmp.ge.s32.totalorder %s2879, 1
                  %s2884 = sphi %s2834, %s2834
                  %s2885 = sphi %s2844, %s2844
                $region185: #{multihead_attention_forward.4} parent=181 // loop_header_branch
                  %2882 = sbr.rel (%p2880) target = $region189
                $region186: #{multihead_attention_forward.4} parent=181 // loop_body
                  _
                $region187: #{multihead_attention_forward.4} parent=181 // loop_footer
                  %s2883 = sadd.s32 1, %s2879
                $region188: #{multihead_attention_forward.4} parent=181 // loop_footer_branch
                  %2878 = sbr.rel target = $region184
                $region189: #{multihead_attention_forward.4} parent=181 // loop_exit
                  _
                loop: start=0, step=1, limit=1
                $region190: #{multihead_attention_forward.4} parent=181 // loop_pre_header
                  _
                $region191: #{multihead_attention_forward.4} parent=181 // loop_header
                  %s2888 = sphi 0, %s2892
                  %p2889 = scmp.ge.s32.totalorder %s2888, 1
                  %s2893 = sphi %s2834, %s2834
                  %s2894 = sphi %s2844, %s2844
                $region192: #{multihead_attention_forward.4} parent=181 // loop_header_branch
                  %2891 = sbr.rel (%p2889) target = $region196
                $region193: #{multihead_attention_forward.4} parent=181 // loop_body
                  %v2895 = vld [vmem:[%s2893] sm:$0xf]
                  %2896 = vst [vmem:[%s2894] sm:$0xf] %v2895
                  %v2897 = vld [vmem:[%s2893 + $0x4] sm:$0xf]
                  %2898 = vst [vmem:[%s2894 + $0x8] sm:$0xf] %v2897
                  %v2899 = vld [vmem:[%s2893 + $0x8] sm:$0xf]
                  %2900 = vst [vmem:[%s2894 + $0x10] sm:$0xf] %v2899
                  %v2901 = vld [vmem:[%s2893 + $0xc] sm:$0xf]
                  %2902 = vst [vmem:[%s2894 + $0x18] sm:$0xf] %v2901
                  %v2903 = vld [vmem:[%s2893 + $0x10] sm:$0xf]
                  %2904 = vst [vmem:[%s2894 + $0x20] sm:$0xf] %v2903
                  %v2905 = vld [vmem:[%s2893 + $0x14] sm:$0xf]
                  %2906 = vst [vmem:[%s2894 + $0x28] sm:$0xf] %v2905
                  %v2907 = vld [vmem:[%s2893 + $0x18] sm:$0xf]
                  %2908 = vst [vmem:[%s2894 + $0x30] sm:$0xf] %v2907
                  %v2909 = vld [vmem:[%s2893 + $0x1c] sm:$0xf]
                  %2910 = vst [vmem:[%s2894 + $0x38] sm:$0xf] %v2909
                $region194: #{multihead_attention_forward.4} parent=181 // loop_footer
                  %s2892 = sadd.s32 1, %s2888
                $region195: #{multihead_attention_forward.4} parent=181 // loop_footer_branch
                  %2887 = sbr.rel target = $region191
                $region196: #{multihead_attention_forward.4} parent=181 // loop_exit
                  _
              $region182: #{multihead_attention_forward.4} parent=166 // pred_fallthru
                _
            $region167: #{multihead_attention_forward.4} parent=162 // pred_fallthru
              _
            // Predicated region
            $region168: #{multihead_attention_forward.4} parent=162 // pred_check
              _
            $region169: #{multihead_attention_forward.4} parent=162 // pred_check_branch
              %2850 = sbr.rel (0) target = $region171
            $region170: #{multihead_attention_forward.4} parent=162 // pred_region
              loop: start=0, step=1, limit=1
              $region172: #{multihead_attention_forward.4} parent=170 // loop_pre_header
                _
              $region173: #{multihead_attention_forward.4} parent=170 // loop_header
                %s2853 = sphi 0, %s2857
                %p2854 = scmp.ge.s32.totalorder %s2853, 1
                %s2858 = sphi %s2834, %s2834
                %s2859 = sphi %s2844, %s2844
              $region174: #{multihead_attention_forward.4} parent=170 // loop_header_branch
                %2856 = sbr.rel (%p2854) target = $region178
              $region175: #{multihead_attention_forward.4} parent=170 // loop_body
                %v2860 = vld [vmem:[%s2858] sm:$0xf]
                %2861 = vst [vmem:[%s2859] sm:$0xf] %v2860
                %v2862 = vld [vmem:[%s2858 + $0x4] sm:$0xf]
                %2863 = vst [vmem:[%s2859 + $0x8] sm:$0xf] %v2862
                %v2864 = vld [vmem:[%s2858 + $0x8] sm:$0xf]
                %2865 = vst [vmem:[%s2859 + $0x10] sm:$0xf] %v2864
                %v2866 = vld [vmem:[%s2858 + $0xc] sm:$0xf]
                %2867 = vst [vmem:[%s2859 + $0x18] sm:$0xf] %v2866
                %v2868 = vld [vmem:[%s2858 + $0x10] sm:$0xf]
                %2869 = vst [vmem:[%s2859 + $0x20] sm:$0xf] %v2868
                %v2870 = vld [vmem:[%s2858 + $0x14] sm:$0xf]
                %2871 = vst [vmem:[%s2859 + $0x28] sm:$0xf] %v2870
                %v2872 = vld [vmem:[%s2858 + $0x18] sm:$0xf]
                %2873 = vst [vmem:[%s2859 + $0x30] sm:$0xf] %v2872
                %v2874 = vld [vmem:[%s2858 + $0x1c] sm:$0xf]
                %2875 = vst [vmem:[%s2859 + $0x38] sm:$0xf] %v2874
              $region176: #{multihead_attention_forward.4} parent=170 // loop_footer
                %s2857 = sadd.s32 1, %s2853
              $region177: #{multihead_attention_forward.4} parent=170 // loop_footer_branch
                %2852 = sbr.rel target = $region173
              $region178: #{multihead_attention_forward.4} parent=170 // loop_exit
                _
            $region171: #{multihead_attention_forward.4} parent=162 // pred_fallthru
              _
          $region163: #{multihead_attention_forward.4} parent=158 // pred_fallthru
            _
          %2911 = vnop
        $region159: #{multihead_attention_forward.4} parent=142 // pred_fallthru
          _
        // Predicated region
        $region197: #{multihead_attention_forward.4} parent=142 // pred_check
          %p2912 = pneg %p141
        $region198: #{multihead_attention_forward.4} parent=142 // pred_check_branch
          %2914 = sbr.rel (%p2912) target = $region200
        $region199: #{multihead_attention_forward.4} parent=142 // pred_region
          %s2916 = ssub.s32 128, 128
          %2917 = vsyncadd %s2836, %s2916
          %s2918 = smul.addr %s19, 128
          %s2919 = scalar_lea.hbm %s4, %s2918
          %s2921 = sshll.u32 %s2839, 4
          %s2922 = int_to_ptr.vmem [resolvable:$true] %s2921
          %2924 = dma.vmem_to_hbm [thread:$0]  %s2922, 128, %s2919, %s2836
        $region200: #{multihead_attention_forward.4} parent=142 // pred_fallthru
          _
      $region143: #{multihead_attention_forward.4} parent=5 // pred_fallthru
        _
      %p2925 = scmp.le.s32.totalorder 2, %s14
      // Predicated region
      $region201: #{multihead_attention_forward.4} parent=5 // pred_check
        %p2926 = pneg %p2925
      $region202: #{multihead_attention_forward.4} parent=5 // pred_check_branch
        %2928 = sbr.rel (%p2926) target = $region204
      $region203: #{multihead_attention_forward.4} parent=5 // pred_region
        %s2929 = ssub.s32 %s14, 2
        // Predicated region
        $region205: #{multihead_attention_forward.4} parent=203 // pred_check
          %p2930 = pneg %p121
        $region206: #{multihead_attention_forward.4} parent=203 // pred_check_branch
          %2932 = sbr.rel (%p2930) target = $region208
        $region207: #{multihead_attention_forward.4} parent=203 // pred_region
          %s2933 = sand.u32 %s106, 1
          %s2934 = sand.u32 %s106, 1
          %s2935 = smul.addr %s2934, 32
          %s2936 = scalar_lea.vmem [#allocation5], %s2935
        $region208: #{multihead_attention_forward.4} parent=203 // pred_fallthru
          _
        // Predicated region
        $region209: #{multihead_attention_forward.4} parent=203 // pred_check
          %p2937 = pneg %p147
        $region210: #{multihead_attention_forward.4} parent=203 // pred_check_branch
          %2939 = sbr.rel (%p2937) target = $region212
        $region211: #{multihead_attention_forward.4} parent=203 // pred_region
          %s2940 = sand.u32 %s132, 1
          %s2941 = scalar_lea.sflag [#allocation7], %s2940
          %s2942 = sand.u32 %s132, 1
          %s2943 = smul.addr %s2942, 8
          %s2944 = scalar_lea.vmem [#allocation6], %s2943
          %2945 = dma.done %s2941, 128
        $region212: #{multihead_attention_forward.4} parent=203 // pred_fallthru
          _
      $region204: #{multihead_attention_forward.4} parent=5 // pred_fallthru
        _
    $region6: #{multihead_attention_forward.4} parent=1 // loop_footer
      %s18 = sadd.s32 1, %s14
    $region7: #{multihead_attention_forward.4} parent=1 // loop_footer_branch
      %13 = sbr.rel target = $region3
    $region8: #{multihead_attention_forward.4} parent=1 // loop_exit
      _
    %2946 = vsyncpa [#allocation7], 1
    %s2947 = scalar_lea.sflag [#allocation7], 1
    %2948 = vsyncpa %s2947, 1

</llo_original>
